<compile_context>
chip_gen: v6e
topology: v6e:2x2x1
jax: 0.10.0
libtpu: 0.0.40
codegen_flags: <defaults>
</compile_context>

<pallas_src>
import functools
import numpy as np

import jax
import jax.numpy as jnp
from jax.experimental import pallas as pl
from jax.experimental.pallas import tpu as pltpu


def _round_up(x, m):
    return ((x + m - 1) // m) * m


@functools.lru_cache(maxsize=1)
def _vmem_capacity_bytes():
    try:
        return int(pltpu.get_tpu_info().vmem_capacity_bytes)
    except Exception:
        return 64 * 1024 * 1024  # v7x lower bound; v5e/v6e have 128 MiB.


def _vmem_estimate(frame_tile, n_fft, n_bins_pad, mm_bytes, n_out):
    """Rough per-step VMEM footprint: blocks + resident outputs + f32 temps."""
    fused = 2 * n_bins_pad
    frames = 2 * frame_tile * n_fft * mm_bytes * 2          # frames block, 2 bufs
    dft = n_fft * fused * mm_bytes * 1                       # [cos|sin], Buffered(1)
    outs = n_out * frame_tile * n_bins_pad * 4 * 2           # f32 accumulators
    interm = 2 * frame_tile * fused * 4                      # re/im matmul result f32
    interm += 3 * 2 * frame_tile * n_bins_pad * 4            # mag + elementwise temps
    return frames + dft + outs + interm


# ----------------------------------------------------------------------------
# Host-side constant: Hann-window-folded fused [cos | sin] DFT matrix.
# frames @ cs[:, :nbp]        == Re(rfft(frames*hann))   (zero-padded cols)
# frames @ cs[:, nbp:2*nbp]   == Im(rfft(frames*hann))
# Padded columns are exactly zero -> zero magnitude -> zero mag-loss.
# ----------------------------------------------------------------------------
def _windowed_dft_matrix(n_fft, n_bins_pad):
    n_bins = n_fft // 2 + 1
    k = np.arange(n_fft)[:, None].astype(np.float64)
    f = np.arange(n_bins)[None, :].astype(np.float64)
    ang = 2.0 * np.pi * k * f / n_fft
    win = (0.5 - 0.5 * np.cos(2.0 * np.pi * np.arange(n_fft) / n_fft))[:, None]
    cs = np.zeros((n_fft, 2 * n_bins_pad), np.float32)
    cs[:, :n_bins] = (win * np.cos(ang)).astype(np.float32)
    cs[:, n_bins_pad:n_bins_pad + n_bins] = (win * (-np.sin(ang))).astype(np.float32)
    return cs


# ----------------------------------------------------------------------------
# Pallas kernel: (stacked pred/target frames) @ [cos|sin] -> magnitudes ->
# L1/L2 element losses accumulated into resident f32 output blocks.
# ----------------------------------------------------------------------------
def _stft_loss_kernel(frames_ref, cs_ref, *out_refs,
                      frame_tile, n_fft, n_bins_pad, loss_type, compute_logmag):
    i = pl.program_id(0)

    @pl.when(i == 0)
    def _init():
        for r in out_refs:
            r[...] = jnp.zeros_like(r)

    # (2, tile, n_fft) -> (2*tile, n_fft): pred rows then target rows; one MXU
    # pass over the fused [cos|sin] RHS covers both signals and both parts.
    x = frames_ref[...].reshape(2 * frame_tile, n_fft)
    re_im = jnp.dot(x, cs_ref[...], preferred_element_type=jnp.float32)
    re = re_im[:, :n_bins_pad]                  # lane-aligned column halves
    im = re_im[:, n_bins_pad:]
    mag = jnp.sqrt(re * re + im * im)           # (2*tile, n_bins_pad), f32
    p_mag = mag[:frame_tile]
    t_mag = mag[frame_tile:]

    diff = t_mag - p_mag
    red = jnp.abs(diff) if loss_type == 'L1' else diff * diff
    out_refs[0][...] += red                     # VPU add into resident block

    if compute_logmag:
        # log(t+eps) - log(p+eps) == log((t+eps) * (1/(p+eps))): one EUP log.
        ratio = (t_mag + 1e-05) * pl.reciprocal(p_mag + 1e-05, approx=True)
        log_diff = jnp.log(ratio)
        log_red = jnp.abs(log_diff) if loss_type == 'L1' else log_diff * log_diff
        out_refs[1][...] += log_red


# ----------------------------------------------------------------------------
# Per-scale wrapper (framing / padding / constants in plain JAX).
# ----------------------------------------------------------------------------
def _single_scale_means(predict, target, n_fft, loss_type, compute_logmag,
                        matmul_dtype):
    hop = n_fft // 4
    B, T = predict.shape
    num_frames = (T - n_fft) // hop + 1
    n_bins = n_fft // 2 + 1
    n_bins_pad = _round_up(n_bins, 128)
    rows = B * num_frames

    mm_dtype = jnp.dtype(matmul_dtype)
    mm_bytes = mm_dtype.itemsize
    n_out = 2 if compute_logmag else 1

    # --- tile selection: biggest tile whose VMEM estimate fits ~half of VMEM.
    vmem_cap = _vmem_capacity_bytes()
    budget = int(0.5 * vmem_cap)
    frame_tile = 32
    for cand in (512, 256, 128, 64, 32):
        if _vmem_estimate(cand, n_fft, n_bins_pad, mm_bytes, n_out) <= budget:
            frame_tile = cand
            break
    frame_tile = min(frame_tile, _round_up(rows, 32))
    tiles = -(-rows // frame_tile)
    rows_pad = tiles * frame_tile

    # --- framing (host side for now; see TODO in header about in-kernel).
    audio = jnp.stack([predict, target], axis=0)              # (2, B, T)
    idx = jnp.arange(num_frames)[:, None] * hop + jnp.arange(n_fft)[None, :]
    frames = audio[:, :, idx].reshape(2, rows, n_fft)         # (2, rows, n_fft)
    if rows_pad != rows:
        # Zero-padded frames -> zero magnitude for both signals -> zero mag-loss
        # (logmag contribution from padded rows is at the approx-recip noise
        # level, negligible vs the true loss).
        frames = jnp.pad(frames, ((0, 0), (0, rows_pad - rows), (0, 0)))
    frames = frames.astype(mm_dtype)

    cs_m = jnp.asarray(_windowed_dft_matrix(n_fft, n_bins_pad), dtype=mm_dtype)

    out_shape = tuple(
        jax.ShapeDtypeStruct((frame_tile, n_bins_pad), jnp.float32)
        for _ in range(n_out))
    out_specs = [pl.BlockSpec((frame_tile, n_bins_pad), lambda i: (0, 0))
                 for _ in range(n_out)]

    est = _vmem_estimate(frame_tile, n_fft, n_bins_pad, mm_bytes, n_out)
    vmem_limit = int(min(0.85 * vmem_cap, max(2 * est, 24 * 1024 * 1024)))

    kernel = functools.partial(
        _stft_loss_kernel, frame_tile=frame_tile, n_fft=n_fft,
        n_bins_pad=n_bins_pad, loss_type=loss_type,
        compute_logmag=compute_logmag)

    outs = pl.pallas_call(
        kernel,
        out_shape=out_shape,
        grid_spec=pltpu.PrefetchScalarGridSpec(
            num_scalar_prefetch=0,
            grid=(tiles,),
            in_specs=[
                # stacked pred/target frames
                pl.BlockSpec((2, frame_tile, n_fft), lambda i: (0, i, 0)),
                # window-folded fused [cos|sin] DFT matrix: grid-constant, so a
                # single buffer (no double-buffering) is enough.
                pl.BlockSpec((n_fft, 2 * n_bins_pad), lambda i: (0, 0),
                             pipeline_mode=pl.Buffered(1)),
            ],
            out_specs=out_specs,
        ),
        compiler_params=pltpu.CompilerParams(
            dimension_semantics=("arbitrary",),
            vmem_limit_bytes=vmem_limit,
        ),
    )(frames, cs_m)

    # Final (tiny) reduction + mean over the true, unpadded element count.
    count = jnp.float32(B * num_frames * n_bins)
    mag_mean = jnp.sum(outs[0]) / count
    logmag_mean = (jnp.sum(outs[1]) / count) if compute_logmag else jnp.float32(0.0)
    return mag_mean, logmag_mean


# ----------------------------------------------------------------------------
# Whole multi-scale loss, jitted once (constants folded, scales overlapped).
# ----------------------------------------------------------------------------
@functools.partial(
    jax.jit,
    static_argnames=("fft_sizes", "loss_type", "mag_weight", "logmag_weight",
                     "matmul_dtype"))
def _multi_scale_spectral_loss(predict, target, *, fft_sizes, loss_type,
                               mag_weight, logmag_weight, matmul_dtype):
    loss = jnp.float32(0.0)
    compute_logmag = logmag_weight > 0
    _, T = predict.shape
    for n_fft in fft_sizes:
        if T < n_fft:
            # TODO(synk): scales longer than the signal are skipped; the torch
            # reference's compute_stft_mag behaviour for T < n_fft is undefined.
            continue
        mag_mean, logmag_mean = _single_scale_means(
            predict, target, n_fft, loss_type, compute_logmag, matmul_dtype)
        if mag_weight > 0:
            loss = loss + mag_weight * mag_mean
        if compute_logmag:
            loss = loss + logmag_weight * logmag_mean
    return loss


# ----------------------------------------------------------------------------
# SpectralLoss module (JAX/Pallas version).
# ----------------------------------------------------------------------------
class SpectralLoss:
    """Multi-scale spectrogram loss (Pallas TPU implementation)."""

    def __init__(self, fft_sizes=(2048, 1024, 512, 256, 128, 64),
                 loss_type='L1', mag_weight=1.0,
                 delta_time_weight=0.0, delta_delta_time_weight=0.0,
                 delta_freq_weight=0.0, delta_delta_freq_weight=0.0,
                 logmag_weight=0.0, loudness_weight=0.0,
                 matmul_dtype='bfloat16'):
        loss_type = loss_type.upper()
        if loss_type not in ('L1', 'L2'):
            # TODO(synk): 'COSINE' returns a matrix (not a scalar loss) in the
            # reference; not implemented in the Pallas kernel.
            raise ValueError('Loss type ({}), must be "L1" or "L2"'.format(loss_type))
        self.fft_sizes = tuple(int(s) for s in fft_sizes)
        self.loss_type = loss_type
        self.mag_weight = float(mag_weight)
        self.delta_time_weight = float(delta_time_weight)
        self.delta_delta_time_weight = float(delta_delta_time_weight)
        self.delta_freq_weight = float(delta_freq_weight)
        self.delta_delta_freq_weight = float(delta_delta_freq_weight)
        self.logmag_weight = float(logmag_weight)
        self.loudness_weight = float(loudness_weight)
        # 'bfloat16' (default) runs the MXU at full rate and halves DFT-matrix
        # VMEM; pass 'float32' for bit-closer numerics (tiles auto-shrink to fit).
        self.matmul_dtype = matmul_dtype
        # TODO(synk): delta_time/delta_freq/delta_delta and loudness terms are
        # not implemented in the kernel (their default weights are 0).

    def __call__(self, predict, target):
        return _multi_scale_spectral_loss(
            predict, target,
            fft_sizes=self.fft_sizes, loss_type=self.loss_type,
            mag_weight=self.mag_weight, logmag_weight=self.logmag_weight,
            matmul_dtype=self.matmul_dtype)


# ----------------------------------------------------------------------------
# Pure-JAX reference (rfft) used only for the self-check in __main__.
# ----------------------------------------------------------------------------
def _reference_loss(predict, target, fft_sizes, loss_type, mag_weight,
                    logmag_weight):
    def md(a, b):
        d = a - b
        return jnp.mean(jnp.abs(d)) if loss_type == 'L1' else jnp.mean(d * d)

    total = jnp.float32(0.0)
    _, T = predict.shape
    for n_fft in fft_sizes:
        if T < n_fft:
            continue
        hop = n_fft // 4
        num_frames = (T - n_fft) // hop + 1
        idx = jnp.arange(num_frames)[:, None] * hop + jnp.arange(n_fft)[None, :]
        win = jnp.asarray(
            0.5 - 0.5 * np.cos(2.0 * np.pi * np.arange(n_fft) / n_fft),
            jnp.float32)
        p_mag = jnp.abs(jnp.fft.rfft(predict[:, idx] * win, axis=-1))
        t_mag = jnp.abs(jnp.fft.rfft(target[:, idx] * win, axis=-1))
        total = total + mag_weight * md(t_mag, p_mag)
        if logmag_weight > 0:
            total = total + logmag_weight * md(jnp.log(t_mag + 1e-05),
                                               jnp.log(p_mag + 1e-05))
    return total


if __name__ == "__main__":
    key = jax.random.PRNGKey(0)
    k1, k2 = jax.random.split(key)

    # Small shapes: batch=2, time=2048 samples; FFT sizes consistent with T.
    B, T = 2, 2048
    predict = jax.random.normal(k1, (B, T), dtype=jnp.float32)
    target = jax.random.normal(k2, (B, T), dtype=jnp.float32)

    loss_fn = SpectralLoss(fft_sizes=(512, 256, 128, 64), loss_type='L1',
                           mag_weight=1.0, logmag_weight=0.5)
    loss = jax.block_until_ready(loss_fn(predict, target))
    assert jnp.isfinite(loss)

    # Self-check against the pure-JAX rfft reference (bf16 MXU inputs + approx
    # reciprocal in the logmag path -> loose tolerance).
    ref = jax.block_until_ready(_reference_loss(
        predict, target, loss_fn.fft_sizes, loss_fn.loss_type,
        loss_fn.mag_weight, loss_fn.logmag_weight))
    rel_err = float(jnp.abs(loss - ref) / jnp.maximum(jnp.abs(ref), 1e-6))
    assert rel_err < 0.1, f"relative error too large: {rel_err}"

    print("KERNEL_OK")
</pallas_src>

<mosaic_0001>
module attributes {stable_mosaic.version = 11 : i64} {
  func.func @_stft_loss_kernel(%arg0: i32, %arg1: memref<2x32x512xbf16, #tpu.memory_space<vmem>>, %arg2: memref<512x768xbf16, #tpu.memory_space<vmem>>, %arg3: memref<32x384xf32, #tpu.memory_space<vmem>>, %arg4: memref<32x384xf32, #tpu.memory_space<vmem>>) attributes {dimension_semantics = [#tpu.dimension_semantics<arbitrary>], iteration_bounds = array<i64: 1>, scalar_prefetch = 0 : i64, scratch_operands = 0 : i64, tpu.core_type = #tpu.core_type<tc>, window_params = [{transform_indices = @transform_0, window_bounds = array<i64: 2, 32, 512>}, {pipeline_mode = #tpu.pipeline_mode<synchronous>, transform_indices = @transform_1, window_bounds = array<i64: 512, 768>}, {pipeline_mode = #tpu.pipeline_mode<synchronous>, transform_indices = @transform_2, window_bounds = array<i64: 32, 384>}, {pipeline_mode = #tpu.pipeline_mode<synchronous>, transform_indices = @transform_3, window_bounds = array<i64: 32, 384>}]} {
    %c0_i32 = arith.constant 0 : i32
    %0 = arith.cmpi eq, %arg0, %c0_i32 : i32
    %1 = arith.extui %0 : i1 to i32
    %c0_i32_0 = arith.constant 0 : i32
    %2 = arith.cmpi ne, %1, %c0_i32_0 : i32
    scf.if %2 {
      %cst_15 = arith.constant 0.000000e+00 : f32
      %31 = vector.broadcast %cst_15 : f32 to vector<32x384xf32>
      %c0_16 = arith.constant 0 : index
      %c0_17 = arith.constant 0 : index
      %32 = vector.load %arg3[%c0_16, %c0_17] : memref<32x384xf32, #tpu.memory_space<vmem>>, vector<32x384xf32>
      tpu.vector_store %arg3[%c0_16, %c0_17], %31 {strides = array<i32>} : memref<32x384xf32, #tpu.memory_space<vmem>>, vector<32x384xf32>,
      %cst_18 = arith.constant 0.000000e+00 : f32
      %33 = vector.broadcast %cst_18 : f32 to vector<32x384xf32>
      %c0_19 = arith.constant 0 : index
      %c0_20 = arith.constant 0 : index
      %34 = vector.load %arg4[%c0_19, %c0_20] : memref<32x384xf32, #tpu.memory_space<vmem>>, vector<32x384xf32>
      tpu.vector_store %arg4[%c0_19, %c0_20], %33 {strides = array<i32>} : memref<32x384xf32, #tpu.memory_space<vmem>>, vector<32x384xf32>,
    } else {
    }
    %c0 = arith.constant 0 : index
    %c0_1 = arith.constant 0 : index
    %c0_2 = arith.constant 0 : index
    %3 = vector.load %arg1[%c0, %c0_1, %c0_2] : memref<2x32x512xbf16, #tpu.memory_space<vmem>>, vector<2x32x512xbf16>
    %4 = vector.shape_cast %3 : vector<2x32x512xbf16> to vector<64x512xbf16>
    %c0_3 = arith.constant 0 : index
    %c0_4 = arith.constant 0 : index
    %5 = vector.load %arg2[%c0_3, %c0_4] : memref<512x768xbf16, #tpu.memory_space<vmem>>, vector<512x768xbf16>
    %cst = arith.constant dense<0.000000e+00> : vector<64x768xf32>
    %6 = tpu.matmul %4, %5, %cst {dimension_numbers = #tpu.dot_dimension_numbers<[1], [0], [0], [1], [0, 0, 1, 1], [], []>} : vector<64x512xbf16>, vector<512x768xbf16>, vector<64x768xf32> -> vector<64x768xf32>
    %7 = vector.extract_strided_slice %6 {offsets = [0, 0], sizes = [64, 384], strides = [1, 1]} : vector<64x768xf32> to vector<64x384xf32>
    %8 = vector.extract_strided_slice %6 {offsets = [0, 384], sizes = [64, 384], strides = [1, 1]} : vector<64x768xf32> to vector<64x384xf32>
    %9 = arith.mulf %7, %7 : vector<64x384xf32>
    %10 = arith.mulf %8, %8 : vector<64x384xf32>
    %11 = arith.addf %9, %10 : vector<64x384xf32>
    %12 = math.sqrt %11 : vector<64x384xf32>
    %13 = vector.extract_strided_slice %12 {offsets = [0, 0], sizes = [32, 384], strides = [1, 1]} : vector<64x384xf32> to vector<32x384xf32>
    %14 = vector.extract_strided_slice %12 {offsets = [32, 0], sizes = [32, 384], strides = [1, 1]} : vector<64x384xf32> to vector<32x384xf32>
    %15 = arith.subf %14, %13 : vector<32x384xf32>
    %16 = math.absf %15 : vector<32x384xf32>
    %c0_5 = arith.constant 0 : index
    %c0_6 = arith.constant 0 : index
    %17 = vector.load %arg3[%c0_5, %c0_6] : memref<32x384xf32, #tpu.memory_space<vmem>>, vector<32x384xf32>
    %18 = arith.addf %17, %16 : vector<32x384xf32>
    %c0_7 = arith.constant 0 : index
    %c0_8 = arith.constant 0 : index
    %19 = vector.load %arg3[%c0_7, %c0_8] : memref<32x384xf32, #tpu.memory_space<vmem>>, vector<32x384xf32>
    tpu.vector_store %arg3[%c0_7, %c0_8], %18 {strides = array<i32>} : memref<32x384xf32, #tpu.memory_space<vmem>>, vector<32x384xf32>,
    %cst_9 = arith.constant 9.99999974E-6 : f32
    %20 = vector.broadcast %cst_9 : f32 to vector<32x384xf32>
    %21 = arith.addf %14, %20 : vector<32x384xf32>
    %cst_10 = arith.constant 9.99999974E-6 : f32
    %22 = vector.broadcast %cst_10 : f32 to vector<32x384xf32>
    %23 = arith.addf %13, %22 : vector<32x384xf32>
    %24 = tpu.reciprocal %23 {approx = true} : vector<32x384xf32> -> vector<32x384xf32>
    %25 = arith.mulf %21, %24 : vector<32x384xf32>
    %26 = math.log %25 : vector<32x384xf32>
    %27 = math.absf %26 : vector<32x384xf32>
    %c0_11 = arith.constant 0 : index
    %c0_12 = arith.constant 0 : index
    %28 = vector.load %arg4[%c0_11, %c0_12] : memref<32x384xf32, #tpu.memory_space<vmem>>, vector<32x384xf32>
    %29 = arith.addf %28, %27 : vector<32x384xf32>
    %c0_13 = arith.constant 0 : index
    %c0_14 = arith.constant 0 : index
    %30 = vector.load %arg4[%c0_13, %c0_14] : memref<32x384xf32, #tpu.memory_space<vmem>>, vector<32x384xf32>
    tpu.vector_store %arg4[%c0_13, %c0_14], %29 {strides = array<i32>} : memref<32x384xf32, #tpu.memory_space<vmem>>, vector<32x384xf32>,
    return
  }
  func.func @transform_0(%arg0: i32) -> (i32, i32, i32) {
    %c0_i32 = arith.constant 0 : i32
    %c0_i32_0 = arith.constant 0 : i32
    %c0_i32_1 = arith.constant 0 : i32
    return %c0_i32, %arg0, %c0_i32_0 : i32, i32, i32
  }
  func.func @transform_1(%arg0: i32) -> (i32, i32) {
    %c0_i32 = arith.constant 0 : i32
    %c0_i32_0 = arith.constant 0 : i32
    %c0_i32_1 = arith.constant 0 : i32
    return %c0_i32, %c0_i32_0 : i32, i32
  }
  func.func @transform_2(%arg0: i32) -> (i32, i32) {
    %c0_i32 = arith.constant 0 : i32
    %c0_i32_0 = arith.constant 0 : i32
    %c0_i32_1 = arith.constant 0 : i32
    return %c0_i32, %c0_i32_0 : i32, i32
  }
  func.func @transform_3(%arg0: i32) -> (i32, i32) {
    %c0_i32 = arith.constant 0 : i32
    %c0_i32_0 = arith.constant 0 : i32
    %c0_i32_1 = arith.constant 0 : i32
    return %c0_i32, %c0_i32_0 : i32, i32
  }
}

module attributes {stable_mosaic.version = 11 : i64} {
  func.func @_stft_loss_kernel(%arg0: i32, %arg1: memref<2x64x256xbf16, #tpu.memory_space<vmem>>, %arg2: memref<256x512xbf16, #tpu.memory_space<vmem>>, %arg3: memref<64x256xf32, #tpu.memory_space<vmem>>, %arg4: memref<64x256xf32, #tpu.memory_space<vmem>>) attributes {dimension_semantics = [#tpu.dimension_semantics<arbitrary>], iteration_bounds = array<i64: 1>, scalar_prefetch = 0 : i64, scratch_operands = 0 : i64, tpu.core_type = #tpu.core_type<tc>, window_params = [{transform_indices = @transform_0, window_bounds = array<i64: 2, 64, 256>}, {pipeline_mode = #tpu.pipeline_mode<synchronous>, transform_indices = @transform_1, window_bounds = array<i64: 256, 512>}, {pipeline_mode = #tpu.pipeline_mode<synchronous>, transform_indices = @transform_2, window_bounds = array<i64: 64, 256>}, {pipeline_mode = #tpu.pipeline_mode<synchronous>, transform_indices = @transform_3, window_bounds = array<i64: 64, 256>}]} {
    %c0_i32 = arith.constant 0 : i32
    %0 = arith.cmpi eq, %arg0, %c0_i32 : i32
    %1 = arith.extui %0 : i1 to i32
    %c0_i32_0 = arith.constant 0 : i32
    %2 = arith.cmpi ne, %1, %c0_i32_0 : i32
    scf.if %2 {
      %cst_15 = arith.constant 0.000000e+00 : f32
      %31 = vector.broadcast %cst_15 : f32 to vector<64x256xf32>
      %c0_16 = arith.constant 0 : index
      %c0_17 = arith.constant 0 : index
      %32 = vector.load %arg3[%c0_16, %c0_17] : memref<64x256xf32, #tpu.memory_space<vmem>>, vector<64x256xf32>
      tpu.vector_store %arg3[%c0_16, %c0_17], %31 {strides = array<i32>} : memref<64x256xf32, #tpu.memory_space<vmem>>, vector<64x256xf32>,
      %cst_18 = arith.constant 0.000000e+00 : f32
      %33 = vector.broadcast %cst_18 : f32 to vector<64x256xf32>
      %c0_19 = arith.constant 0 : index
      %c0_20 = arith.constant 0 : index
      %34 = vector.load %arg4[%c0_19, %c0_20] : memref<64x256xf32, #tpu.memory_space<vmem>>, vector<64x256xf32>
      tpu.vector_store %arg4[%c0_19, %c0_20], %33 {strides = array<i32>} : memref<64x256xf32, #tpu.memory_space<vmem>>, vector<64x256xf32>,
    } else {
    }
    %c0 = arith.constant 0 : index
    %c0_1 = arith.constant 0 : index
    %c0_2 = arith.constant 0 : index
    %3 = vector.load %arg1[%c0, %c0_1, %c0_2] : memref<2x64x256xbf16, #tpu.memory_space<vmem>>, vector<2x64x256xbf16>
    %4 = vector.shape_cast %3 : vector<2x64x256xbf16> to vector<128x256xbf16>
    %c0_3 = arith.constant 0 : index
    %c0_4 = arith.constant 0 : index
    %5 = vector.load %arg2[%c0_3, %c0_4] : memref<256x512xbf16, #tpu.memory_space<vmem>>, vector<256x512xbf16>
    %cst = arith.constant dense<0.000000e+00> : vector<128x512xf32>
    %6 = tpu.matmul %4, %5, %cst {dimension_numbers = #tpu.dot_dimension_numbers<[1], [0], [0], [1], [0, 0, 1, 1], [], []>} : vector<128x256xbf16>, vector<256x512xbf16>, vector<128x512xf32> -> vector<128x512xf32>
    %7 = vector.extract_strided_slice %6 {offsets = [0, 0], sizes = [128, 256], strides = [1, 1]} : vector<128x512xf32> to vector<128x256xf32>
    %8 = vector.extract_strided_slice %6 {offsets = [0, 256], sizes = [128, 256], strides = [1, 1]} : vector<128x512xf32> to vector<128x256xf32>
    %9 = arith.mulf %7, %7 : vector<128x256xf32>
    %10 = arith.mulf %8, %8 : vector<128x256xf32>
    %11 = arith.addf %9, %10 : vector<128x256xf32>
    %12 = math.sqrt %11 : vector<128x256xf32>
    %13 = vector.extract_strided_slice %12 {offsets = [0, 0], sizes = [64, 256], strides = [1, 1]} : vector<128x256xf32> to vector<64x256xf32>
    %14 = vector.extract_strided_slice %12 {offsets = [64, 0], sizes = [64, 256], strides = [1, 1]} : vector<128x256xf32> to vector<64x256xf32>
    %15 = arith.subf %14, %13 : vector<64x256xf32>
    %16 = math.absf %15 : vector<64x256xf32>
    %c0_5 = arith.constant 0 : index
    %c0_6 = arith.constant 0 : index
    %17 = vector.load %arg3[%c0_5, %c0_6] : memref<64x256xf32, #tpu.memory_space<vmem>>, vector<64x256xf32>
    %18 = arith.addf %17, %16 : vector<64x256xf32>
    %c0_7 = arith.constant 0 : index
    %c0_8 = arith.constant 0 : index
    %19 = vector.load %arg3[%c0_7, %c0_8] : memref<64x256xf32, #tpu.memory_space<vmem>>, vector<64x256xf32>
    tpu.vector_store %arg3[%c0_7, %c0_8], %18 {strides = array<i32>} : memref<64x256xf32, #tpu.memory_space<vmem>>, vector<64x256xf32>,
    %cst_9 = arith.constant 9.99999974E-6 : f32
    %20 = vector.broadcast %cst_9 : f32 to vector<64x256xf32>
    %21 = arith.addf %14, %20 : vector<64x256xf32>
    %cst_10 = arith.constant 9.99999974E-6 : f32
    %22 = vector.broadcast %cst_10 : f32 to vector<64x256xf32>
    %23 = arith.addf %13, %22 : vector<64x256xf32>
    %24 = tpu.reciprocal %23 {approx = true} : vector<64x256xf32> -> vector<64x256xf32>
    %25 = arith.mulf %21, %24 : vector<64x256xf32>
    %26 = math.log %25 : vector<64x256xf32>
    %27 = math.absf %26 : vector<64x256xf32>
    %c0_11 = arith.constant 0 : index
    %c0_12 = arith.constant 0 : index
    %28 = vector.load %arg4[%c0_11, %c0_12] : memref<64x256xf32, #tpu.memory_space<vmem>>, vector<64x256xf32>
    %29 = arith.addf %28, %27 : vector<64x256xf32>
    %c0_13 = arith.constant 0 : index
    %c0_14 = arith.constant 0 : index
    %30 = vector.load %arg4[%c0_13, %c0_14] : memref<64x256xf32, #tpu.memory_space<vmem>>, vector<64x256xf32>
    tpu.vector_store %arg4[%c0_13, %c0_14], %29 {strides = array<i32>} : memref<64x256xf32, #tpu.memory_space<vmem>>, vector<64x256xf32>,
    return
  }
  func.func @transform_0(%arg0: i32) -> (i32, i32, i32) {
    %c0_i32 = arith.constant 0 : i32
    %c0_i32_0 = arith.constant 0 : i32
    %c0_i32_1 = arith.constant 0 : i32
    return %c0_i32, %arg0, %c0_i32_0 : i32, i32, i32
  }
  func.func @transform_1(%arg0: i32) -> (i32, i32) {
    %c0_i32 = arith.constant 0 : i32
    %c0_i32_0 = arith.constant 0 : i32
    %c0_i32_1 = arith.constant 0 : i32
    return %c0_i32, %c0_i32_0 : i32, i32
  }
  func.func @transform_2(%arg0: i32) -> (i32, i32) {
    %c0_i32 = arith.constant 0 : i32
    %c0_i32_0 = arith.constant 0 : i32
    %c0_i32_1 = arith.constant 0 : i32
    return %c0_i32, %c0_i32_0 : i32, i32
  }
  func.func @transform_3(%arg0: i32) -> (i32, i32) {
    %c0_i32 = arith.constant 0 : i32
    %c0_i32_0 = arith.constant 0 : i32
    %c0_i32_1 = arith.constant 0 : i32
    return %c0_i32, %c0_i32_0 : i32, i32
  }
}

module attributes {stable_mosaic.version = 11 : i64} {
  func.func @_stft_loss_kernel(%arg0: i32, %arg1: memref<2x128x128xbf16, #tpu.memory_space<vmem>>, %arg2: memref<128x256xbf16, #tpu.memory_space<vmem>>, %arg3: memref<128x128xf32, #tpu.memory_space<vmem>>, %arg4: memref<128x128xf32, #tpu.memory_space<vmem>>) attributes {dimension_semantics = [#tpu.dimension_semantics<arbitrary>], iteration_bounds = array<i64: 1>, scalar_prefetch = 0 : i64, scratch_operands = 0 : i64, tpu.core_type = #tpu.core_type<tc>, window_params = [{transform_indices = @transform_0, window_bounds = array<i64: 2, 128, 128>}, {pipeline_mode = #tpu.pipeline_mode<synchronous>, transform_indices = @transform_1, window_bounds = array<i64: 128, 256>}, {pipeline_mode = #tpu.pipeline_mode<synchronous>, transform_indices = @transform_2, window_bounds = array<i64: 128, 128>}, {pipeline_mode = #tpu.pipeline_mode<synchronous>, transform_indices = @transform_3, window_bounds = array<i64: 128, 128>}]} {
    %c0_i32 = arith.constant 0 : i32
    %0 = arith.cmpi eq, %arg0, %c0_i32 : i32
    %1 = arith.extui %0 : i1 to i32
    %c0_i32_0 = arith.constant 0 : i32
    %2 = arith.cmpi ne, %1, %c0_i32_0 : i32
    scf.if %2 {
      %cst_15 = arith.constant 0.000000e+00 : f32
      %31 = vector.broadcast %cst_15 : f32 to vector<128x128xf32>
      %c0_16 = arith.constant 0 : index
      %c0_17 = arith.constant 0 : index
      %32 = vector.load %arg3[%c0_16, %c0_17] : memref<128x128xf32, #tpu.memory_space<vmem>>, vector<128x128xf32>
      tpu.vector_store %arg3[%c0_16, %c0_17], %31 {strides = array<i32>} : memref<128x128xf32, #tpu.memory_space<vmem>>, vector<128x128xf32>,
      %cst_18 = arith.constant 0.000000e+00 : f32
      %33 = vector.broadcast %cst_18 : f32 to vector<128x128xf32>
      %c0_19 = arith.constant 0 : index
      %c0_20 = arith.constant 0 : index
      %34 = vector.load %arg4[%c0_19, %c0_20] : memref<128x128xf32, #tpu.memory_space<vmem>>, vector<128x128xf32>
      tpu.vector_store %arg4[%c0_19, %c0_20], %33 {strides = array<i32>} : memref<128x128xf32, #tpu.memory_space<vmem>>, vector<128x128xf32>,
    } else {
    }
    %c0 = arith.constant 0 : index
    %c0_1 = arith.constant 0 : index
    %c0_2 = arith.constant 0 : index
    %3 = vector.load %arg1[%c0, %c0_1, %c0_2] : memref<2x128x128xbf16, #tpu.memory_space<vmem>>, vector<2x128x128xbf16>
    %4 = vector.shape_cast %3 : vector<2x128x128xbf16> to vector<256x128xbf16>
    %c0_3 = arith.constant 0 : index
    %c0_4 = arith.constant 0 : index
    %5 = vector.load %arg2[%c0_3, %c0_4] : memref<128x256xbf16, #tpu.memory_space<vmem>>, vector<128x256xbf16>
    %cst = arith.constant dense<0.000000e+00> : vector<256x256xf32>
    %6 = tpu.matmul %4, %5, %cst {dimension_numbers = #tpu.dot_dimension_numbers<[1], [0], [0], [1], [0, 0, 1, 1], [], []>} : vector<256x128xbf16>, vector<128x256xbf16>, vector<256x256xf32> -> vector<256x256xf32>
    %7 = vector.extract_strided_slice %6 {offsets = [0, 0], sizes = [256, 128], strides = [1, 1]} : vector<256x256xf32> to vector<256x128xf32>
    %8 = vector.extract_strided_slice %6 {offsets = [0, 128], sizes = [256, 128], strides = [1, 1]} : vector<256x256xf32> to vector<256x128xf32>
    %9 = arith.mulf %7, %7 : vector<256x128xf32>
    %10 = arith.mulf %8, %8 : vector<256x128xf32>
    %11 = arith.addf %9, %10 : vector<256x128xf32>
    %12 = math.sqrt %11 : vector<256x128xf32>
    %13 = vector.extract_strided_slice %12 {offsets = [0, 0], sizes = [128, 128], strides = [1, 1]} : vector<256x128xf32> to vector<128x128xf32>
    %14 = vector.extract_strided_slice %12 {offsets = [128, 0], sizes = [128, 128], strides = [1, 1]} : vector<256x128xf32> to vector<128x128xf32>
    %15 = arith.subf %14, %13 : vector<128x128xf32>
    %16 = math.absf %15 : vector<128x128xf32>
    %c0_5 = arith.constant 0 : index
    %c0_6 = arith.constant 0 : index
    %17 = vector.load %arg3[%c0_5, %c0_6] : memref<128x128xf32, #tpu.memory_space<vmem>>, vector<128x128xf32>
    %18 = arith.addf %17, %16 : vector<128x128xf32>
    %c0_7 = arith.constant 0 : index
    %c0_8 = arith.constant 0 : index
    %19 = vector.load %arg3[%c0_7, %c0_8] : memref<128x128xf32, #tpu.memory_space<vmem>>, vector<128x128xf32>
    tpu.vector_store %arg3[%c0_7, %c0_8], %18 {strides = array<i32>} : memref<128x128xf32, #tpu.memory_space<vmem>>, vector<128x128xf32>,
    %cst_9 = arith.constant 9.99999974E-6 : f32
    %20 = vector.broadcast %cst_9 : f32 to vector<128x128xf32>
    %21 = arith.addf %14, %20 : vector<128x128xf32>
    %cst_10 = arith.constant 9.99999974E-6 : f32
    %22 = vector.broadcast %cst_10 : f32 to vector<128x128xf32>
    %23 = arith.addf %13, %22 : vector<128x128xf32>
    %24 = tpu.reciprocal %23 {approx = true} : vector<128x128xf32> -> vector<128x128xf32>
    %25 = arith.mulf %21, %24 : vector<128x128xf32>
    %26 = math.log %25 : vector<128x128xf32>
    %27 = math.absf %26 : vector<128x128xf32>
    %c0_11 = arith.constant 0 : index
    %c0_12 = arith.constant 0 : index
    %28 = vector.load %arg4[%c0_11, %c0_12] : memref<128x128xf32, #tpu.memory_space<vmem>>, vector<128x128xf32>
    %29 = arith.addf %28, %27 : vector<128x128xf32>
    %c0_13 = arith.constant 0 : index
    %c0_14 = arith.constant 0 : index
    %30 = vector.load %arg4[%c0_13, %c0_14] : memref<128x128xf32, #tpu.memory_space<vmem>>, vector<128x128xf32>
    tpu.vector_store %arg4[%c0_13, %c0_14], %29 {strides = array<i32>} : memref<128x128xf32, #tpu.memory_space<vmem>>, vector<128x128xf32>,
    return
  }
  func.func @transform_0(%arg0: i32) -> (i32, i32, i32) {
    %c0_i32 = arith.constant 0 : i32
    %c0_i32_0 = arith.constant 0 : i32
    %c0_i32_1 = arith.constant 0 : i32
    return %c0_i32, %arg0, %c0_i32_0 : i32, i32, i32
  }
  func.func @transform_1(%arg0: i32) -> (i32, i32) {
    %c0_i32 = arith.constant 0 : i32
    %c0_i32_0 = arith.constant 0 : i32
    %c0_i32_1 = arith.constant 0 : i32
    return %c0_i32, %c0_i32_0 : i32, i32
  }
  func.func @transform_2(%arg0: i32) -> (i32, i32) {
    %c0_i32 = arith.constant 0 : i32
    %c0_i32_0 = arith.constant 0 : i32
    %c0_i32_1 = arith.constant 0 : i32
    return %c0_i32, %c0_i32_0 : i32, i32
  }
  func.func @transform_3(%arg0: i32) -> (i32, i32) {
    %c0_i32 = arith.constant 0 : i32
    %c0_i32_0 = arith.constant 0 : i32
    %c0_i32_1 = arith.constant 0 : i32
    return %c0_i32, %c0_i32_0 : i32, i32
  }
}

module attributes {stable_mosaic.version = 11 : i64} {
  func.func @_stft_loss_kernel(%arg0: i32, %arg1: memref<2x256x64xbf16, #tpu.memory_space<vmem>>, %arg2: memref<64x256xbf16, #tpu.memory_space<vmem>>, %arg3: memref<256x128xf32, #tpu.memory_space<vmem>>, %arg4: memref<256x128xf32, #tpu.memory_space<vmem>>) attributes {dimension_semantics = [#tpu.dimension_semantics<arbitrary>], iteration_bounds = array<i64: 1>, scalar_prefetch = 0 : i64, scratch_operands = 0 : i64, tpu.core_type = #tpu.core_type<tc>, window_params = [{transform_indices = @transform_0, window_bounds = array<i64: 2, 256, 64>}, {pipeline_mode = #tpu.pipeline_mode<synchronous>, transform_indices = @transform_1, window_bounds = array<i64: 64, 256>}, {pipeline_mode = #tpu.pipeline_mode<synchronous>, transform_indices = @transform_2, window_bounds = array<i64: 256, 128>}, {pipeline_mode = #tpu.pipeline_mode<synchronous>, transform_indices = @transform_3, window_bounds = array<i64: 256, 128>}]} {
    %c0_i32 = arith.constant 0 : i32
    %0 = arith.cmpi eq, %arg0, %c0_i32 : i32
    %1 = arith.extui %0 : i1 to i32
    %c0_i32_0 = arith.constant 0 : i32
    %2 = arith.cmpi ne, %1, %c0_i32_0 : i32
    scf.if %2 {
      %cst_15 = arith.constant 0.000000e+00 : f32
      %31 = vector.broadcast %cst_15 : f32 to vector<256x128xf32>
      %c0_16 = arith.constant 0 : index
      %c0_17 = arith.constant 0 : index
      %32 = vector.load %arg3[%c0_16, %c0_17] : memref<256x128xf32, #tpu.memory_space<vmem>>, vector<256x128xf32>
      tpu.vector_store %arg3[%c0_16, %c0_17], %31 {strides = array<i32>} : memref<256x128xf32, #tpu.memory_space<vmem>>, vector<256x128xf32>,
      %cst_18 = arith.constant 0.000000e+00 : f32
      %33 = vector.broadcast %cst_18 : f32 to vector<256x128xf32>
      %c0_19 = arith.constant 0 : index
      %c0_20 = arith.constant 0 : index
      %34 = vector.load %arg4[%c0_19, %c0_20] : memref<256x128xf32, #tpu.memory_space<vmem>>, vector<256x128xf32>
      tpu.vector_store %arg4[%c0_19, %c0_20], %33 {strides = array<i32>} : memref<256x128xf32, #tpu.memory_space<vmem>>, vector<256x128xf32>,
    } else {
    }
    %c0 = arith.constant 0 : index
    %c0_1 = arith.constant 0 : index
    %c0_2 = arith.constant 0 : index
    %3 = vector.load %arg1[%c0, %c0_1, %c0_2] : memref<2x256x64xbf16, #tpu.memory_space<vmem>>, vector<2x256x64xbf16>
    %4 = vector.shape_cast %3 : vector<2x256x64xbf16> to vector<512x64xbf16>
    %c0_3 = arith.constant 0 : index
    %c0_4 = arith.constant 0 : index
    %5 = vector.load %arg2[%c0_3, %c0_4] : memref<64x256xbf16, #tpu.memory_space<vmem>>, vector<64x256xbf16>
    %cst = arith.constant dense<0.000000e+00> : vector<512x256xf32>
    %6 = tpu.matmul %4, %5, %cst {dimension_numbers = #tpu.dot_dimension_numbers<[1], [0], [0], [1], [0, 0, 1, 1], [], []>} : vector<512x64xbf16>, vector<64x256xbf16>, vector<512x256xf32> -> vector<512x256xf32>
    %7 = vector.extract_strided_slice %6 {offsets = [0, 0], sizes = [512, 128], strides = [1, 1]} : vector<512x256xf32> to vector<512x128xf32>
    %8 = vector.extract_strided_slice %6 {offsets = [0, 128], sizes = [512, 128], strides = [1, 1]} : vector<512x256xf32> to vector<512x128xf32>
    %9 = arith.mulf %7, %7 : vector<512x128xf32>
    %10 = arith.mulf %8, %8 : vector<512x128xf32>
    %11 = arith.addf %9, %10 : vector<512x128xf32>
    %12 = math.sqrt %11 : vector<512x128xf32>
    %13 = vector.extract_strided_slice %12 {offsets = [0, 0], sizes = [256, 128], strides = [1, 1]} : vector<512x128xf32> to vector<256x128xf32>
    %14 = vector.extract_strided_slice %12 {offsets = [256, 0], sizes = [256, 128], strides = [1, 1]} : vector<512x128xf32> to vector<256x128xf32>
    %15 = arith.subf %14, %13 : vector<256x128xf32>
    %16 = math.absf %15 : vector<256x128xf32>
    %c0_5 = arith.constant 0 : index
    %c0_6 = arith.constant 0 : index
    %17 = vector.load %arg3[%c0_5, %c0_6] : memref<256x128xf32, #tpu.memory_space<vmem>>, vector<256x128xf32>
    %18 = arith.addf %17, %16 : vector<256x128xf32>
    %c0_7 = arith.constant 0 : index
    %c0_8 = arith.constant 0 : index
    %19 = vector.load %arg3[%c0_7, %c0_8] : memref<256x128xf32, #tpu.memory_space<vmem>>, vector<256x128xf32>
    tpu.vector_store %arg3[%c0_7, %c0_8], %18 {strides = array<i32>} : memref<256x128xf32, #tpu.memory_space<vmem>>, vector<256x128xf32>,
    %cst_9 = arith.constant 9.99999974E-6 : f32
    %20 = vector.broadcast %cst_9 : f32 to vector<256x128xf32>
    %21 = arith.addf %14, %20 : vector<256x128xf32>
    %cst_10 = arith.constant 9.99999974E-6 : f32
    %22 = vector.broadcast %cst_10 : f32 to vector<256x128xf32>
    %23 = arith.addf %13, %22 : vector<256x128xf32>
    %24 = tpu.reciprocal %23 {approx = true} : vector<256x128xf32> -> vector<256x128xf32>
    %25 = arith.mulf %21, %24 : vector<256x128xf32>
    %26 = math.log %25 : vector<256x128xf32>
    %27 = math.absf %26 : vector<256x128xf32>
    %c0_11 = arith.constant 0 : index
    %c0_12 = arith.constant 0 : index
    %28 = vector.load %arg4[%c0_11, %c0_12] : memref<256x128xf32, #tpu.memory_space<vmem>>, vector<256x128xf32>
    %29 = arith.addf %28, %27 : vector<256x128xf32>
    %c0_13 = arith.constant 0 : index
    %c0_14 = arith.constant 0 : index
    %30 = vector.load %arg4[%c0_13, %c0_14] : memref<256x128xf32, #tpu.memory_space<vmem>>, vector<256x128xf32>
    tpu.vector_store %arg4[%c0_13, %c0_14], %29 {strides = array<i32>} : memref<256x128xf32, #tpu.memory_space<vmem>>, vector<256x128xf32>,
    return
  }
  func.func @transform_0(%arg0: i32) -> (i32, i32, i32) {
    %c0_i32 = arith.constant 0 : i32
    %c0_i32_0 = arith.constant 0 : i32
    %c0_i32_1 = arith.constant 0 : i32
    return %c0_i32, %arg0, %c0_i32_0 : i32, i32, i32
  }
  func.func @transform_1(%arg0: i32) -> (i32, i32) {
    %c0_i32 = arith.constant 0 : i32
    %c0_i32_0 = arith.constant 0 : i32
    %c0_i32_1 = arith.constant 0 : i32
    return %c0_i32, %c0_i32_0 : i32, i32
  }
  func.func @transform_2(%arg0: i32) -> (i32, i32) {
    %c0_i32 = arith.constant 0 : i32
    %c0_i32_0 = arith.constant 0 : i32
    %c0_i32_1 = arith.constant 0 : i32
    return %c0_i32, %c0_i32_0 : i32, i32
  }
  func.func @transform_3(%arg0: i32) -> (i32, i32) {
    %c0_i32 = arith.constant 0 : i32
    %c0_i32_0 = arith.constant 0 : i32
    %c0_i32_1 = arith.constant 0 : i32
    return %c0_i32, %c0_i32_0 : i32, i32
  }
}

</mosaic_0001>

<llo_original>
// kernel: _multi_scale_spectral_loss.4
$region0: #{_multi_scale_spectral_loss.4}
  #allocation0 [shape = 'u32[]', space=smem, size = 0x4, offset = 0x4, fixed_abs, tag = 'smem constant byte address 0x4 - core index']
  #allocation1 [shape = 'u32[144,128]{1,0:T(1,128)}', space=vmem, size = 0x12000, scoped, tag = 'internal scratch']
  %s0 = inlined_call_operand.vmem [shape: bf16[2,32,512], index: 0, kind: input, shape index: {}]
  %s1 = inlined_call_operand.vmem [shape: bf16[512,768], index: 1, kind: input, shape index: {}]
  %s2 = inlined_call_operand.vmem [shape: f32[32,384], index: 2, kind: output, shape index: {0}]
  %s3 = inlined_call_operand.vmem [shape: f32[32,384], index: 3, kind: output, shape index: {1}]
  %4 = xla_tuple %s2, %s3
  %s5 = sld [smem:[#allocation0]]
  $region30: #{_multi_scale_spectral_loss.4} parent=0
    _
  %s7 = ssub.s32 1, %s5
  %s8 = scalar_select 0, %s7, %s5
  // Predicated region
  $region2: #{_multi_scale_spectral_loss.4} parent=0 // pred_check
    _
  $region3: #{_multi_scale_spectral_loss.4} parent=0 // pred_check_branch
    %10 = sbr.rel (0) target = $region5
  $region4: #{_multi_scale_spectral_loss.4} parent=0 // pred_region
    _
  $region5: #{_multi_scale_spectral_loss.4} parent=0 // pred_fallthru
    _
  // Predicated region
  $region6: #{_multi_scale_spectral_loss.4} parent=0 // pred_check
    _
  $region7: #{_multi_scale_spectral_loss.4} parent=0 // pred_check_branch
    %12 = sbr.rel (0) target = $region9
  $region8: #{_multi_scale_spectral_loss.4} parent=0 // pred_region
    _
  $region9: #{_multi_scale_spectral_loss.4} parent=0 // pred_fallthru
    _
  %p13 = scmp.eq.s32.totalorder 0, 0
  // Predicated region
  $region10: #{_multi_scale_spectral_loss.4} parent=0 // pred_check
    %p14 = pneg %p13
  $region11: #{_multi_scale_spectral_loss.4} parent=0 // pred_check_branch
    %16 = sbr.rel (%p14) target = $region13
  $region12: #{_multi_scale_spectral_loss.4} parent=0 // pred_region
    %17 = vst [vmem:[%s2] sm:$0xff] 0.0
    %18 = vst [vmem:[%s2 + $0x8] sm:$0xff] 0.0
    %19 = vst [vmem:[%s2 + $0x10] sm:$0xff] 0.0
    %20 = vst [vmem:[%s2 + $0x18] sm:$0xff] 0.0
    %21 = vst [vmem:[%s2 + $0x20] sm:$0xff] 0.0
    %22 = vst [vmem:[%s2 + $0x28] sm:$0xff] 0.0
    %23 = vst [vmem:[%s2 + $0x30] sm:$0xff] 0.0
    %24 = vst [vmem:[%s2 + $0x38] sm:$0xff] 0.0
    %25 = vst [vmem:[%s2 + $0x40] sm:$0xff] 0.0
    %26 = vst [vmem:[%s2 + $0x48] sm:$0xff] 0.0
    %27 = vst [vmem:[%s2 + $0x50] sm:$0xff] 0.0
    %28 = vst [vmem:[%s2 + $0x58] sm:$0xff] 0.0
    %29 = vst [vmem:[%s3] sm:$0xff] 0.0
    %30 = vst [vmem:[%s3 + $0x8] sm:$0xff] 0.0
    %31 = vst [vmem:[%s3 + $0x10] sm:$0xff] 0.0
    %32 = vst [vmem:[%s3 + $0x18] sm:$0xff] 0.0
    %33 = vst [vmem:[%s3 + $0x20] sm:$0xff] 0.0
    %34 = vst [vmem:[%s3 + $0x28] sm:$0xff] 0.0
    %35 = vst [vmem:[%s3 + $0x30] sm:$0xff] 0.0
    %36 = vst [vmem:[%s3 + $0x38] sm:$0xff] 0.0
    %37 = vst [vmem:[%s3 + $0x40] sm:$0xff] 0.0
    %38 = vst [vmem:[%s3 + $0x48] sm:$0xff] 0.0
    %39 = vst [vmem:[%s3 + $0x50] sm:$0xff] 0.0
    %40 = vst [vmem:[%s3 + $0x58] sm:$0xff] 0.0
  $region13: #{_multi_scale_spectral_loss.4} parent=0 // pred_fallthru
    _
  %v41 = vld [vmem:[%s0] sm:$0xff]
  %v42 = vld [vmem:[%s0 + $0x8] sm:$0xff]
  %v43 = vld [vmem:[%s0 + $0x10] sm:$0xff]
  %v44 = vld [vmem:[%s0 + $0x18] sm:$0xff]
  %v45 = vld [vmem:[%s0 + $0x20] sm:$0xff]
  %v46 = vld [vmem:[%s0 + $0x28] sm:$0xff]
  %v47 = vld [vmem:[%s0 + $0x30] sm:$0xff]
  %v48 = vld [vmem:[%s0 + $0x38] sm:$0xff]
  %v49 = vld [vmem:[%s0 + $0x40] sm:$0xff]
  %v50 = vld [vmem:[%s0 + $0x48] sm:$0xff]
  %v51 = vld [vmem:[%s0 + $0x50] sm:$0xff]
  %v52 = vld [vmem:[%s0 + $0x58] sm:$0xff]
  %v53 = vld [vmem:[%s0 + $0x60] sm:$0xff]
  %v54 = vld [vmem:[%s0 + $0x68] sm:$0xff]
  %v55 = vld [vmem:[%s0 + $0x70] sm:$0xff]
  %v56 = vld [vmem:[%s0 + $0x78] sm:$0xff]
  %v57 = vld [vmem:[%s1] sm:$0xff]
  %v58 = vld [vmem:[%s1 + $0x8] sm:$0xff]
  %v59 = vld [vmem:[%s1 + $0x10] sm:$0xff]
  %v60 = vld [vmem:[%s1 + $0x18] sm:$0xff]
  %v61 = vld [vmem:[%s1 + $0x20] sm:$0xff]
  %v62 = vld [vmem:[%s1 + $0x28] sm:$0xff]
  %v63 = vld [vmem:[%s1 + $0x30] sm:$0xff]
  %v64 = vld [vmem:[%s1 + $0x38] sm:$0xff]
  %v65 = vld [vmem:[%s1 + $0x40] sm:$0xff]
  %v66 = vld [vmem:[%s1 + $0x48] sm:$0xff]
  %v67 = vld [vmem:[%s1 + $0x50] sm:$0xff]
  %v68 = vld [vmem:[%s1 + $0x58] sm:$0xff]
  %v69 = vld [vmem:[%s1 + $0x60] sm:$0xff]
  %v70 = vld [vmem:[%s1 + $0x68] sm:$0xff]
  %v71 = vld [vmem:[%s1 + $0x70] sm:$0xff]
  %v72 = vld [vmem:[%s1 + $0x78] sm:$0xff]
  %v73 = vld [vmem:[%s1 + $0x80] sm:$0xff]
  %v74 = vld [vmem:[%s1 + $0x88] sm:$0xff]
  %v75 = vld [vmem:[%s1 + $0x90] sm:$0xff]
  %v76 = vld [vmem:[%s1 + $0x98] sm:$0xff]
  %v77 = vld [vmem:[%s1 + $0xa0] sm:$0xff]
  %v78 = vld [vmem:[%s1 + $0xa8] sm:$0xff]
  %v79 = vld [vmem:[%s1 + $0xb0] sm:$0xff]
  %v80 = vld [vmem:[%s1 + $0xb8] sm:$0xff]
  %v81 = vld [vmem:[%s1 + $0xc0] sm:$0xff]
  %v82 = vld [vmem:[%s1 + $0xc8] sm:$0xff]
  %v83 = vld [vmem:[%s1 + $0xd0] sm:$0xff]
  %v84 = vld [vmem:[%s1 + $0xd8] sm:$0xff]
  %v85 = vld [vmem:[%s1 + $0xe0] sm:$0xff]
  %v86 = vld [vmem:[%s1 + $0xe8] sm:$0xff]
  %v87 = vld [vmem:[%s1 + $0xf0] sm:$0xff]
  %v88 = vld [vmem:[%s1 + $0xf8] sm:$0xff]
  %v89 = vld [vmem:[%s1 + $0x100] sm:$0xff]
  %v90 = vld [vmem:[%s1 + $0x108] sm:$0xff]
  %v91 = vld [vmem:[%s1 + $0x110] sm:$0xff]
  %v92 = vld [vmem:[%s1 + $0x118] sm:$0xff]
  %v93 = vld [vmem:[%s1 + $0x120] sm:$0xff]
  %v94 = vld [vmem:[%s1 + $0x128] sm:$0xff]
  %v95 = vld [vmem:[%s1 + $0x130] sm:$0xff]
  %v96 = vld [vmem:[%s1 + $0x138] sm:$0xff]
  %v97 = vld [vmem:[%s1 + $0x140] sm:$0xff]
  %v98 = vld [vmem:[%s1 + $0x148] sm:$0xff]
  %v99 = vld [vmem:[%s1 + $0x150] sm:$0xff]
  %v100 = vld [vmem:[%s1 + $0x158] sm:$0xff]
  %v101 = vld [vmem:[%s1 + $0x160] sm:$0xff]
  %v102 = vld [vmem:[%s1 + $0x168] sm:$0xff]
  %v103 = vld [vmem:[%s1 + $0x170] sm:$0xff]
  %v104 = vld [vmem:[%s1 + $0x178] sm:$0xff]
  %v105 = vld [vmem:[%s1 + $0x180] sm:$0xff]
  %v106 = vld [vmem:[%s1 + $0x188] sm:$0xff]
  %v107 = vld [vmem:[%s1 + $0x190] sm:$0xff]
  %v108 = vld [vmem:[%s1 + $0x198] sm:$0xff]
  %v109 = vld [vmem:[%s1 + $0x1a0] sm:$0xff]
  %v110 = vld [vmem:[%s1 + $0x1a8] sm:$0xff]
  %v111 = vld [vmem:[%s1 + $0x1b0] sm:$0xff]
  %v112 = vld [vmem:[%s1 + $0x1b8] sm:$0xff]
  %v113 = vld [vmem:[%s1 + $0x1c0] sm:$0xff]
  %v114 = vld [vmem:[%s1 + $0x1c8] sm:$0xff]
  %v115 = vld [vmem:[%s1 + $0x1d0] sm:$0xff]
  %v116 = vld [vmem:[%s1 + $0x1d8] sm:$0xff]
  %v117 = vld [vmem:[%s1 + $0x1e0] sm:$0xff]
  %v118 = vld [vmem:[%s1 + $0x1e8] sm:$0xff]
  %v119 = vld [vmem:[%s1 + $0x1f0] sm:$0xff]
  %v120 = vld [vmem:[%s1 + $0x1f8] sm:$0xff]
  %v121 = vld [vmem:[%s1 + $0x200] sm:$0xff]
  %v122 = vld [vmem:[%s1 + $0x208] sm:$0xff]
  %v123 = vld [vmem:[%s1 + $0x210] sm:$0xff]
  %v124 = vld [vmem:[%s1 + $0x218] sm:$0xff]
  %v125 = vld [vmem:[%s1 + $0x220] sm:$0xff]
  %v126 = vld [vmem:[%s1 + $0x228] sm:$0xff]
  %v127 = vld [vmem:[%s1 + $0x230] sm:$0xff]
  %v128 = vld [vmem:[%s1 + $0x238] sm:$0xff]
  %v129 = vld [vmem:[%s1 + $0x240] sm:$0xff]
  %v130 = vld [vmem:[%s1 + $0x248] sm:$0xff]
  %v131 = vld [vmem:[%s1 + $0x250] sm:$0xff]
  %v132 = vld [vmem:[%s1 + $0x258] sm:$0xff]
  %v133 = vld [vmem:[%s1 + $0x260] sm:$0xff]
  %v134 = vld [vmem:[%s1 + $0x268] sm:$0xff]
  %v135 = vld [vmem:[%s1 + $0x270] sm:$0xff]
  %v136 = vld [vmem:[%s1 + $0x278] sm:$0xff]
  %v137 = vld [vmem:[%s1 + $0x280] sm:$0xff]
  %v138 = vld [vmem:[%s1 + $0x288] sm:$0xff]
  %v139 = vld [vmem:[%s1 + $0x290] sm:$0xff]
  %v140 = vld [vmem:[%s1 + $0x298] sm:$0xff]
  %v141 = vld [vmem:[%s1 + $0x2a0] sm:$0xff]
  %v142 = vld [vmem:[%s1 + $0x2a8] sm:$0xff]
  %v143 = vld [vmem:[%s1 + $0x2b0] sm:$0xff]
  %v144 = vld [vmem:[%s1 + $0x2b8] sm:$0xff]
  %v145 = vld [vmem:[%s1 + $0x2c0] sm:$0xff]
  %v146 = vld [vmem:[%s1 + $0x2c8] sm:$0xff]
  %v147 = vld [vmem:[%s1 + $0x2d0] sm:$0xff]
  %v148 = vld [vmem:[%s1 + $0x2d8] sm:$0xff]
  %v149 = vld [vmem:[%s1 + $0x2e0] sm:$0xff]
  %v150 = vld [vmem:[%s1 + $0x2e8] sm:$0xff]
  %v151 = vld [vmem:[%s1 + $0x2f0] sm:$0xff]
  %v152 = vld [vmem:[%s1 + $0x2f8] sm:$0xff]
  %v153 = vld [vmem:[%s1 + $0x300] sm:$0xff]
  %v154 = vld [vmem:[%s1 + $0x308] sm:$0xff]
  %v155 = vld [vmem:[%s1 + $0x310] sm:$0xff]
  %v156 = vld [vmem:[%s1 + $0x318] sm:$0xff]
  %v157 = vld [vmem:[%s1 + $0x320] sm:$0xff]
  %v158 = vld [vmem:[%s1 + $0x328] sm:$0xff]
  %v159 = vld [vmem:[%s1 + $0x330] sm:$0xff]
  %v160 = vld [vmem:[%s1 + $0x338] sm:$0xff]
  %v161 = vld [vmem:[%s1 + $0x340] sm:$0xff]
  %v162 = vld [vmem:[%s1 + $0x348] sm:$0xff]
  %v163 = vld [vmem:[%s1 + $0x350] sm:$0xff]
  %v164 = vld [vmem:[%s1 + $0x358] sm:$0xff]
  %v165 = vld [vmem:[%s1 + $0x360] sm:$0xff]
  %v166 = vld [vmem:[%s1 + $0x368] sm:$0xff]
  %v167 = vld [vmem:[%s1 + $0x370] sm:$0xff]
  %v168 = vld [vmem:[%s1 + $0x378] sm:$0xff]
  %v169 = vld [vmem:[%s1 + $0x380] sm:$0xff]
  %v170 = vld [vmem:[%s1 + $0x388] sm:$0xff]
  %v171 = vld [vmem:[%s1 + $0x390] sm:$0xff]
  %v172 = vld [vmem:[%s1 + $0x398] sm:$0xff]
  %v173 = vld [vmem:[%s1 + $0x3a0] sm:$0xff]
  %v174 = vld [vmem:[%s1 + $0x3a8] sm:$0xff]
  %v175 = vld [vmem:[%s1 + $0x3b0] sm:$0xff]
  %v176 = vld [vmem:[%s1 + $0x3b8] sm:$0xff]
  %v177 = vld [vmem:[%s1 + $0x3c0] sm:$0xff]
  %v178 = vld [vmem:[%s1 + $0x3c8] sm:$0xff]
  %v179 = vld [vmem:[%s1 + $0x3d0] sm:$0xff]
  %v180 = vld [vmem:[%s1 + $0x3d8] sm:$0xff]
  %v181 = vld [vmem:[%s1 + $0x3e0] sm:$0xff]
  %v182 = vld [vmem:[%s1 + $0x3e8] sm:$0xff]
  %v183 = vld [vmem:[%s1 + $0x3f0] sm:$0xff]
  %v184 = vld [vmem:[%s1 + $0x3f8] sm:$0xff]
  %v185 = vld [vmem:[%s1 + $0x400] sm:$0xff]
  %v186 = vld [vmem:[%s1 + $0x408] sm:$0xff]
  %v187 = vld [vmem:[%s1 + $0x410] sm:$0xff]
  %v188 = vld [vmem:[%s1 + $0x418] sm:$0xff]
  %v189 = vld [vmem:[%s1 + $0x420] sm:$0xff]
  %v190 = vld [vmem:[%s1 + $0x428] sm:$0xff]
  %v191 = vld [vmem:[%s1 + $0x430] sm:$0xff]
  %v192 = vld [vmem:[%s1 + $0x438] sm:$0xff]
  %v193 = vld [vmem:[%s1 + $0x440] sm:$0xff]
  %v194 = vld [vmem:[%s1 + $0x448] sm:$0xff]
  %v195 = vld [vmem:[%s1 + $0x450] sm:$0xff]
  %v196 = vld [vmem:[%s1 + $0x458] sm:$0xff]
  %v197 = vld [vmem:[%s1 + $0x460] sm:$0xff]
  %v198 = vld [vmem:[%s1 + $0x468] sm:$0xff]
  %v199 = vld [vmem:[%s1 + $0x470] sm:$0xff]
  %v200 = vld [vmem:[%s1 + $0x478] sm:$0xff]
  %v201 = vld [vmem:[%s1 + $0x480] sm:$0xff]
  %v202 = vld [vmem:[%s1 + $0x488] sm:$0xff]
  %v203 = vld [vmem:[%s1 + $0x490] sm:$0xff]
  %v204 = vld [vmem:[%s1 + $0x498] sm:$0xff]
  %v205 = vld [vmem:[%s1 + $0x4a0] sm:$0xff]
  %v206 = vld [vmem:[%s1 + $0x4a8] sm:$0xff]
  %v207 = vld [vmem:[%s1 + $0x4b0] sm:$0xff]
  %v208 = vld [vmem:[%s1 + $0x4b8] sm:$0xff]
  %v209 = vld [vmem:[%s1 + $0x4c0] sm:$0xff]
  %v210 = vld [vmem:[%s1 + $0x4c8] sm:$0xff]
  %v211 = vld [vmem:[%s1 + $0x4d0] sm:$0xff]
  %v212 = vld [vmem:[%s1 + $0x4d8] sm:$0xff]
  %v213 = vld [vmem:[%s1 + $0x4e0] sm:$0xff]
  %v214 = vld [vmem:[%s1 + $0x4e8] sm:$0xff]
  %v215 = vld [vmem:[%s1 + $0x4f0] sm:$0xff]
  %v216 = vld [vmem:[%s1 + $0x4f8] sm:$0xff]
  %v217 = vld [vmem:[%s1 + $0x500] sm:$0xff]
  %v218 = vld [vmem:[%s1 + $0x508] sm:$0xff]
  %v219 = vld [vmem:[%s1 + $0x510] sm:$0xff]
  %v220 = vld [vmem:[%s1 + $0x518] sm:$0xff]
  %v221 = vld [vmem:[%s1 + $0x520] sm:$0xff]
  %v222 = vld [vmem:[%s1 + $0x528] sm:$0xff]
  %v223 = vld [vmem:[%s1 + $0x530] sm:$0xff]
  %v224 = vld [vmem:[%s1 + $0x538] sm:$0xff]
  %v225 = vld [vmem:[%s1 + $0x540] sm:$0xff]
  %v226 = vld [vmem:[%s1 + $0x548] sm:$0xff]
  %v227 = vld [vmem:[%s1 + $0x550] sm:$0xff]
  %v228 = vld [vmem:[%s1 + $0x558] sm:$0xff]
  %v229 = vld [vmem:[%s1 + $0x560] sm:$0xff]
  %v230 = vld [vmem:[%s1 + $0x568] sm:$0xff]
  %v231 = vld [vmem:[%s1 + $0x570] sm:$0xff]
  %v232 = vld [vmem:[%s1 + $0x578] sm:$0xff]
  %v233 = vld [vmem:[%s1 + $0x580] sm:$0xff]
  %v234 = vld [vmem:[%s1 + $0x588] sm:$0xff]
  %v235 = vld [vmem:[%s1 + $0x590] sm:$0xff]
  %v236 = vld [vmem:[%s1 + $0x598] sm:$0xff]
  %v237 = vld [vmem:[%s1 + $0x5a0] sm:$0xff]
  %v238 = vld [vmem:[%s1 + $0x5a8] sm:$0xff]
  %v239 = vld [vmem:[%s1 + $0x5b0] sm:$0xff]
  %v240 = vld [vmem:[%s1 + $0x5b8] sm:$0xff]
  %v241 = vld [vmem:[%s1 + $0x5c0] sm:$0xff]
  %v242 = vld [vmem:[%s1 + $0x5c8] sm:$0xff]
  %v243 = vld [vmem:[%s1 + $0x5d0] sm:$0xff]
  %v244 = vld [vmem:[%s1 + $0x5d8] sm:$0xff]
  %v245 = vld [vmem:[%s1 + $0x5e0] sm:$0xff]
  %v246 = vld [vmem:[%s1 + $0x5e8] sm:$0xff]
  %v247 = vld [vmem:[%s1 + $0x5f0] sm:$0xff]
  %v248 = vld [vmem:[%s1 + $0x5f8] sm:$0xff]
  %v265 = vunpack.c.l.b16 %v41
  %v266 = vunpack.c.h.b16 %v41
  %v267 = vunpack.c.l.b16 %v42
  %v268 = vunpack.c.h.b16 %v42
  %v269 = vunpack.c.l.b16 %v43
  %v270 = vunpack.c.h.b16 %v43
  %v271 = vunpack.c.l.b16 %v44
  %v272 = vunpack.c.h.b16 %v44
  %v273 = vunpack.c.l.b16 %v45
  %v274 = vunpack.c.h.b16 %v45
  %v275 = vunpack.c.l.b16 %v46
  %v276 = vunpack.c.h.b16 %v46
  %v277 = vunpack.c.l.b16 %v47
  %v278 = vunpack.c.h.b16 %v47
  %v279 = vunpack.c.l.b16 %v48
  %v280 = vunpack.c.h.b16 %v48
  %v281 = vunpack.c.l.b16 %v49
  %v282 = vunpack.c.h.b16 %v49
  %v283 = vunpack.c.l.b16 %v50
  %v284 = vunpack.c.h.b16 %v50
  %v285 = vunpack.c.l.b16 %v51
  %v286 = vunpack.c.h.b16 %v51
  %v287 = vunpack.c.l.b16 %v52
  %v288 = vunpack.c.h.b16 %v52
  %v289 = vunpack.c.l.b16 %v53
  %v290 = vunpack.c.h.b16 %v53
  %v291 = vunpack.c.l.b16 %v54
  %v292 = vunpack.c.h.b16 %v54
  %v293 = vunpack.c.l.b16 %v55
  %v294 = vunpack.c.h.b16 %v55
  %v295 = vunpack.c.l.b16 %v56
  %v296 = vunpack.c.h.b16 %v56
  %v297 = vpack.c.b16 %v269, %v265
  %v298 = vpack.c.b16 %v270, %v266
  %v299 = vpack.c.b16 %v271, %v267
  %v300 = vpack.c.b16 %v272, %v268
  %v301 = vpack.c.b16 %v277, %v273
  %v302 = vpack.c.b16 %v278, %v274
  %v303 = vpack.c.b16 %v279, %v275
  %v304 = vpack.c.b16 %v280, %v276
  %v305 = vpack.c.b16 %v285, %v281
  %v306 = vpack.c.b16 %v286, %v282
  %v307 = vpack.c.b16 %v287, %v283
  %v308 = vpack.c.b16 %v288, %v284
  %v309 = vpack.c.b16 %v293, %v289
  %v310 = vpack.c.b16 %v294, %v290
  %v311 = vpack.c.b16 %v295, %v291
  %v312 = vpack.c.b16 %v296, %v292
  %v521 = vunpack.c.l.b16 %v57
  %v522 = vunpack.c.h.b16 %v57
  %v523 = vunpack.c.l.b16 %v58
  %v524 = vunpack.c.h.b16 %v58
  %v525 = vunpack.c.l.b16 %v59
  %v526 = vunpack.c.h.b16 %v59
  %v527 = vunpack.c.l.b16 %v60
  %v528 = vunpack.c.h.b16 %v60
  %v529 = vunpack.c.l.b16 %v61
  %v530 = vunpack.c.h.b16 %v61
  %v531 = vunpack.c.l.b16 %v62
  %v532 = vunpack.c.h.b16 %v62
  %v533 = vunpack.c.l.b16 %v63
  %v534 = vunpack.c.h.b16 %v63
  %v535 = vunpack.c.l.b16 %v64
  %v536 = vunpack.c.h.b16 %v64
  %v537 = vunpack.c.l.b16 %v65
  %v538 = vunpack.c.h.b16 %v65
  %v539 = vunpack.c.l.b16 %v66
  %v540 = vunpack.c.h.b16 %v66
  %v541 = vunpack.c.l.b16 %v67
  %v542 = vunpack.c.h.b16 %v67
  %v543 = vunpack.c.l.b16 %v68
  %v544 = vunpack.c.h.b16 %v68
  %v545 = vunpack.c.l.b16 %v69
  %v546 = vunpack.c.h.b16 %v69
  %v547 = vunpack.c.l.b16 %v70
  %v548 = vunpack.c.h.b16 %v70
  %v549 = vunpack.c.l.b16 %v71
  %v550 = vunpack.c.h.b16 %v71
  %v551 = vunpack.c.l.b16 %v72
  %v552 = vunpack.c.h.b16 %v72
  %v553 = vunpack.c.l.b16 %v73
  %v554 = vunpack.c.h.b16 %v73
  %v555 = vunpack.c.l.b16 %v74
  %v556 = vunpack.c.h.b16 %v74
  %v557 = vunpack.c.l.b16 %v75
  %v558 = vunpack.c.h.b16 %v75
  %v559 = vunpack.c.l.b16 %v76
  %v560 = vunpack.c.h.b16 %v76
  %v561 = vunpack.c.l.b16 %v77
  %v562 = vunpack.c.h.b16 %v77
  %v563 = vunpack.c.l.b16 %v78
  %v564 = vunpack.c.h.b16 %v78
  %v565 = vunpack.c.l.b16 %v79
  %v566 = vunpack.c.h.b16 %v79
  %v567 = vunpack.c.l.b16 %v80
  %v568 = vunpack.c.h.b16 %v80
  %v569 = vunpack.c.l.b16 %v81
  %v570 = vunpack.c.h.b16 %v81
  %v571 = vunpack.c.l.b16 %v82
  %v572 = vunpack.c.h.b16 %v82
  %v573 = vunpack.c.l.b16 %v83
  %v574 = vunpack.c.h.b16 %v83
  %v575 = vunpack.c.l.b16 %v84
  %v576 = vunpack.c.h.b16 %v84
  %v577 = vunpack.c.l.b16 %v85
  %v578 = vunpack.c.h.b16 %v85
  %v579 = vunpack.c.l.b16 %v86
  %v580 = vunpack.c.h.b16 %v86
  %v581 = vunpack.c.l.b16 %v87
  %v582 = vunpack.c.h.b16 %v87
  %v583 = vunpack.c.l.b16 %v88
  %v584 = vunpack.c.h.b16 %v88
  %v585 = vunpack.c.l.b16 %v89
  %v586 = vunpack.c.h.b16 %v89
  %v587 = vunpack.c.l.b16 %v90
  %v588 = vunpack.c.h.b16 %v90
  %v589 = vunpack.c.l.b16 %v91
  %v590 = vunpack.c.h.b16 %v91
  %v591 = vunpack.c.l.b16 %v92
  %v592 = vunpack.c.h.b16 %v92
  %v593 = vunpack.c.l.b16 %v93
  %v594 = vunpack.c.h.b16 %v93
  %v595 = vunpack.c.l.b16 %v94
  %v596 = vunpack.c.h.b16 %v94
  %v597 = vunpack.c.l.b16 %v95
  %v598 = vunpack.c.h.b16 %v95
  %v599 = vunpack.c.l.b16 %v96
  %v600 = vunpack.c.h.b16 %v96
  %v601 = vunpack.c.l.b16 %v97
  %v602 = vunpack.c.h.b16 %v97
  %v603 = vunpack.c.l.b16 %v98
  %v604 = vunpack.c.h.b16 %v98
  %v605 = vunpack.c.l.b16 %v99
  %v606 = vunpack.c.h.b16 %v99
  %v607 = vunpack.c.l.b16 %v100
  %v608 = vunpack.c.h.b16 %v100
  %v609 = vunpack.c.l.b16 %v101
  %v610 = vunpack.c.h.b16 %v101
  %v611 = vunpack.c.l.b16 %v102
  %v612 = vunpack.c.h.b16 %v102
  %v613 = vunpack.c.l.b16 %v103
  %v614 = vunpack.c.h.b16 %v103
  %v615 = vunpack.c.l.b16 %v104
  %v616 = vunpack.c.h.b16 %v104
  %v617 = vunpack.c.l.b16 %v105
  %v618 = vunpack.c.h.b16 %v105
  %v619 = vunpack.c.l.b16 %v106
  %v620 = vunpack.c.h.b16 %v106
  %v621 = vunpack.c.l.b16 %v107
  %v622 = vunpack.c.h.b16 %v107
  %v623 = vunpack.c.l.b16 %v108
  %v624 = vunpack.c.h.b16 %v108
  %v625 = vunpack.c.l.b16 %v109
  %v626 = vunpack.c.h.b16 %v109
  %v627 = vunpack.c.l.b16 %v110
  %v628 = vunpack.c.h.b16 %v110
  %v629 = vunpack.c.l.b16 %v111
  %v630 = vunpack.c.h.b16 %v111
  %v631 = vunpack.c.l.b16 %v112
  %v632 = vunpack.c.h.b16 %v112
  %v633 = vunpack.c.l.b16 %v113
  %v634 = vunpack.c.h.b16 %v113
  %v635 = vunpack.c.l.b16 %v114
  %v636 = vunpack.c.h.b16 %v114
  %v637 = vunpack.c.l.b16 %v115
  %v638 = vunpack.c.h.b16 %v115
  %v639 = vunpack.c.l.b16 %v116
  %v640 = vunpack.c.h.b16 %v116
  %v641 = vunpack.c.l.b16 %v117
  %v642 = vunpack.c.h.b16 %v117
  %v643 = vunpack.c.l.b16 %v118
  %v644 = vunpack.c.h.b16 %v118
  %v645 = vunpack.c.l.b16 %v119
  %v646 = vunpack.c.h.b16 %v119
  %v647 = vunpack.c.l.b16 %v120
  %v648 = vunpack.c.h.b16 %v120
  %v649 = vunpack.c.l.b16 %v121
  %v650 = vunpack.c.h.b16 %v121
  %v651 = vunpack.c.l.b16 %v122
  %v652 = vunpack.c.h.b16 %v122
  %v653 = vunpack.c.l.b16 %v123
  %v654 = vunpack.c.h.b16 %v123
  %v655 = vunpack.c.l.b16 %v124
  %v656 = vunpack.c.h.b16 %v124
  %v657 = vunpack.c.l.b16 %v125
  %v658 = vunpack.c.h.b16 %v125
  %v659 = vunpack.c.l.b16 %v126
  %v660 = vunpack.c.h.b16 %v126
  %v661 = vunpack.c.l.b16 %v127
  %v662 = vunpack.c.h.b16 %v127
  %v663 = vunpack.c.l.b16 %v128
  %v664 = vunpack.c.h.b16 %v128
  %v665 = vunpack.c.l.b16 %v129
  %v666 = vunpack.c.h.b16 %v129
  %v667 = vunpack.c.l.b16 %v130
  %v668 = vunpack.c.h.b16 %v130
  %v669 = vunpack.c.l.b16 %v131
  %v670 = vunpack.c.h.b16 %v131
  %v671 = vunpack.c.l.b16 %v132
  %v672 = vunpack.c.h.b16 %v132
  %v673 = vunpack.c.l.b16 %v133
  %v674 = vunpack.c.h.b16 %v133
  %v675 = vunpack.c.l.b16 %v134
  %v676 = vunpack.c.h.b16 %v134
  %v677 = vunpack.c.l.b16 %v135
  %v678 = vunpack.c.h.b16 %v135
  %v679 = vunpack.c.l.b16 %v136
  %v680 = vunpack.c.h.b16 %v136
  %v681 = vunpack.c.l.b16 %v137
  %v682 = vunpack.c.h.b16 %v137
  %v683 = vunpack.c.l.b16 %v138
  %v684 = vunpack.c.h.b16 %v138
  %v685 = vunpack.c.l.b16 %v139
  %v686 = vunpack.c.h.b16 %v139
  %v687 = vunpack.c.l.b16 %v140
  %v688 = vunpack.c.h.b16 %v140
  %v689 = vunpack.c.l.b16 %v141
  %v690 = vunpack.c.h.b16 %v141
  %v691 = vunpack.c.l.b16 %v142
  %v692 = vunpack.c.h.b16 %v142
  %v693 = vunpack.c.l.b16 %v143
  %v694 = vunpack.c.h.b16 %v143
  %v695 = vunpack.c.l.b16 %v144
  %v696 = vunpack.c.h.b16 %v144
  %v697 = vunpack.c.l.b16 %v145
  %v698 = vunpack.c.h.b16 %v145
  %v699 = vunpack.c.l.b16 %v146
  %v700 = vunpack.c.h.b16 %v146
  %v701 = vunpack.c.l.b16 %v147
  %v702 = vunpack.c.h.b16 %v147
  %v703 = vunpack.c.l.b16 %v148
  %v704 = vunpack.c.h.b16 %v148
  %v705 = vunpack.c.l.b16 %v149
  %v706 = vunpack.c.h.b16 %v149
  %v707 = vunpack.c.l.b16 %v150
  %v708 = vunpack.c.h.b16 %v150
  %v709 = vunpack.c.l.b16 %v151
  %v710 = vunpack.c.h.b16 %v151
  %v711 = vunpack.c.l.b16 %v152
  %v712 = vunpack.c.h.b16 %v152
  %v713 = vunpack.c.l.b16 %v153
  %v714 = vunpack.c.h.b16 %v153
  %v715 = vunpack.c.l.b16 %v154
  %v716 = vunpack.c.h.b16 %v154
  %v717 = vunpack.c.l.b16 %v155
  %v718 = vunpack.c.h.b16 %v155
  %v719 = vunpack.c.l.b16 %v156
  %v720 = vunpack.c.h.b16 %v156
  %v721 = vunpack.c.l.b16 %v157
  %v722 = vunpack.c.h.b16 %v157
  %v723 = vunpack.c.l.b16 %v158
  %v724 = vunpack.c.h.b16 %v158
  %v725 = vunpack.c.l.b16 %v159
  %v726 = vunpack.c.h.b16 %v159
  %v727 = vunpack.c.l.b16 %v160
  %v728 = vunpack.c.h.b16 %v160
  %v729 = vunpack.c.l.b16 %v161
  %v730 = vunpack.c.h.b16 %v161
  %v731 = vunpack.c.l.b16 %v162
  %v732 = vunpack.c.h.b16 %v162
  %v733 = vunpack.c.l.b16 %v163
  %v734 = vunpack.c.h.b16 %v163
  %v735 = vunpack.c.l.b16 %v164
  %v736 = vunpack.c.h.b16 %v164
  %v737 = vunpack.c.l.b16 %v165
  %v738 = vunpack.c.h.b16 %v165
  %v739 = vunpack.c.l.b16 %v166
  %v740 = vunpack.c.h.b16 %v166
  %v741 = vunpack.c.l.b16 %v167
  %v742 = vunpack.c.h.b16 %v167
  %v743 = vunpack.c.l.b16 %v168
  %v744 = vunpack.c.h.b16 %v168
  %v745 = vunpack.c.l.b16 %v169
  %v746 = vunpack.c.h.b16 %v169
  %v747 = vunpack.c.l.b16 %v170
  %v748 = vunpack.c.h.b16 %v170
  %v749 = vunpack.c.l.b16 %v171
  %v750 = vunpack.c.h.b16 %v171
  %v751 = vunpack.c.l.b16 %v172
  %v752 = vunpack.c.h.b16 %v172
  %v753 = vunpack.c.l.b16 %v173
  %v754 = vunpack.c.h.b16 %v173
  %v755 = vunpack.c.l.b16 %v174
  %v756 = vunpack.c.h.b16 %v174
  %v757 = vunpack.c.l.b16 %v175
  %v758 = vunpack.c.h.b16 %v175
  %v759 = vunpack.c.l.b16 %v176
  %v760 = vunpack.c.h.b16 %v176
  %v761 = vunpack.c.l.b16 %v177
  %v762 = vunpack.c.h.b16 %v177
  %v763 = vunpack.c.l.b16 %v178
  %v764 = vunpack.c.h.b16 %v178
  %v765 = vunpack.c.l.b16 %v179
  %v766 = vunpack.c.h.b16 %v179
  %v767 = vunpack.c.l.b16 %v180
  %v768 = vunpack.c.h.b16 %v180
  %v769 = vunpack.c.l.b16 %v181
  %v770 = vunpack.c.h.b16 %v181
  %v771 = vunpack.c.l.b16 %v182
  %v772 = vunpack.c.h.b16 %v182
  %v773 = vunpack.c.l.b16 %v183
  %v774 = vunpack.c.h.b16 %v183
  %v775 = vunpack.c.l.b16 %v184
  %v776 = vunpack.c.h.b16 %v184
  %v777 = vunpack.c.l.b16 %v185
  %v778 = vunpack.c.h.b16 %v185
  %v779 = vunpack.c.l.b16 %v186
  %v780 = vunpack.c.h.b16 %v186
  %v781 = vunpack.c.l.b16 %v187
  %v782 = vunpack.c.h.b16 %v187
  %v783 = vunpack.c.l.b16 %v188
  %v784 = vunpack.c.h.b16 %v188
  %v785 = vunpack.c.l.b16 %v189
  %v786 = vunpack.c.h.b16 %v189
  %v787 = vunpack.c.l.b16 %v190
  %v788 = vunpack.c.h.b16 %v190
  %v789 = vunpack.c.l.b16 %v191
  %v790 = vunpack.c.h.b16 %v191
  %v791 = vunpack.c.l.b16 %v192
  %v792 = vunpack.c.h.b16 %v192
  %v793 = vunpack.c.l.b16 %v193
  %v794 = vunpack.c.h.b16 %v193
  %v795 = vunpack.c.l.b16 %v194
  %v796 = vunpack.c.h.b16 %v194
  %v797 = vunpack.c.l.b16 %v195
  %v798 = vunpack.c.h.b16 %v195
  %v799 = vunpack.c.l.b16 %v196
  %v800 = vunpack.c.h.b16 %v196
  %v801 = vunpack.c.l.b16 %v197
  %v802 = vunpack.c.h.b16 %v197
  %v803 = vunpack.c.l.b16 %v198
  %v804 = vunpack.c.h.b16 %v198
  %v805 = vunpack.c.l.b16 %v199
  %v806 = vunpack.c.h.b16 %v199
  %v807 = vunpack.c.l.b16 %v200
  %v808 = vunpack.c.h.b16 %v200
  %v809 = vunpack.c.l.b16 %v201
  %v810 = vunpack.c.h.b16 %v201
  %v811 = vunpack.c.l.b16 %v202
  %v812 = vunpack.c.h.b16 %v202
  %v813 = vunpack.c.l.b16 %v203
  %v814 = vunpack.c.h.b16 %v203
  %v815 = vunpack.c.l.b16 %v204
  %v816 = vunpack.c.h.b16 %v204
  %v817 = vunpack.c.l.b16 %v205
  %v818 = vunpack.c.h.b16 %v205
  %v819 = vunpack.c.l.b16 %v206
  %v820 = vunpack.c.h.b16 %v206
  %v821 = vunpack.c.l.b16 %v207
  %v822 = vunpack.c.h.b16 %v207
  %v823 = vunpack.c.l.b16 %v208
  %v824 = vunpack.c.h.b16 %v208
  %v825 = vunpack.c.l.b16 %v209
  %v826 = vunpack.c.h.b16 %v209
  %v827 = vunpack.c.l.b16 %v210
  %v828 = vunpack.c.h.b16 %v210
  %v829 = vunpack.c.l.b16 %v211
  %v830 = vunpack.c.h.b16 %v211
  %v831 = vunpack.c.l.b16 %v212
  %v832 = vunpack.c.h.b16 %v212
  %v833 = vunpack.c.l.b16 %v213
  %v834 = vunpack.c.h.b16 %v213
  %v835 = vunpack.c.l.b16 %v214
  %v836 = vunpack.c.h.b16 %v214
  %v837 = vunpack.c.l.b16 %v215
  %v838 = vunpack.c.h.b16 %v215
  %v839 = vunpack.c.l.b16 %v216
  %v840 = vunpack.c.h.b16 %v216
  %v841 = vunpack.c.l.b16 %v217
  %v842 = vunpack.c.h.b16 %v217
  %v843 = vunpack.c.l.b16 %v218
  %v844 = vunpack.c.h.b16 %v218
  %v845 = vunpack.c.l.b16 %v219
  %v846 = vunpack.c.h.b16 %v219
  %v847 = vunpack.c.l.b16 %v220
  %v848 = vunpack.c.h.b16 %v220
  %v849 = vunpack.c.l.b16 %v221
  %v850 = vunpack.c.h.b16 %v221
  %v851 = vunpack.c.l.b16 %v222
  %v852 = vunpack.c.h.b16 %v222
  %v853 = vunpack.c.l.b16 %v223
  %v854 = vunpack.c.h.b16 %v223
  %v855 = vunpack.c.l.b16 %v224
  %v856 = vunpack.c.h.b16 %v224
  %v857 = vunpack.c.l.b16 %v225
  %v858 = vunpack.c.h.b16 %v225
  %v859 = vunpack.c.l.b16 %v226
  %v860 = vunpack.c.h.b16 %v226
  %v861 = vunpack.c.l.b16 %v227
  %v862 = vunpack.c.h.b16 %v227
  %v863 = vunpack.c.l.b16 %v228
  %v864 = vunpack.c.h.b16 %v228
  %v865 = vunpack.c.l.b16 %v229
  %v866 = vunpack.c.h.b16 %v229
  %v867 = vunpack.c.l.b16 %v230
  %v868 = vunpack.c.h.b16 %v230
  %v869 = vunpack.c.l.b16 %v231
  %v870 = vunpack.c.h.b16 %v231
  %v871 = vunpack.c.l.b16 %v232
  %v872 = vunpack.c.h.b16 %v232
  %v873 = vunpack.c.l.b16 %v233
  %v874 = vunpack.c.h.b16 %v233
  %v875 = vunpack.c.l.b16 %v234
  %v876 = vunpack.c.h.b16 %v234
  %v877 = vunpack.c.l.b16 %v235
  %v878 = vunpack.c.h.b16 %v235
  %v879 = vunpack.c.l.b16 %v236
  %v880 = vunpack.c.h.b16 %v236
  %v881 = vunpack.c.l.b16 %v237
  %v882 = vunpack.c.h.b16 %v237
  %v883 = vunpack.c.l.b16 %v238
  %v884 = vunpack.c.h.b16 %v238
  %v885 = vunpack.c.l.b16 %v239
  %v886 = vunpack.c.h.b16 %v239
  %v887 = vunpack.c.l.b16 %v240
  %v888 = vunpack.c.h.b16 %v240
  %v889 = vunpack.c.l.b16 %v241
  %v890 = vunpack.c.h.b16 %v241
  %v891 = vunpack.c.l.b16 %v242
  %v892 = vunpack.c.h.b16 %v242
  %v893 = vunpack.c.l.b16 %v243
  %v894 = vunpack.c.h.b16 %v243
  %v895 = vunpack.c.l.b16 %v244
  %v896 = vunpack.c.h.b16 %v244
  %v897 = vunpack.c.l.b16 %v245
  %v898 = vunpack.c.h.b16 %v245
  %v899 = vunpack.c.l.b16 %v246
  %v900 = vunpack.c.h.b16 %v246
  %v901 = vunpack.c.l.b16 %v247
  %v902 = vunpack.c.h.b16 %v247
  %v903 = vunpack.c.l.b16 %v248
  %v904 = vunpack.c.h.b16 %v248
  %v905 = vpack.c.b16 %v527, %v521
  %v906 = vpack.c.b16 %v528, %v522
  %v907 = vpack.c.b16 %v529, %v523
  %v908 = vpack.c.b16 %v530, %v524
  %v909 = vpack.c.b16 %v531, %v525
  %v910 = vpack.c.b16 %v532, %v526
  %v911 = vpack.c.b16 %v539, %v533
  %v912 = vpack.c.b16 %v540, %v534
  %v913 = vpack.c.b16 %v541, %v535
  %v914 = vpack.c.b16 %v542, %v536
  %v915 = vpack.c.b16 %v543, %v537
  %v916 = vpack.c.b16 %v544, %v538
  %v917 = vpack.c.b16 %v551, %v545
  %v918 = vpack.c.b16 %v552, %v546
  %v919 = vpack.c.b16 %v553, %v547
  %v920 = vpack.c.b16 %v554, %v548
  %v921 = vpack.c.b16 %v555, %v549
  %v922 = vpack.c.b16 %v556, %v550
  %v923 = vpack.c.b16 %v563, %v557
  %v924 = vpack.c.b16 %v564, %v558
  %v925 = vpack.c.b16 %v565, %v559
  %v926 = vpack.c.b16 %v566, %v560
  %v927 = vpack.c.b16 %v567, %v561
  %v928 = vpack.c.b16 %v568, %v562
  %v929 = vpack.c.b16 %v575, %v569
  %v930 = vpack.c.b16 %v576, %v570
  %v931 = vpack.c.b16 %v577, %v571
  %v932 = vpack.c.b16 %v578, %v572
  %v933 = vpack.c.b16 %v579, %v573
  %v934 = vpack.c.b16 %v580, %v574
  %v935 = vpack.c.b16 %v587, %v581
  %v936 = vpack.c.b16 %v588, %v582
  %v937 = vpack.c.b16 %v589, %v583
  %v938 = vpack.c.b16 %v590, %v584
  %v939 = vpack.c.b16 %v591, %v585
  %v940 = vpack.c.b16 %v592, %v586
  %v941 = vpack.c.b16 %v599, %v593
  %v942 = vpack.c.b16 %v600, %v594
  %v943 = vpack.c.b16 %v601, %v595
  %v944 = vpack.c.b16 %v602, %v596
  %v945 = vpack.c.b16 %v603, %v597
  %v946 = vpack.c.b16 %v604, %v598
  %v947 = vpack.c.b16 %v611, %v605
  %v948 = vpack.c.b16 %v612, %v606
  %v949 = vpack.c.b16 %v613, %v607
  %v950 = vpack.c.b16 %v614, %v608
  %v951 = vpack.c.b16 %v615, %v609
  %v952 = vpack.c.b16 %v616, %v610
  %v953 = vpack.c.b16 %v623, %v617
  %v954 = vpack.c.b16 %v624, %v618
  %v955 = vpack.c.b16 %v625, %v619
  %v956 = vpack.c.b16 %v626, %v620
  %v957 = vpack.c.b16 %v627, %v621
  %v958 = vpack.c.b16 %v628, %v622
  %v959 = vpack.c.b16 %v635, %v629
  %v960 = vpack.c.b16 %v636, %v630
  %v961 = vpack.c.b16 %v637, %v631
  %v962 = vpack.c.b16 %v638, %v632
  %v963 = vpack.c.b16 %v639, %v633
  %v964 = vpack.c.b16 %v640, %v634
  %v965 = vpack.c.b16 %v647, %v641
  %v966 = vpack.c.b16 %v648, %v642
  %v967 = vpack.c.b16 %v649, %v643
  %v968 = vpack.c.b16 %v650, %v644
  %v969 = vpack.c.b16 %v651, %v645
  %v970 = vpack.c.b16 %v652, %v646
  %v971 = vpack.c.b16 %v659, %v653
  %v972 = vpack.c.b16 %v660, %v654
  %v973 = vpack.c.b16 %v661, %v655
  %v974 = vpack.c.b16 %v662, %v656
  %v975 = vpack.c.b16 %v663, %v657
  %v976 = vpack.c.b16 %v664, %v658
  %v977 = vpack.c.b16 %v671, %v665
  %v978 = vpack.c.b16 %v672, %v666
  %v979 = vpack.c.b16 %v673, %v667
  %v980 = vpack.c.b16 %v674, %v668
  %v981 = vpack.c.b16 %v675, %v669
  %v982 = vpack.c.b16 %v676, %v670
  %v983 = vpack.c.b16 %v683, %v677
  %v984 = vpack.c.b16 %v684, %v678
  %v985 = vpack.c.b16 %v685, %v679
  %v986 = vpack.c.b16 %v686, %v680
  %v987 = vpack.c.b16 %v687, %v681
  %v988 = vpack.c.b16 %v688, %v682
  %v989 = vpack.c.b16 %v695, %v689
  %v990 = vpack.c.b16 %v696, %v690
  %v991 = vpack.c.b16 %v697, %v691
  %v992 = vpack.c.b16 %v698, %v692
  %v993 = vpack.c.b16 %v699, %v693
  %v994 = vpack.c.b16 %v700, %v694
  %v995 = vpack.c.b16 %v707, %v701
  %v996 = vpack.c.b16 %v708, %v702
  %v997 = vpack.c.b16 %v709, %v703
  %v998 = vpack.c.b16 %v710, %v704
  %v999 = vpack.c.b16 %v711, %v705
  %v1000 = vpack.c.b16 %v712, %v706
  %v1001 = vpack.c.b16 %v719, %v713
  %v1002 = vpack.c.b16 %v720, %v714
  %v1003 = vpack.c.b16 %v721, %v715
  %v1004 = vpack.c.b16 %v722, %v716
  %v1005 = vpack.c.b16 %v723, %v717
  %v1006 = vpack.c.b16 %v724, %v718
  %v1007 = vpack.c.b16 %v731, %v725
  %v1008 = vpack.c.b16 %v732, %v726
  %v1009 = vpack.c.b16 %v733, %v727
  %v1010 = vpack.c.b16 %v734, %v728
  %v1011 = vpack.c.b16 %v735, %v729
  %v1012 = vpack.c.b16 %v736, %v730
  %v1013 = vpack.c.b16 %v743, %v737
  %v1014 = vpack.c.b16 %v744, %v738
  %v1015 = vpack.c.b16 %v745, %v739
  %v1016 = vpack.c.b16 %v746, %v740
  %v1017 = vpack.c.b16 %v747, %v741
  %v1018 = vpack.c.b16 %v748, %v742
  %v1019 = vpack.c.b16 %v755, %v749
  %v1020 = vpack.c.b16 %v756, %v750
  %v1021 = vpack.c.b16 %v757, %v751
  %v1022 = vpack.c.b16 %v758, %v752
  %v1023 = vpack.c.b16 %v759, %v753
  %v1024 = vpack.c.b16 %v760, %v754
  %v1025 = vpack.c.b16 %v767, %v761
  %v1026 = vpack.c.b16 %v768, %v762
  %v1027 = vpack.c.b16 %v769, %v763
  %v1028 = vpack.c.b16 %v770, %v764
  %v1029 = vpack.c.b16 %v771, %v765
  %v1030 = vpack.c.b16 %v772, %v766
  %v1031 = vpack.c.b16 %v779, %v773
  %v1032 = vpack.c.b16 %v780, %v774
  %v1033 = vpack.c.b16 %v781, %v775
  %v1034 = vpack.c.b16 %v782, %v776
  %v1035 = vpack.c.b16 %v783, %v777
  %v1036 = vpack.c.b16 %v784, %v778
  %v1037 = vpack.c.b16 %v791, %v785
  %v1038 = vpack.c.b16 %v792, %v786
  %v1039 = vpack.c.b16 %v793, %v787
  %v1040 = vpack.c.b16 %v794, %v788
  %v1041 = vpack.c.b16 %v795, %v789
  %v1042 = vpack.c.b16 %v796, %v790
  %v1043 = vpack.c.b16 %v803, %v797
  %v1044 = vpack.c.b16 %v804, %v798
  %v1045 = vpack.c.b16 %v805, %v799
  %v1046 = vpack.c.b16 %v806, %v800
  %v1047 = vpack.c.b16 %v807, %v801
  %v1048 = vpack.c.b16 %v808, %v802
  %v1049 = vpack.c.b16 %v815, %v809
  %v1050 = vpack.c.b16 %v816, %v810
  %v1051 = vpack.c.b16 %v817, %v811
  %v1052 = vpack.c.b16 %v818, %v812
  %v1053 = vpack.c.b16 %v819, %v813
  %v1054 = vpack.c.b16 %v820, %v814
  %v1055 = vpack.c.b16 %v827, %v821
  %v1056 = vpack.c.b16 %v828, %v822
  %v1057 = vpack.c.b16 %v829, %v823
  %v1058 = vpack.c.b16 %v830, %v824
  %v1059 = vpack.c.b16 %v831, %v825
  %v1060 = vpack.c.b16 %v832, %v826
  %v1061 = vpack.c.b16 %v839, %v833
  %v1062 = vpack.c.b16 %v840, %v834
  %v1063 = vpack.c.b16 %v841, %v835
  %v1064 = vpack.c.b16 %v842, %v836
  %v1065 = vpack.c.b16 %v843, %v837
  %v1066 = vpack.c.b16 %v844, %v838
  %v1067 = vpack.c.b16 %v851, %v845
  %v1068 = vpack.c.b16 %v852, %v846
  %v1069 = vpack.c.b16 %v853, %v847
  %v1070 = vpack.c.b16 %v854, %v848
  %v1071 = vpack.c.b16 %v855, %v849
  %v1072 = vpack.c.b16 %v856, %v850
  %v1073 = vpack.c.b16 %v863, %v857
  %v1074 = vpack.c.b16 %v864, %v858
  %v1075 = vpack.c.b16 %v865, %v859
  %v1076 = vpack.c.b16 %v866, %v860
  %v1077 = vpack.c.b16 %v867, %v861
  %v1078 = vpack.c.b16 %v868, %v862
  %v1079 = vpack.c.b16 %v875, %v869
  %v1080 = vpack.c.b16 %v876, %v870
  %v1081 = vpack.c.b16 %v877, %v871
  %v1082 = vpack.c.b16 %v878, %v872
  %v1083 = vpack.c.b16 %v879, %v873
  %v1084 = vpack.c.b16 %v880, %v874
  %v1085 = vpack.c.b16 %v887, %v881
  %v1086 = vpack.c.b16 %v888, %v882
  %v1087 = vpack.c.b16 %v889, %v883
  %v1088 = vpack.c.b16 %v890, %v884
  %v1089 = vpack.c.b16 %v891, %v885
  %v1090 = vpack.c.b16 %v892, %v886
  %v1091 = vpack.c.b16 %v899, %v893
  %v1092 = vpack.c.b16 %v900, %v894
  %v1093 = vpack.c.b16 %v901, %v895
  %v1094 = vpack.c.b16 %v902, %v896
  %v1095 = vpack.c.b16 %v903, %v897
  %v1096 = vpack.c.b16 %v904, %v898
  %1289 = vmatprep.subr.bf16.mxu0 %v948
  %1290 = vmatpush1.bf16.msra.mxu0 %v947
  %1291 = vmatprep.subr.bf16.mxu0 %v942
  %1292 = vmatpush1.bf16.msra.mxu0 %v941
  %1293 = vmatprep.subr.bf16.mxu0 %v936
  %1294 = vmatpush1.bf16.msra.mxu0 %v935
  %1295 = vmatprep.subr.bf16.mxu0 %v930
  %1296 = vmatpush1.bf16.msra.mxu0 %v929
  %1297 = vmatprep.subr.bf16.mxu0 %v924
  %1298 = vmatpush1.bf16.msra.mxu0 %v923
  %1299 = vmatprep.subr.bf16.mxu0 %v918
  %1300 = vmatpush1.bf16.msra.mxu0 %v917
  %1301 = vmatprep.subr.bf16.mxu0 %v912
  %1302 = vmatpush1.bf16.msra.mxu0 %v911
  %1303 = vmatprep.subr.bf16.mxu0 %v906
  %1304 = vmatpush1.bf16.msra.mxu0 %v905
  %1305 = vmatprep.subr.bf16.mxu0 %v996
  %1306 = vmatpush2.bf16.msra.mxu0 %v995
  %1307 = vmatprep.subr.bf16.mxu0 %v990
  %1308 = vmatpush2.bf16.msra.mxu0 %v989
  %1309 = vmatprep.subr.bf16.mxu0 %v984
  %1310 = vmatpush2.bf16.msra.mxu0 %v983
  %1311 = vmatprep.subr.bf16.mxu0 %v978
  %1312 = vmatpush2.bf16.msra.mxu0 %v977
  %1313 = vmatprep.subr.bf16.mxu0 %v972
  %1314 = vmatpush2.bf16.msra.mxu0 %v971
  %1315 = vmatprep.subr.bf16.mxu0 %v966
  %1316 = vmatpush2.bf16.msra.mxu0 %v965
  %1317 = vmatprep.subr.bf16.mxu0 %v960
  %1318 = vmatpush2.bf16.msra.mxu0 %v959
  %1319 = vmatprep.subr.bf16.mxu0 %v954
  %1320 = vmatpush2.bf16.msra.mxu0 %v953
  %1321 = vmatprep.mubr.bf16.mxu0 %v298
  %1322 = vmatmul.mubr.bf16.gmra.mxu0 %v297
  %v1323 = vpop.f32.mrf.mxu0
  %v1324 = vadd.f32 0.0, %v1323
  %v1325 = vpop.f32.mrf.mxu0
  %v1326 = vadd.f32 0.0, %v1325
  %v1327 = vpop.f32.mrf.mxu0
  %v1328 = vadd.f32 0.0, %v1327
  %v1329 = vpop.f32.mrf.mxu0
  %v1330 = vadd.f32 0.0, %v1329
  %1331 = vmatprep.mubr.bf16.mxu0 %v302
  %1332 = vmatmul.mubr.bf16.gmra.mxu0 %v301
  %v1333 = vpop.f32.mrf.mxu0
  %v1334 = vadd.f32 0.0, %v1333
  %v1335 = vpop.f32.mrf.mxu0
  %v1336 = vadd.f32 0.0, %v1335
  %v1337 = vpop.f32.mrf.mxu0
  %v1338 = vadd.f32 0.0, %v1337
  %v1339 = vpop.f32.mrf.mxu0
  %v1340 = vadd.f32 0.0, %v1339
  %1341 = vmatprep.mubr.bf16.mxu0 %v306
  %1342 = vmatmul.mubr.bf16.gmra.mxu0 %v305
  %v1343 = vpop.f32.mrf.mxu0
  %v1344 = vadd.f32 0.0, %v1343
  %v1345 = vpop.f32.mrf.mxu0
  %v1346 = vadd.f32 0.0, %v1345
  %v1347 = vpop.f32.mrf.mxu0
  %v1348 = vadd.f32 0.0, %v1347
  %v1349 = vpop.f32.mrf.mxu0
  %v1350 = vadd.f32 0.0, %v1349
  %1351 = vmatprep.mubr.bf16.mxu0 %v310
  %1352 = vmatmul.mubr.bf16.gmra.mxu0 %v309
  %v1353 = vpop.f32.mrf.mxu0
  %v1354 = vadd.f32 0.0, %v1353
  %v1355 = vpop.f32.mrf.mxu0
  %v1356 = vadd.f32 0.0, %v1355
  %v1357 = vpop.f32.mrf.mxu0
  %v1358 = vadd.f32 0.0, %v1357
  %v1359 = vpop.f32.mrf.mxu0
  %v1360 = vadd.f32 0.0, %v1359
  %1361 = vdwg.mxu0
  %1362 = vmatprep.subr.bf16.mxu0 %v1044
  %1363 = vmatpush1.bf16.msra.mxu0 %v1043
  %1364 = vmatprep.subr.bf16.mxu0 %v1038
  %1365 = vmatpush1.bf16.msra.mxu0 %v1037
  %1366 = vmatprep.subr.bf16.mxu0 %v1032
  %1367 = vmatpush1.bf16.msra.mxu0 %v1031
  %1368 = vmatprep.subr.bf16.mxu0 %v1026
  %1369 = vmatpush1.bf16.msra.mxu0 %v1025
  %1370 = vmatprep.subr.bf16.mxu0 %v1020
  %1371 = vmatpush1.bf16.msra.mxu0 %v1019
  %1372 = vmatprep.subr.bf16.mxu0 %v1014
  %1373 = vmatpush1.bf16.msra.mxu0 %v1013
  %1374 = vmatprep.subr.bf16.mxu0 %v1008
  %1375 = vmatpush1.bf16.msra.mxu0 %v1007
  %1376 = vmatprep.subr.bf16.mxu0 %v1002
  %1377 = vmatpush1.bf16.msra.mxu0 %v1001
  %1378 = vmatprep.subr.bf16.mxu0 %v1092
  %1379 = vmatpush2.bf16.msra.mxu0 %v1091
  %1380 = vmatprep.subr.bf16.mxu0 %v1086
  %1381 = vmatpush2.bf16.msra.mxu0 %v1085
  %1382 = vmatprep.subr.bf16.mxu0 %v1080
  %1383 = vmatpush2.bf16.msra.mxu0 %v1079
  %1384 = vmatprep.subr.bf16.mxu0 %v1074
  %1385 = vmatpush2.bf16.msra.mxu0 %v1073
  %1386 = vmatprep.subr.bf16.mxu0 %v1068
  %1387 = vmatpush2.bf16.msra.mxu0 %v1067
  %1388 = vmatprep.subr.bf16.mxu0 %v1062
  %1389 = vmatpush2.bf16.msra.mxu0 %v1061
  %1390 = vmatprep.subr.bf16.mxu0 %v1056
  %1391 = vmatpush2.bf16.msra.mxu0 %v1055
  %1392 = vmatprep.subr.bf16.mxu0 %v1050
  %1393 = vmatpush2.bf16.msra.mxu0 %v1049
  %1394 = vmatprep.mubr.bf16.mxu0 %v300
  %1395 = vmatmul.mubr.bf16.gmra.mxu0 %v299
  %v1396 = vpop.f32.mrf.mxu0
  %v1397 = vadd.f32 %v1324, %v1396
  %v1398 = vpop.f32.mrf.mxu0
  %v1399 = vadd.f32 %v1326, %v1398
  %v1400 = vpop.f32.mrf.mxu0
  %v1401 = vadd.f32 %v1328, %v1400
  %v1402 = vpop.f32.mrf.mxu0
  %v1403 = vadd.f32 %v1330, %v1402
  %1404 = vmatprep.mubr.bf16.mxu0 %v304
  %1405 = vmatmul.mubr.bf16.gmra.mxu0 %v303
  %v1406 = vpop.f32.mrf.mxu0
  %v1407 = vadd.f32 %v1334, %v1406
  %v1408 = vpop.f32.mrf.mxu0
  %v1409 = vadd.f32 %v1336, %v1408
  %v1410 = vpop.f32.mrf.mxu0
  %v1411 = vadd.f32 %v1338, %v1410
  %v1412 = vpop.f32.mrf.mxu0
  %v1413 = vadd.f32 %v1340, %v1412
  %1414 = vmatprep.mubr.bf16.mxu0 %v308
  %1415 = vmatmul.mubr.bf16.gmra.mxu0 %v307
  %v1416 = vpop.f32.mrf.mxu0
  %v1417 = vadd.f32 %v1344, %v1416
  %v1418 = vpop.f32.mrf.mxu0
  %v1419 = vadd.f32 %v1346, %v1418
  %v1420 = vpop.f32.mrf.mxu0
  %v1421 = vadd.f32 %v1348, %v1420
  %v1422 = vpop.f32.mrf.mxu0
  %v1423 = vadd.f32 %v1350, %v1422
  %1424 = vmatprep.mubr.bf16.mxu0 %v312
  %1425 = vmatmul.mubr.bf16.gmra.mxu0 %v311
  %v1426 = vpop.f32.mrf.mxu0
  %v1427 = vadd.f32 %v1354, %v1426
  %v1428 = vpop.f32.mrf.mxu0
  %v1429 = vadd.f32 %v1356, %v1428
  %v1430 = vpop.f32.mrf.mxu0
  %v1431 = vadd.f32 %v1358, %v1430
  %v1432 = vpop.f32.mrf.mxu0
  %v1433 = vadd.f32 %v1360, %v1432
  %1434 = vdwg.mxu0
  %1435 = vmatprep.subr.bf16.mxu0 %v950
  %1436 = vmatpush1.bf16.msra.mxu0 %v949
  %1437 = vmatprep.subr.bf16.mxu0 %v944
  %1438 = vmatpush1.bf16.msra.mxu0 %v943
  %1439 = vmatprep.subr.bf16.mxu0 %v938
  %1440 = vmatpush1.bf16.msra.mxu0 %v937
  %1441 = vmatprep.subr.bf16.mxu0 %v932
  %1442 = vmatpush1.bf16.msra.mxu0 %v931
  %1443 = vmatprep.subr.bf16.mxu0 %v926
  %1444 = vmatpush1.bf16.msra.mxu0 %v925
  %1445 = vmatprep.subr.bf16.mxu0 %v920
  %1446 = vmatpush1.bf16.msra.mxu0 %v919
  %1447 = vmatprep.subr.bf16.mxu0 %v914
  %1448 = vmatpush1.bf16.msra.mxu0 %v913
  %1449 = vmatprep.subr.bf16.mxu0 %v908
  %1450 = vmatpush1.bf16.msra.mxu0 %v907
  %1451 = vmatprep.subr.bf16.mxu0 %v998
  %1452 = vmatpush2.bf16.msra.mxu0 %v997
  %1453 = vmatprep.subr.bf16.mxu0 %v992
  %1454 = vmatpush2.bf16.msra.mxu0 %v991
  %1455 = vmatprep.subr.bf16.mxu0 %v986
  %1456 = vmatpush2.bf16.msra.mxu0 %v985
  %1457 = vmatprep.subr.bf16.mxu0 %v980
  %1458 = vmatpush2.bf16.msra.mxu0 %v979
  %1459 = vmatprep.subr.bf16.mxu0 %v974
  %1460 = vmatpush2.bf16.msra.mxu0 %v973
  %1461 = vmatprep.subr.bf16.mxu0 %v968
  %1462 = vmatpush2.bf16.msra.mxu0 %v967
  %1463 = vmatprep.subr.bf16.mxu0 %v962
  %1464 = vmatpush2.bf16.msra.mxu0 %v961
  %1465 = vmatprep.subr.bf16.mxu0 %v956
  %1466 = vmatpush2.bf16.msra.mxu0 %v955
  %1467 = vmatprep.mubr.bf16.mxu0 %v298
  %1468 = vmatmul.mubr.bf16.gmra.mxu0 %v297
  %v1469 = vpop.f32.mrf.mxu0
  %v1470 = vadd.f32 0.0, %v1469
  %v1471 = vpop.f32.mrf.mxu0
  %v1472 = vadd.f32 0.0, %v1471
  %v1473 = vpop.f32.mrf.mxu0
  %v1474 = vadd.f32 0.0, %v1473
  %v1475 = vpop.f32.mrf.mxu0
  %v1476 = vadd.f32 0.0, %v1475
  %1477 = vmatprep.mubr.bf16.mxu0 %v302
  %1478 = vmatmul.mubr.bf16.gmra.mxu0 %v301
  %v1479 = vpop.f32.mrf.mxu0
  %v1480 = vadd.f32 0.0, %v1479
  %v1481 = vpop.f32.mrf.mxu0
  %v1482 = vadd.f32 0.0, %v1481
  %v1483 = vpop.f32.mrf.mxu0
  %v1484 = vadd.f32 0.0, %v1483
  %v1485 = vpop.f32.mrf.mxu0
  %v1486 = vadd.f32 0.0, %v1485
  %1487 = vmatprep.mubr.bf16.mxu0 %v306
  %1488 = vmatmul.mubr.bf16.gmra.mxu0 %v305
  %v1489 = vpop.f32.mrf.mxu0
  %v1490 = vadd.f32 0.0, %v1489
  %v1491 = vpop.f32.mrf.mxu0
  %v1492 = vadd.f32 0.0, %v1491
  %v1493 = vpop.f32.mrf.mxu0
  %v1494 = vadd.f32 0.0, %v1493
  %v1495 = vpop.f32.mrf.mxu0
  %v1496 = vadd.f32 0.0, %v1495
  %1497 = vmatprep.mubr.bf16.mxu0 %v310
  %1498 = vmatmul.mubr.bf16.gmra.mxu0 %v309
  %v1499 = vpop.f32.mrf.mxu0
  %v1500 = vadd.f32 0.0, %v1499
  %v1501 = vpop.f32.mrf.mxu0
  %v1502 = vadd.f32 0.0, %v1501
  %v1503 = vpop.f32.mrf.mxu0
  %v1504 = vadd.f32 0.0, %v1503
  %v1505 = vpop.f32.mrf.mxu0
  %v1506 = vadd.f32 0.0, %v1505
  %1507 = vdwg.mxu0
  %1508 = vmatprep.subr.bf16.mxu0 %v1046
  %1509 = vmatpush1.bf16.msra.mxu0 %v1045
  %1510 = vmatprep.subr.bf16.mxu0 %v1040
  %1511 = vmatpush1.bf16.msra.mxu0 %v1039
  %1512 = vmatprep.subr.bf16.mxu0 %v1034
  %1513 = vmatpush1.bf16.msra.mxu0 %v1033
  %1514 = vmatprep.subr.bf16.mxu0 %v1028
  %1515 = vmatpush1.bf16.msra.mxu0 %v1027
  %1516 = vmatprep.subr.bf16.mxu0 %v1022
  %1517 = vmatpush1.bf16.msra.mxu0 %v1021
  %1518 = vmatprep.subr.bf16.mxu0 %v1016
  %1519 = vmatpush1.bf16.msra.mxu0 %v1015
  %1520 = vmatprep.subr.bf16.mxu0 %v1010
  %1521 = vmatpush1.bf16.msra.mxu0 %v1009
  %1522 = vmatprep.subr.bf16.mxu0 %v1004
  %1523 = vmatpush1.bf16.msra.mxu0 %v1003
  %1524 = vmatprep.subr.bf16.mxu0 %v1094
  %1525 = vmatpush2.bf16.msra.mxu0 %v1093
  %1526 = vmatprep.subr.bf16.mxu0 %v1088
  %1527 = vmatpush2.bf16.msra.mxu0 %v1087
  %1528 = vmatprep.subr.bf16.mxu0 %v1082
  %1529 = vmatpush2.bf16.msra.mxu0 %v1081
  %1530 = vmatprep.subr.bf16.mxu0 %v1076
  %1531 = vmatpush2.bf16.msra.mxu0 %v1075
  %1532 = vmatprep.subr.bf16.mxu0 %v1070
  %1533 = vmatpush2.bf16.msra.mxu0 %v1069
  %1534 = vmatprep.subr.bf16.mxu0 %v1064
  %1535 = vmatpush2.bf16.msra.mxu0 %v1063
  %1536 = vmatprep.subr.bf16.mxu0 %v1058
  %1537 = vmatpush2.bf16.msra.mxu0 %v1057
  %1538 = vmatprep.subr.bf16.mxu0 %v1052
  %1539 = vmatpush2.bf16.msra.mxu0 %v1051
  %1540 = vmatprep.mubr.bf16.mxu0 %v300
  %1541 = vmatmul.mubr.bf16.gmra.mxu0 %v299
  %v1542 = vpop.f32.mrf.mxu0
  %v1543 = vadd.f32 %v1470, %v1542
  %v1544 = vpop.f32.mrf.mxu0
  %v1545 = vadd.f32 %v1472, %v1544
  %v1546 = vpop.f32.mrf.mxu0
  %v1547 = vadd.f32 %v1474, %v1546
  %v1548 = vpop.f32.mrf.mxu0
  %v1549 = vadd.f32 %v1476, %v1548
  %1550 = vmatprep.mubr.bf16.mxu0 %v304
  %1551 = vmatmul.mubr.bf16.gmra.mxu0 %v303
  %v1552 = vpop.f32.mrf.mxu0
  %v1553 = vadd.f32 %v1480, %v1552
  %v1554 = vpop.f32.mrf.mxu0
  %v1555 = vadd.f32 %v1482, %v1554
  %v1556 = vpop.f32.mrf.mxu0
  %v1557 = vadd.f32 %v1484, %v1556
  %v1558 = vpop.f32.mrf.mxu0
  %v1559 = vadd.f32 %v1486, %v1558
  %1560 = vmatprep.mubr.bf16.mxu0 %v308
  %1561 = vmatmul.mubr.bf16.gmra.mxu0 %v307
  %v1562 = vpop.f32.mrf.mxu0
  %v1563 = vadd.f32 %v1490, %v1562
  %v1564 = vpop.f32.mrf.mxu0
  %v1565 = vadd.f32 %v1492, %v1564
  %v1566 = vpop.f32.mrf.mxu0
  %v1567 = vadd.f32 %v1494, %v1566
  %v1568 = vpop.f32.mrf.mxu0
  %v1569 = vadd.f32 %v1496, %v1568
  %1570 = vmatprep.mubr.bf16.mxu0 %v312
  %1571 = vmatmul.mubr.bf16.gmra.mxu0 %v311
  %v1572 = vpop.f32.mrf.mxu0
  %v1573 = vadd.f32 %v1500, %v1572
  %v1574 = vpop.f32.mrf.mxu0
  %v1575 = vadd.f32 %v1502, %v1574
  %v1576 = vpop.f32.mrf.mxu0
  %v1577 = vadd.f32 %v1504, %v1576
  %v1578 = vpop.f32.mrf.mxu0
  %v1579 = vadd.f32 %v1506, %v1578
  %1580 = vdwg.mxu0
  %1581 = vmatprep.subr.bf16.mxu0 %v952
  %1582 = vmatpush1.bf16.msra.mxu0 %v951
  %1583 = vmatprep.subr.bf16.mxu0 %v946
  %1584 = vmatpush1.bf16.msra.mxu0 %v945
  %1585 = vmatprep.subr.bf16.mxu0 %v940
  %1586 = vmatpush1.bf16.msra.mxu0 %v939
  %1587 = vmatprep.subr.bf16.mxu0 %v934
  %1588 = vmatpush1.bf16.msra.mxu0 %v933
  %1589 = vmatprep.subr.bf16.mxu0 %v928
  %1590 = vmatpush1.bf16.msra.mxu0 %v927
  %1591 = vmatprep.subr.bf16.mxu0 %v922
  %1592 = vmatpush1.bf16.msra.mxu0 %v921
  %1593 = vmatprep.subr.bf16.mxu0 %v916
  %1594 = vmatpush1.bf16.msra.mxu0 %v915
  %1595 = vmatprep.subr.bf16.mxu0 %v910
  %1596 = vmatpush1.bf16.msra.mxu0 %v909
  %1597 = vmatprep.subr.bf16.mxu0 %v1000
  %1598 = vmatpush2.bf16.msra.mxu0 %v999
  %1599 = vmatprep.subr.bf16.mxu0 %v994
  %1600 = vmatpush2.bf16.msra.mxu0 %v993
  %1601 = vmatprep.subr.bf16.mxu0 %v988
  %1602 = vmatpush2.bf16.msra.mxu0 %v987
  %1603 = vmatprep.subr.bf16.mxu0 %v982
  %1604 = vmatpush2.bf16.msra.mxu0 %v981
  %1605 = vmatprep.subr.bf16.mxu0 %v976
  %1606 = vmatpush2.bf16.msra.mxu0 %v975
  %1607 = vmatprep.subr.bf16.mxu0 %v970
  %1608 = vmatpush2.bf16.msra.mxu0 %v969
  %1609 = vmatprep.subr.bf16.mxu0 %v964
  %1610 = vmatpush2.bf16.msra.mxu0 %v963
  %1611 = vmatprep.subr.bf16.mxu0 %v958
  %1612 = vmatpush2.bf16.msra.mxu0 %v957
  %1613 = vmatprep.mubr.bf16.mxu0 %v298
  %1614 = vmatmul.mubr.bf16.gmra.mxu0 %v297
  %v1615 = vpop.f32.mrf.mxu0
  %v1616 = vadd.f32 0.0, %v1615
  %v1617 = vpop.f32.mrf.mxu0
  %v1618 = vadd.f32 0.0, %v1617
  %v1619 = vpop.f32.mrf.mxu0
  %v1620 = vadd.f32 0.0, %v1619
  %v1621 = vpop.f32.mrf.mxu0
  %v1622 = vadd.f32 0.0, %v1621
  %1623 = vmatprep.mubr.bf16.mxu0 %v302
  %1624 = vmatmul.mubr.bf16.gmra.mxu0 %v301
  %v1625 = vpop.f32.mrf.mxu0
  %v1626 = vadd.f32 0.0, %v1625
  %v1627 = vpop.f32.mrf.mxu0
  %v1628 = vadd.f32 0.0, %v1627
  %v1629 = vpop.f32.mrf.mxu0
  %v1630 = vadd.f32 0.0, %v1629
  %v1631 = vpop.f32.mrf.mxu0
  %v1632 = vadd.f32 0.0, %v1631
  %1633 = vmatprep.mubr.bf16.mxu0 %v306
  %1634 = vmatmul.mubr.bf16.gmra.mxu0 %v305
  %v1635 = vpop.f32.mrf.mxu0
  %v1636 = vadd.f32 0.0, %v1635
  %v1637 = vpop.f32.mrf.mxu0
  %v1638 = vadd.f32 0.0, %v1637
  %v1639 = vpop.f32.mrf.mxu0
  %v1640 = vadd.f32 0.0, %v1639
  %v1641 = vpop.f32.mrf.mxu0
  %v1642 = vadd.f32 0.0, %v1641
  %1643 = vmatprep.mubr.bf16.mxu0 %v310
  %1644 = vmatmul.mubr.bf16.gmra.mxu0 %v309
  %v1645 = vpop.f32.mrf.mxu0
  %v1646 = vadd.f32 0.0, %v1645
  %v1647 = vpop.f32.mrf.mxu0
  %v1648 = vadd.f32 0.0, %v1647
  %v1649 = vpop.f32.mrf.mxu0
  %v1650 = vadd.f32 0.0, %v1649
  %v1651 = vpop.f32.mrf.mxu0
  %v1652 = vadd.f32 0.0, %v1651
  %1653 = vdwg.mxu0
  %1654 = vmatprep.subr.bf16.mxu0 %v1048
  %1655 = vmatpush1.bf16.msra.mxu0 %v1047
  %1656 = vmatprep.subr.bf16.mxu0 %v1042
  %1657 = vmatpush1.bf16.msra.mxu0 %v1041
  %1658 = vmatprep.subr.bf16.mxu0 %v1036
  %1659 = vmatpush1.bf16.msra.mxu0 %v1035
  %1660 = vmatprep.subr.bf16.mxu0 %v1030
  %1661 = vmatpush1.bf16.msra.mxu0 %v1029
  %1662 = vmatprep.subr.bf16.mxu0 %v1024
  %1663 = vmatpush1.bf16.msra.mxu0 %v1023
  %1664 = vmatprep.subr.bf16.mxu0 %v1018
  %1665 = vmatpush1.bf16.msra.mxu0 %v1017
  %1666 = vmatprep.subr.bf16.mxu0 %v1012
  %1667 = vmatpush1.bf16.msra.mxu0 %v1011
  %1668 = vmatprep.subr.bf16.mxu0 %v1006
  %1669 = vmatpush1.bf16.msra.mxu0 %v1005
  %1670 = vmatprep.subr.bf16.mxu0 %v1096
  %1671 = vmatpush2.bf16.msra.mxu0 %v1095
  %1672 = vmatprep.subr.bf16.mxu0 %v1090
  %1673 = vmatpush2.bf16.msra.mxu0 %v1089
  %1674 = vmatprep.subr.bf16.mxu0 %v1084
  %1675 = vmatpush2.bf16.msra.mxu0 %v1083
  %1676 = vmatprep.subr.bf16.mxu0 %v1078
  %1677 = vmatpush2.bf16.msra.mxu0 %v1077
  %1678 = vmatprep.subr.bf16.mxu0 %v1072
  %1679 = vmatpush2.bf16.msra.mxu0 %v1071
  %1680 = vmatprep.subr.bf16.mxu0 %v1066
  %1681 = vmatpush2.bf16.msra.mxu0 %v1065
  %1682 = vmatprep.subr.bf16.mxu0 %v1060
  %1683 = vmatpush2.bf16.msra.mxu0 %v1059
  %1684 = vmatprep.subr.bf16.mxu0 %v1054
  %1685 = vmatpush2.bf16.msra.mxu0 %v1053
  %1686 = vmatprep.mubr.bf16.mxu0 %v300
  %1687 = vmatmul.mubr.bf16.gmra.mxu0 %v299
  %v1688 = vpop.f32.mrf.mxu0
  %v1689 = vadd.f32 %v1616, %v1688
  %v1690 = vpop.f32.mrf.mxu0
  %v1691 = vadd.f32 %v1618, %v1690
  %v1692 = vpop.f32.mrf.mxu0
  %v1693 = vadd.f32 %v1620, %v1692
  %v1694 = vpop.f32.mrf.mxu0
  %v1695 = vadd.f32 %v1622, %v1694
  %1696 = vmatprep.mubr.bf16.mxu0 %v304
  %1697 = vmatmul.mubr.bf16.gmra.mxu0 %v303
  %v1698 = vpop.f32.mrf.mxu0
  %v1699 = vadd.f32 %v1626, %v1698
  %v1700 = vpop.f32.mrf.mxu0
  %v1701 = vadd.f32 %v1628, %v1700
  %v1702 = vpop.f32.mrf.mxu0
  %v1703 = vadd.f32 %v1630, %v1702
  %v1704 = vpop.f32.mrf.mxu0
  %v1705 = vadd.f32 %v1632, %v1704
  %1706 = vmatprep.mubr.bf16.mxu0 %v308
  %1707 = vmatmul.mubr.bf16.gmra.mxu0 %v307
  %v1708 = vpop.f32.mrf.mxu0
  %v1709 = vadd.f32 %v1636, %v1708
  %v1710 = vpop.f32.mrf.mxu0
  %v1711 = vadd.f32 %v1638, %v1710
  %v1712 = vpop.f32.mrf.mxu0
  %v1713 = vadd.f32 %v1640, %v1712
  %v1714 = vpop.f32.mrf.mxu0
  %v1715 = vadd.f32 %v1642, %v1714
  %1716 = vmatprep.mubr.bf16.mxu0 %v312
  %1717 = vmatmul.mubr.bf16.gmra.mxu0 %v311
  %v1718 = vpop.f32.mrf.mxu0
  %v1719 = vadd.f32 %v1646, %v1718
  %v1720 = vpop.f32.mrf.mxu0
  %v1721 = vadd.f32 %v1648, %v1720
  %v1722 = vpop.f32.mrf.mxu0
  %v1723 = vadd.f32 %v1650, %v1722
  %v1724 = vpop.f32.mrf.mxu0
  %v1725 = vadd.f32 %v1652, %v1724
  %1726 = vdwg.mxu0
  %v1727 = vmul.f32 %v1397, %v1397
  %v1728 = vmul.f32 %v1399, %v1399
  %v1729 = vmul.f32 %v1543, %v1543
  %v1730 = vmul.f32 %v1401, %v1401
  %v1731 = vmul.f32 %v1403, %v1403
  %v1732 = vmul.f32 %v1547, %v1547
  %v1733 = vmul.f32 %v1407, %v1407
  %v1734 = vmul.f32 %v1409, %v1409
  %v1735 = vmul.f32 %v1553, %v1553
  %v1736 = vmul.f32 %v1411, %v1411
  %v1737 = vmul.f32 %v1413, %v1413
  %v1738 = vmul.f32 %v1557, %v1557
  %v1739 = vmul.f32 %v1417, %v1417
  %v1740 = vmul.f32 %v1419, %v1419
  %v1741 = vmul.f32 %v1563, %v1563
  %v1742 = vmul.f32 %v1421, %v1421
  %v1743 = vmul.f32 %v1423, %v1423
  %v1744 = vmul.f32 %v1567, %v1567
  %v1745 = vmul.f32 %v1427, %v1427
  %v1746 = vmul.f32 %v1429, %v1429
  %v1747 = vmul.f32 %v1573, %v1573
  %v1748 = vmul.f32 %v1431, %v1431
  %v1749 = vmul.f32 %v1433, %v1433
  %v1750 = vmul.f32 %v1577, %v1577
  %v1751 = vmul.f32 %v1545, %v1545
  %v1752 = vmul.f32 %v1689, %v1689
  %v1753 = vmul.f32 %v1691, %v1691
  %v1754 = vmul.f32 %v1549, %v1549
  %v1755 = vmul.f32 %v1693, %v1693
  %v1756 = vmul.f32 %v1695, %v1695
  %v1757 = vmul.f32 %v1555, %v1555
  %v1758 = vmul.f32 %v1699, %v1699
  %v1759 = vmul.f32 %v1701, %v1701
  %v1760 = vmul.f32 %v1559, %v1559
  %v1761 = vmul.f32 %v1703, %v1703
  %v1762 = vmul.f32 %v1705, %v1705
  %v1763 = vmul.f32 %v1565, %v1565
  %v1764 = vmul.f32 %v1709, %v1709
  %v1765 = vmul.f32 %v1711, %v1711
  %v1766 = vmul.f32 %v1569, %v1569
  %v1767 = vmul.f32 %v1713, %v1713
  %v1768 = vmul.f32 %v1715, %v1715
  %v1769 = vmul.f32 %v1575, %v1575
  %v1770 = vmul.f32 %v1719, %v1719
  %v1771 = vmul.f32 %v1721, %v1721
  %v1772 = vmul.f32 %v1579, %v1579
  %v1773 = vmul.f32 %v1723, %v1723
  %v1774 = vmul.f32 %v1725, %v1725
  %v1775 = vadd.f32 %v1727, %v1751
  %v1776 = vadd.f32 %v1728, %v1752
  %v1777 = vadd.f32 %v1729, %v1753
  %v1778 = vadd.f32 %v1730, %v1754
  %v1779 = vadd.f32 %v1731, %v1755
  %v1780 = vadd.f32 %v1732, %v1756
  %v1781 = vadd.f32 %v1733, %v1757
  %v1782 = vadd.f32 %v1734, %v1758
  %v1783 = vadd.f32 %v1735, %v1759
  %v1784 = vadd.f32 %v1736, %v1760
  %v1785 = vadd.f32 %v1737, %v1761
  %v1786 = vadd.f32 %v1738, %v1762
  %v1787 = vadd.f32 %v1739, %v1763
  %v1788 = vadd.f32 %v1740, %v1764
  %v1789 = vadd.f32 %v1741, %v1765
  %v1790 = vadd.f32 %v1742, %v1766
  %v1791 = vadd.f32 %v1743, %v1767
  %v1792 = vadd.f32 %v1744, %v1768
  %v1793 = vadd.f32 %v1745, %v1769
  %v1794 = vadd.f32 %v1746, %v1770
  %v1795 = vadd.f32 %v1747, %v1771
  %v1796 = vadd.f32 %v1748, %v1772
  %v1797 = vadd.f32 %v1749, %v1773
  %v1798 = vadd.f32 %v1750, %v1774
  %v1799 = vrsqrt.pop %v1775
  %v1800 = vmul.f32 %v1775, %v1799
  %vm1801 = vcmp.eq.f32.partialorder %v1775, inf
  %v1802 = vsel %vm1801, %v1775, %v1800
  %vm1803 = vcmp.eq.f32.partialorder %v1775, 0.0
  %v1804 = vand.u32 %v1775, 2147483648
  %v1805 = vsel %vm1803, %v1804, %v1802
  %v1806 = vrsqrt.pop %v1776
  %v1807 = vmul.f32 %v1776, %v1806
  %vm1808 = vcmp.eq.f32.partialorder %v1776, inf
  %v1809 = vsel %vm1808, %v1776, %v1807
  %vm1810 = vcmp.eq.f32.partialorder %v1776, 0.0
  %v1811 = vand.u32 %v1776, 2147483648
  %v1812 = vsel %vm1810, %v1811, %v1809
  %v1813 = vrsqrt.pop %v1777
  %v1814 = vmul.f32 %v1777, %v1813
  %vm1815 = vcmp.eq.f32.partialorder %v1777, inf
  %v1816 = vsel %vm1815, %v1777, %v1814
  %vm1817 = vcmp.eq.f32.partialorder %v1777, 0.0
  %v1818 = vand.u32 %v1777, 2147483648
  %v1819 = vsel %vm1817, %v1818, %v1816
  %v1820 = vrsqrt.pop %v1778
  %v1821 = vmul.f32 %v1778, %v1820
  %vm1822 = vcmp.eq.f32.partialorder %v1778, inf
  %v1823 = vsel %vm1822, %v1778, %v1821
  %vm1824 = vcmp.eq.f32.partialorder %v1778, 0.0
  %v1825 = vand.u32 %v1778, 2147483648
  %v1826 = vsel %vm1824, %v1825, %v1823
  %v1827 = vrsqrt.pop %v1779
  %v1828 = vmul.f32 %v1779, %v1827
  %vm1829 = vcmp.eq.f32.partialorder %v1779, inf
  %v1830 = vsel %vm1829, %v1779, %v1828
  %vm1831 = vcmp.eq.f32.partialorder %v1779, 0.0
  %v1832 = vand.u32 %v1779, 2147483648
  %v1833 = vsel %vm1831, %v1832, %v1830
  %v1834 = vrsqrt.pop %v1780
  %v1835 = vmul.f32 %v1780, %v1834
  %vm1836 = vcmp.eq.f32.partialorder %v1780, inf
  %v1837 = vsel %vm1836, %v1780, %v1835
  %vm1838 = vcmp.eq.f32.partialorder %v1780, 0.0
  %v1839 = vand.u32 %v1780, 2147483648
  %v1840 = vsel %vm1838, %v1839, %v1837
  %v1841 = vrsqrt.pop %v1781
  %v1842 = vmul.f32 %v1781, %v1841
  %vm1843 = vcmp.eq.f32.partialorder %v1781, inf
  %v1844 = vsel %vm1843, %v1781, %v1842
  %vm1845 = vcmp.eq.f32.partialorder %v1781, 0.0
  %v1846 = vand.u32 %v1781, 2147483648
  %v1847 = vsel %vm1845, %v1846, %v1844
  %v1848 = vrsqrt.pop %v1782
  %v1849 = vmul.f32 %v1782, %v1848
  %vm1850 = vcmp.eq.f32.partialorder %v1782, inf
  %v1851 = vsel %vm1850, %v1782, %v1849
  %vm1852 = vcmp.eq.f32.partialorder %v1782, 0.0
  %v1853 = vand.u32 %v1782, 2147483648
  %v1854 = vsel %vm1852, %v1853, %v1851
  %v1855 = vrsqrt.pop %v1783
  %v1856 = vmul.f32 %v1783, %v1855
  %vm1857 = vcmp.eq.f32.partialorder %v1783, inf
  %v1858 = vsel %vm1857, %v1783, %v1856
  %vm1859 = vcmp.eq.f32.partialorder %v1783, 0.0
  %v1860 = vand.u32 %v1783, 2147483648
  %v1861 = vsel %vm1859, %v1860, %v1858
  %v1862 = vrsqrt.pop %v1784
  %v1863 = vmul.f32 %v1784, %v1862
  %vm1864 = vcmp.eq.f32.partialorder %v1784, inf
  %v1865 = vsel %vm1864, %v1784, %v1863
  %vm1866 = vcmp.eq.f32.partialorder %v1784, 0.0
  %v1867 = vand.u32 %v1784, 2147483648
  %v1868 = vsel %vm1866, %v1867, %v1865
  %v1869 = vrsqrt.pop %v1785
  %v1870 = vmul.f32 %v1785, %v1869
  %vm1871 = vcmp.eq.f32.partialorder %v1785, inf
  %v1872 = vsel %vm1871, %v1785, %v1870
  %vm1873 = vcmp.eq.f32.partialorder %v1785, 0.0
  %v1874 = vand.u32 %v1785, 2147483648
  %v1875 = vsel %vm1873, %v1874, %v1872
  %v1876 = vrsqrt.pop %v1786
  %v1877 = vmul.f32 %v1786, %v1876
  %vm1878 = vcmp.eq.f32.partialorder %v1786, inf
  %v1879 = vsel %vm1878, %v1786, %v1877
  %vm1880 = vcmp.eq.f32.partialorder %v1786, 0.0
  %v1881 = vand.u32 %v1786, 2147483648
  %v1882 = vsel %vm1880, %v1881, %v1879
  %v1883 = vrsqrt.pop %v1787
  %v1884 = vmul.f32 %v1787, %v1883
  %vm1885 = vcmp.eq.f32.partialorder %v1787, inf
  %v1886 = vsel %vm1885, %v1787, %v1884
  %vm1887 = vcmp.eq.f32.partialorder %v1787, 0.0
  %v1888 = vand.u32 %v1787, 2147483648
  %v1889 = vsel %vm1887, %v1888, %v1886
  %v1890 = vrsqrt.pop %v1788
  %v1891 = vmul.f32 %v1788, %v1890
  %vm1892 = vcmp.eq.f32.partialorder %v1788, inf
  %v1893 = vsel %vm1892, %v1788, %v1891
  %vm1894 = vcmp.eq.f32.partialorder %v1788, 0.0
  %v1895 = vand.u32 %v1788, 2147483648
  %v1896 = vsel %vm1894, %v1895, %v1893
  %v1897 = vrsqrt.pop %v1789
  %v1898 = vmul.f32 %v1789, %v1897
  %vm1899 = vcmp.eq.f32.partialorder %v1789, inf
  %v1900 = vsel %vm1899, %v1789, %v1898
  %vm1901 = vcmp.eq.f32.partialorder %v1789, 0.0
  %v1902 = vand.u32 %v1789, 2147483648
  %v1903 = vsel %vm1901, %v1902, %v1900
  %v1904 = vrsqrt.pop %v1790
  %v1905 = vmul.f32 %v1790, %v1904
  %vm1906 = vcmp.eq.f32.partialorder %v1790, inf
  %v1907 = vsel %vm1906, %v1790, %v1905
  %vm1908 = vcmp.eq.f32.partialorder %v1790, 0.0
  %v1909 = vand.u32 %v1790, 2147483648
  %v1910 = vsel %vm1908, %v1909, %v1907
  %v1911 = vrsqrt.pop %v1791
  %v1912 = vmul.f32 %v1791, %v1911
  %vm1913 = vcmp.eq.f32.partialorder %v1791, inf
  %v1914 = vsel %vm1913, %v1791, %v1912
  %vm1915 = vcmp.eq.f32.partialorder %v1791, 0.0
  %v1916 = vand.u32 %v1791, 2147483648
  %v1917 = vsel %vm1915, %v1916, %v1914
  %v1918 = vrsqrt.pop %v1792
  %v1919 = vmul.f32 %v1792, %v1918
  %vm1920 = vcmp.eq.f32.partialorder %v1792, inf
  %v1921 = vsel %vm1920, %v1792, %v1919
  %vm1922 = vcmp.eq.f32.partialorder %v1792, 0.0
  %v1923 = vand.u32 %v1792, 2147483648
  %v1924 = vsel %vm1922, %v1923, %v1921
  %v1925 = vrsqrt.pop %v1793
  %v1926 = vmul.f32 %v1793, %v1925
  %vm1927 = vcmp.eq.f32.partialorder %v1793, inf
  %v1928 = vsel %vm1927, %v1793, %v1926
  %vm1929 = vcmp.eq.f32.partialorder %v1793, 0.0
  %v1930 = vand.u32 %v1793, 2147483648
  %v1931 = vsel %vm1929, %v1930, %v1928
  %v1932 = vrsqrt.pop %v1794
  %v1933 = vmul.f32 %v1794, %v1932
  %vm1934 = vcmp.eq.f32.partialorder %v1794, inf
  %v1935 = vsel %vm1934, %v1794, %v1933
  %vm1936 = vcmp.eq.f32.partialorder %v1794, 0.0
  %v1937 = vand.u32 %v1794, 2147483648
  %v1938 = vsel %vm1936, %v1937, %v1935
  %v1939 = vrsqrt.pop %v1795
  %v1940 = vmul.f32 %v1795, %v1939
  %vm1941 = vcmp.eq.f32.partialorder %v1795, inf
  %v1942 = vsel %vm1941, %v1795, %v1940
  %vm1943 = vcmp.eq.f32.partialorder %v1795, 0.0
  %v1944 = vand.u32 %v1795, 2147483648
  %v1945 = vsel %vm1943, %v1944, %v1942
  %v1946 = vrsqrt.pop %v1796
  %v1947 = vmul.f32 %v1796, %v1946
  %vm1948 = vcmp.eq.f32.partialorder %v1796, inf
  %v1949 = vsel %vm1948, %v1796, %v1947
  %vm1950 = vcmp.eq.f32.partialorder %v1796, 0.0
  %v1951 = vand.u32 %v1796, 2147483648
  %v1952 = vsel %vm1950, %v1951, %v1949
  %v1953 = vrsqrt.pop %v1797
  %v1954 = vmul.f32 %v1797, %v1953
  %vm1955 = vcmp.eq.f32.partialorder %v1797, inf
  %v1956 = vsel %vm1955, %v1797, %v1954
  %vm1957 = vcmp.eq.f32.partialorder %v1797, 0.0
  %v1958 = vand.u32 %v1797, 2147483648
  %v1959 = vsel %vm1957, %v1958, %v1956
  %v1960 = vrsqrt.pop %v1798
  %v1961 = vmul.f32 %v1798, %v1960
  %vm1962 = vcmp.eq.f32.partialorder %v1798, inf
  %v1963 = vsel %vm1962, %v1798, %v1961
  %vm1964 = vcmp.eq.f32.partialorder %v1798, 0.0
  %v1965 = vand.u32 %v1798, 2147483648
  %v1966 = vsel %vm1964, %v1965, %v1963
  %v1967 = vsub.f32 %v1889, %v1805
  %v1968 = vsub.f32 %v1896, %v1812
  %v1969 = vsub.f32 %v1903, %v1819
  %v1970 = vsub.f32 %v1910, %v1826
  %v1971 = vsub.f32 %v1917, %v1833
  %v1972 = vsub.f32 %v1924, %v1840
  %v1973 = vsub.f32 %v1931, %v1847
  %v1974 = vsub.f32 %v1938, %v1854
  %v1975 = vsub.f32 %v1945, %v1861
  %v1976 = vsub.f32 %v1952, %v1868
  %v1977 = vsub.f32 %v1959, %v1875
  %v1978 = vsub.f32 %v1966, %v1882
  %v1979 = vand.u32 2147483647, %v1967
  %v1980 = vand.u32 2147483647, %v1968
  %v1981 = vand.u32 2147483647, %v1969
  %v1982 = vand.u32 2147483647, %v1970
  %v1983 = vand.u32 2147483647, %v1971
  %v1984 = vand.u32 2147483647, %v1972
  %v1985 = vand.u32 2147483647, %v1973
  %v1986 = vand.u32 2147483647, %v1974
  %v1987 = vand.u32 2147483647, %v1975
  %v1988 = vand.u32 2147483647, %v1976
  %v1989 = vand.u32 2147483647, %v1977
  %v1990 = vand.u32 2147483647, %v1978
  %v1991 = vld [vmem:[%s2] sm:$0xff]
  %v1992 = vld [vmem:[%s2 + $0x8] sm:$0xff]
  %v1993 = vld [vmem:[%s2 + $0x10] sm:$0xff]
  %v1994 = vld [vmem:[%s2 + $0x18] sm:$0xff]
  %v1995 = vld [vmem:[%s2 + $0x20] sm:$0xff]
  %v1996 = vld [vmem:[%s2 + $0x28] sm:$0xff]
  %v1997 = vld [vmem:[%s2 + $0x30] sm:$0xff]
  %v1998 = vld [vmem:[%s2 + $0x38] sm:$0xff]
  %v1999 = vld [vmem:[%s2 + $0x40] sm:$0xff]
  %v2000 = vld [vmem:[%s2 + $0x48] sm:$0xff]
  %v2001 = vld [vmem:[%s2 + $0x50] sm:$0xff]
  %v2002 = vld [vmem:[%s2 + $0x58] sm:$0xff]
  %v2003 = vadd.f32 %v1991, %v1979
  %v2004 = vadd.f32 %v1992, %v1980
  %v2005 = vadd.f32 %v1993, %v1981
  %v2006 = vadd.f32 %v1994, %v1982
  %v2007 = vadd.f32 %v1995, %v1983
  %v2008 = vadd.f32 %v1996, %v1984
  %v2009 = vadd.f32 %v1997, %v1985
  %v2010 = vadd.f32 %v1998, %v1986
  %v2011 = vadd.f32 %v1999, %v1987
  %v2012 = vadd.f32 %v2000, %v1988
  %v2013 = vadd.f32 %v2001, %v1989
  %v2014 = vadd.f32 %v2002, %v1990
  %2015 = vst [vmem:[%s2] sm:$0xff] %v2003
  %2016 = vst [vmem:[%s2 + $0x8] sm:$0xff] %v2004
  %2017 = vst [vmem:[%s2 + $0x10] sm:$0xff] %v2005
  %2018 = vst [vmem:[%s2 + $0x18] sm:$0xff] %v2006
  %2019 = vst [vmem:[%s2 + $0x20] sm:$0xff] %v2007
  %2020 = vst [vmem:[%s2 + $0x28] sm:$0xff] %v2008
  %2021 = vst [vmem:[%s2 + $0x30] sm:$0xff] %v2009
  %2022 = vst [vmem:[%s2 + $0x38] sm:$0xff] %v2010
  %2023 = vst [vmem:[%s2 + $0x40] sm:$0xff] %v2011
  %2024 = vst [vmem:[%s2 + $0x48] sm:$0xff] %v2012
  %2025 = vst [vmem:[%s2 + $0x50] sm:$0xff] %v2013
  %2026 = vst [vmem:[%s2 + $0x58] sm:$0xff] %v2014
  %v2027 = vadd.f32 %v1889, 1e-05
  %v2028 = vadd.f32 %v1896, 1e-05
  %v2029 = vadd.f32 %v1903, 1e-05
  %v2030 = vadd.f32 %v1910, 1e-05
  %v2031 = vadd.f32 %v1917, 1e-05
  %v2032 = vadd.f32 %v1924, 1e-05
  %v2033 = vadd.f32 %v1931, 1e-05
  %v2034 = vadd.f32 %v1938, 1e-05
  %v2035 = vadd.f32 %v1945, 1e-05
  %v2036 = vadd.f32 %v1952, 1e-05
  %v2037 = vadd.f32 %v1959, 1e-05
  %v2038 = vadd.f32 %v1966, 1e-05
  %v2039 = vadd.f32 %v1805, 1e-05
  %v2040 = vadd.f32 %v1812, 1e-05
  %v2041 = vadd.f32 %v1819, 1e-05
  %v2042 = vadd.f32 %v1826, 1e-05
  %v2043 = vadd.f32 %v1833, 1e-05
  %v2044 = vadd.f32 %v1840, 1e-05
  %v2045 = vadd.f32 %v1847, 1e-05
  %v2046 = vadd.f32 %v1854, 1e-05
  %v2047 = vadd.f32 %v1861, 1e-05
  %v2048 = vadd.f32 %v1868, 1e-05
  %v2049 = vadd.f32 %v1875, 1e-05
  %v2050 = vadd.f32 %v1882, 1e-05
  %v2051 = vrcp.pop %v2039
  %v2052 = vrcp.pop %v2040
  %v2053 = vrcp.pop %v2041
  %v2054 = vrcp.pop %v2042
  %v2055 = vrcp.pop %v2043
  %v2056 = vrcp.pop %v2044
  %v2057 = vrcp.pop %v2045
  %v2058 = vrcp.pop %v2046
  %v2059 = vrcp.pop %v2047
  %v2060 = vrcp.pop %v2048
  %v2061 = vrcp.pop %v2049
  %v2062 = vrcp.pop %v2050
  %v2063 = vmul.f32 %v2027, %v2051
  %v2064 = vmul.f32 %v2028, %v2052
  %v2065 = vmul.f32 %v2029, %v2053
  %v2066 = vmul.f32 %v2030, %v2054
  %v2067 = vmul.f32 %v2031, %v2055
  %v2068 = vmul.f32 %v2032, %v2056
  %v2069 = vmul.f32 %v2033, %v2057
  %v2070 = vmul.f32 %v2034, %v2058
  %v2071 = vmul.f32 %v2035, %v2059
  %v2072 = vmul.f32 %v2036, %v2060
  %v2073 = vmul.f32 %v2037, %v2061
  %v2074 = vmul.f32 %v2038, %v2062
  %v2075 = vlog2.pop %v2063
  %v2076 = vmul.f32 %v2075, 0.6931472
  %v2077 = vlog2.pop %v2064
  %v2078 = vmul.f32 %v2077, 0.6931472
  %v2079 = vlog2.pop %v2065
  %v2080 = vmul.f32 %v2079, 0.6931472
  %v2081 = vlog2.pop %v2066
  %v2082 = vmul.f32 %v2081, 0.6931472
  %v2083 = vlog2.pop %v2067
  %v2084 = vmul.f32 %v2083, 0.6931472
  %v2085 = vlog2.pop %v2068
  %v2086 = vmul.f32 %v2085, 0.6931472
  %v2087 = vlog2.pop %v2069
  %v2088 = vmul.f32 %v2087, 0.6931472
  %v2089 = vlog2.pop %v2070
  %v2090 = vmul.f32 %v2089, 0.6931472
  %v2091 = vlog2.pop %v2071
  %v2092 = vmul.f32 %v2091, 0.6931472
  %v2093 = vlog2.pop %v2072
  %v2094 = vmul.f32 %v2093, 0.6931472
  %v2095 = vlog2.pop %v2073
  %v2096 = vmul.f32 %v2095, 0.6931472
  %v2097 = vlog2.pop %v2074
  %v2098 = vmul.f32 %v2097, 0.6931472
  %v2099 = vand.u32 2147483647, %v2076
  %v2100 = vand.u32 2147483647, %v2078
  %v2101 = vand.u32 2147483647, %v2080
  %v2102 = vand.u32 2147483647, %v2082
  %v2103 = vand.u32 2147483647, %v2084
  %v2104 = vand.u32 2147483647, %v2086
  %v2105 = vand.u32 2147483647, %v2088
  %v2106 = vand.u32 2147483647, %v2090
  %v2107 = vand.u32 2147483647, %v2092
  %v2108 = vand.u32 2147483647, %v2094
  %v2109 = vand.u32 2147483647, %v2096
  %v2110 = vand.u32 2147483647, %v2098
  %v2111 = vld [vmem:[%s3] sm:$0xff]
  %v2112 = vld [vmem:[%s3 + $0x8] sm:$0xff]
  %v2113 = vld [vmem:[%s3 + $0x10] sm:$0xff]
  %v2114 = vld [vmem:[%s3 + $0x18] sm:$0xff]
  %v2115 = vld [vmem:[%s3 + $0x20] sm:$0xff]
  %v2116 = vld [vmem:[%s3 + $0x28] sm:$0xff]
  %v2117 = vld [vmem:[%s3 + $0x30] sm:$0xff]
  %v2118 = vld [vmem:[%s3 + $0x38] sm:$0xff]
  %v2119 = vld [vmem:[%s3 + $0x40] sm:$0xff]
  %v2120 = vld [vmem:[%s3 + $0x48] sm:$0xff]
  %v2121 = vld [vmem:[%s3 + $0x50] sm:$0xff]
  %v2122 = vld [vmem:[%s3 + $0x58] sm:$0xff]
  %v2123 = vadd.f32 %v2111, %v2099
  %v2124 = vadd.f32 %v2112, %v2100
  %v2125 = vadd.f32 %v2113, %v2101
  %v2126 = vadd.f32 %v2114, %v2102
  %v2127 = vadd.f32 %v2115, %v2103
  %v2128 = vadd.f32 %v2116, %v2104
  %v2129 = vadd.f32 %v2117, %v2105
  %v2130 = vadd.f32 %v2118, %v2106
  %v2131 = vadd.f32 %v2119, %v2107
  %v2132 = vadd.f32 %v2120, %v2108
  %v2133 = vadd.f32 %v2121, %v2109
  %v2134 = vadd.f32 %v2122, %v2110
  %2135 = vst [vmem:[%s3] sm:$0xff] %v2123
  %2136 = vst [vmem:[%s3 + $0x8] sm:$0xff] %v2124
  %2137 = vst [vmem:[%s3 + $0x10] sm:$0xff] %v2125
  %2138 = vst [vmem:[%s3 + $0x18] sm:$0xff] %v2126
  %2139 = vst [vmem:[%s3 + $0x20] sm:$0xff] %v2127
  %2140 = vst [vmem:[%s3 + $0x28] sm:$0xff] %v2128
  %2141 = vst [vmem:[%s3 + $0x30] sm:$0xff] %v2129
  %2142 = vst [vmem:[%s3 + $0x38] sm:$0xff] %v2130
  %2143 = vst [vmem:[%s3 + $0x40] sm:$0xff] %v2131
  %2144 = vst [vmem:[%s3 + $0x48] sm:$0xff] %v2132
  %2145 = vst [vmem:[%s3 + $0x50] sm:$0xff] %v2133
  %2146 = vst [vmem:[%s3 + $0x58] sm:$0xff] %v2134
  // Predicated region
  $region14: #{_multi_scale_spectral_loss.4} parent=0 // pred_check
    _
  $region15: #{_multi_scale_spectral_loss.4} parent=0 // pred_check_branch
    %2148 = sbr.rel (0) target = $region17
  $region16: #{_multi_scale_spectral_loss.4} parent=0 // pred_region
    _
  $region17: #{_multi_scale_spectral_loss.4} parent=0 // pred_fallthru
    _
  // Predicated region
  $region18: #{_multi_scale_spectral_loss.4} parent=0 // pred_check
    _
  $region19: #{_multi_scale_spectral_loss.4} parent=0 // pred_check_branch
    %2150 = sbr.rel (0) target = $region21
  $region20: #{_multi_scale_spectral_loss.4} parent=0 // pred_region
    _
  $region21: #{_multi_scale_spectral_loss.4} parent=0 // pred_fallthru
    _
  // Predicated region
  $region22: #{_multi_scale_spectral_loss.4} parent=0 // pred_check
    _
  $region23: #{_multi_scale_spectral_loss.4} parent=0 // pred_check_branch
    %2152 = sbr.rel (0) target = $region25
  $region24: #{_multi_scale_spectral_loss.4} parent=0 // pred_region
    _
  $region25: #{_multi_scale_spectral_loss.4} parent=0 // pred_fallthru
    _
  // Predicated region
  $region26: #{_multi_scale_spectral_loss.4} parent=0 // pred_check
    _
  $region27: #{_multi_scale_spectral_loss.4} parent=0 // pred_check_branch
    %2154 = sbr.rel (0) target = $region29
  $region28: #{_multi_scale_spectral_loss.4} parent=0 // pred_region
    _
  $region29: #{_multi_scale_spectral_loss.4} parent=0 // pred_fallthru
    _

// kernel: _multi_scale_spectral_loss.5
$region0: #{_multi_scale_spectral_loss.5}
  #allocation0 [shape = 'u32[]', space=smem, size = 0x4, offset = 0x4, fixed_abs, tag = 'smem constant byte address 0x4 - core index']
  #allocation1 [shape = 'u32[144,128]{1,0:T(1,128)}', space=vmem, size = 0x12000, scoped, tag = 'internal scratch']
  %s0 = inlined_call_operand.vmem [shape: bf16[2,64,256], index: 0, kind: input, shape index: {}]
  %s1 = inlined_call_operand.vmem [shape: bf16[256,512], index: 1, kind: input, shape index: {}]
  %s2 = inlined_call_operand.vmem [shape: f32[64,256], index: 2, kind: output, shape index: {0}]
  %s3 = inlined_call_operand.vmem [shape: f32[64,256], index: 3, kind: output, shape index: {1}]
  %4 = xla_tuple %s2, %s3
  %s5 = sld [smem:[#allocation0]]
  $region30: #{_multi_scale_spectral_loss.5} parent=0
    _
  %s7 = ssub.s32 1, %s5
  %s8 = scalar_select 0, %s7, %s5
  // Predicated region
  $region2: #{_multi_scale_spectral_loss.5} parent=0 // pred_check
    _
  $region3: #{_multi_scale_spectral_loss.5} parent=0 // pred_check_branch
    %10 = sbr.rel (0) target = $region5
  $region4: #{_multi_scale_spectral_loss.5} parent=0 // pred_region
    _
  $region5: #{_multi_scale_spectral_loss.5} parent=0 // pred_fallthru
    _
  // Predicated region
  $region6: #{_multi_scale_spectral_loss.5} parent=0 // pred_check
    _
  $region7: #{_multi_scale_spectral_loss.5} parent=0 // pred_check_branch
    %12 = sbr.rel (0) target = $region9
  $region8: #{_multi_scale_spectral_loss.5} parent=0 // pred_region
    _
  $region9: #{_multi_scale_spectral_loss.5} parent=0 // pred_fallthru
    _
  %p13 = scmp.eq.s32.totalorder 0, 0
  // Predicated region
  $region10: #{_multi_scale_spectral_loss.5} parent=0 // pred_check
    %p14 = pneg %p13
  $region11: #{_multi_scale_spectral_loss.5} parent=0 // pred_check_branch
    %16 = sbr.rel (%p14) target = $region13
  $region12: #{_multi_scale_spectral_loss.5} parent=0 // pred_region
    %17 = vst [vmem:[%s2] sm:$0xff] 0.0
    %18 = vst [vmem:[%s2 + $0x8] sm:$0xff] 0.0
    %19 = vst [vmem:[%s2 + $0x10] sm:$0xff] 0.0
    %20 = vst [vmem:[%s2 + $0x18] sm:$0xff] 0.0
    %21 = vst [vmem:[%s2 + $0x20] sm:$0xff] 0.0
    %22 = vst [vmem:[%s2 + $0x28] sm:$0xff] 0.0
    %23 = vst [vmem:[%s2 + $0x30] sm:$0xff] 0.0
    %24 = vst [vmem:[%s2 + $0x38] sm:$0xff] 0.0
    %25 = vst [vmem:[%s2 + $0x40] sm:$0xff] 0.0
    %26 = vst [vmem:[%s2 + $0x48] sm:$0xff] 0.0
    %27 = vst [vmem:[%s2 + $0x50] sm:$0xff] 0.0
    %28 = vst [vmem:[%s2 + $0x58] sm:$0xff] 0.0
    %29 = vst [vmem:[%s2 + $0x60] sm:$0xff] 0.0
    %30 = vst [vmem:[%s2 + $0x68] sm:$0xff] 0.0
    %31 = vst [vmem:[%s2 + $0x70] sm:$0xff] 0.0
    %32 = vst [vmem:[%s2 + $0x78] sm:$0xff] 0.0
    %33 = vst [vmem:[%s3] sm:$0xff] 0.0
    %34 = vst [vmem:[%s3 + $0x8] sm:$0xff] 0.0
    %35 = vst [vmem:[%s3 + $0x10] sm:$0xff] 0.0
    %36 = vst [vmem:[%s3 + $0x18] sm:$0xff] 0.0
    %37 = vst [vmem:[%s3 + $0x20] sm:$0xff] 0.0
    %38 = vst [vmem:[%s3 + $0x28] sm:$0xff] 0.0
    %39 = vst [vmem:[%s3 + $0x30] sm:$0xff] 0.0
    %40 = vst [vmem:[%s3 + $0x38] sm:$0xff] 0.0
    %41 = vst [vmem:[%s3 + $0x40] sm:$0xff] 0.0
    %42 = vst [vmem:[%s3 + $0x48] sm:$0xff] 0.0
    %43 = vst [vmem:[%s3 + $0x50] sm:$0xff] 0.0
    %44 = vst [vmem:[%s3 + $0x58] sm:$0xff] 0.0
    %45 = vst [vmem:[%s3 + $0x60] sm:$0xff] 0.0
    %46 = vst [vmem:[%s3 + $0x68] sm:$0xff] 0.0
    %47 = vst [vmem:[%s3 + $0x70] sm:$0xff] 0.0
    %48 = vst [vmem:[%s3 + $0x78] sm:$0xff] 0.0
  $region13: #{_multi_scale_spectral_loss.5} parent=0 // pred_fallthru
    _
  %v49 = vld [vmem:[%s0] sm:$0xff]
  %v50 = vld [vmem:[%s0 + $0x8] sm:$0xff]
  %v51 = vld [vmem:[%s0 + $0x10] sm:$0xff]
  %v52 = vld [vmem:[%s0 + $0x18] sm:$0xff]
  %v53 = vld [vmem:[%s0 + $0x20] sm:$0xff]
  %v54 = vld [vmem:[%s0 + $0x28] sm:$0xff]
  %v55 = vld [vmem:[%s0 + $0x30] sm:$0xff]
  %v56 = vld [vmem:[%s0 + $0x38] sm:$0xff]
  %v57 = vld [vmem:[%s0 + $0x40] sm:$0xff]
  %v58 = vld [vmem:[%s0 + $0x48] sm:$0xff]
  %v59 = vld [vmem:[%s0 + $0x50] sm:$0xff]
  %v60 = vld [vmem:[%s0 + $0x58] sm:$0xff]
  %v61 = vld [vmem:[%s0 + $0x60] sm:$0xff]
  %v62 = vld [vmem:[%s0 + $0x68] sm:$0xff]
  %v63 = vld [vmem:[%s0 + $0x70] sm:$0xff]
  %v64 = vld [vmem:[%s0 + $0x78] sm:$0xff]
  %v65 = vld [vmem:[%s1] sm:$0xff]
  %v66 = vld [vmem:[%s1 + $0x8] sm:$0xff]
  %v67 = vld [vmem:[%s1 + $0x10] sm:$0xff]
  %v68 = vld [vmem:[%s1 + $0x18] sm:$0xff]
  %v69 = vld [vmem:[%s1 + $0x20] sm:$0xff]
  %v70 = vld [vmem:[%s1 + $0x28] sm:$0xff]
  %v71 = vld [vmem:[%s1 + $0x30] sm:$0xff]
  %v72 = vld [vmem:[%s1 + $0x38] sm:$0xff]
  %v73 = vld [vmem:[%s1 + $0x40] sm:$0xff]
  %v74 = vld [vmem:[%s1 + $0x48] sm:$0xff]
  %v75 = vld [vmem:[%s1 + $0x50] sm:$0xff]
  %v76 = vld [vmem:[%s1 + $0x58] sm:$0xff]
  %v77 = vld [vmem:[%s1 + $0x60] sm:$0xff]
  %v78 = vld [vmem:[%s1 + $0x68] sm:$0xff]
  %v79 = vld [vmem:[%s1 + $0x70] sm:$0xff]
  %v80 = vld [vmem:[%s1 + $0x78] sm:$0xff]
  %v81 = vld [vmem:[%s1 + $0x80] sm:$0xff]
  %v82 = vld [vmem:[%s1 + $0x88] sm:$0xff]
  %v83 = vld [vmem:[%s1 + $0x90] sm:$0xff]
  %v84 = vld [vmem:[%s1 + $0x98] sm:$0xff]
  %v85 = vld [vmem:[%s1 + $0xa0] sm:$0xff]
  %v86 = vld [vmem:[%s1 + $0xa8] sm:$0xff]
  %v87 = vld [vmem:[%s1 + $0xb0] sm:$0xff]
  %v88 = vld [vmem:[%s1 + $0xb8] sm:$0xff]
  %v89 = vld [vmem:[%s1 + $0xc0] sm:$0xff]
  %v90 = vld [vmem:[%s1 + $0xc8] sm:$0xff]
  %v91 = vld [vmem:[%s1 + $0xd0] sm:$0xff]
  %v92 = vld [vmem:[%s1 + $0xd8] sm:$0xff]
  %v93 = vld [vmem:[%s1 + $0xe0] sm:$0xff]
  %v94 = vld [vmem:[%s1 + $0xe8] sm:$0xff]
  %v95 = vld [vmem:[%s1 + $0xf0] sm:$0xff]
  %v96 = vld [vmem:[%s1 + $0xf8] sm:$0xff]
  %v97 = vld [vmem:[%s1 + $0x100] sm:$0xff]
  %v98 = vld [vmem:[%s1 + $0x108] sm:$0xff]
  %v99 = vld [vmem:[%s1 + $0x110] sm:$0xff]
  %v100 = vld [vmem:[%s1 + $0x118] sm:$0xff]
  %v101 = vld [vmem:[%s1 + $0x120] sm:$0xff]
  %v102 = vld [vmem:[%s1 + $0x128] sm:$0xff]
  %v103 = vld [vmem:[%s1 + $0x130] sm:$0xff]
  %v104 = vld [vmem:[%s1 + $0x138] sm:$0xff]
  %v105 = vld [vmem:[%s1 + $0x140] sm:$0xff]
  %v106 = vld [vmem:[%s1 + $0x148] sm:$0xff]
  %v107 = vld [vmem:[%s1 + $0x150] sm:$0xff]
  %v108 = vld [vmem:[%s1 + $0x158] sm:$0xff]
  %v109 = vld [vmem:[%s1 + $0x160] sm:$0xff]
  %v110 = vld [vmem:[%s1 + $0x168] sm:$0xff]
  %v111 = vld [vmem:[%s1 + $0x170] sm:$0xff]
  %v112 = vld [vmem:[%s1 + $0x178] sm:$0xff]
  %v113 = vld [vmem:[%s1 + $0x180] sm:$0xff]
  %v114 = vld [vmem:[%s1 + $0x188] sm:$0xff]
  %v115 = vld [vmem:[%s1 + $0x190] sm:$0xff]
  %v116 = vld [vmem:[%s1 + $0x198] sm:$0xff]
  %v117 = vld [vmem:[%s1 + $0x1a0] sm:$0xff]
  %v118 = vld [vmem:[%s1 + $0x1a8] sm:$0xff]
  %v119 = vld [vmem:[%s1 + $0x1b0] sm:$0xff]
  %v120 = vld [vmem:[%s1 + $0x1b8] sm:$0xff]
  %v121 = vld [vmem:[%s1 + $0x1c0] sm:$0xff]
  %v122 = vld [vmem:[%s1 + $0x1c8] sm:$0xff]
  %v123 = vld [vmem:[%s1 + $0x1d0] sm:$0xff]
  %v124 = vld [vmem:[%s1 + $0x1d8] sm:$0xff]
  %v125 = vld [vmem:[%s1 + $0x1e0] sm:$0xff]
  %v126 = vld [vmem:[%s1 + $0x1e8] sm:$0xff]
  %v127 = vld [vmem:[%s1 + $0x1f0] sm:$0xff]
  %v128 = vld [vmem:[%s1 + $0x1f8] sm:$0xff]
  %v145 = vunpack.c.l.b16 %v49
  %v146 = vunpack.c.h.b16 %v49
  %v147 = vunpack.c.l.b16 %v50
  %v148 = vunpack.c.h.b16 %v50
  %v149 = vunpack.c.l.b16 %v51
  %v150 = vunpack.c.h.b16 %v51
  %v151 = vunpack.c.l.b16 %v52
  %v152 = vunpack.c.h.b16 %v52
  %v153 = vunpack.c.l.b16 %v53
  %v154 = vunpack.c.h.b16 %v53
  %v155 = vunpack.c.l.b16 %v54
  %v156 = vunpack.c.h.b16 %v54
  %v157 = vunpack.c.l.b16 %v55
  %v158 = vunpack.c.h.b16 %v55
  %v159 = vunpack.c.l.b16 %v56
  %v160 = vunpack.c.h.b16 %v56
  %v161 = vunpack.c.l.b16 %v57
  %v162 = vunpack.c.h.b16 %v57
  %v163 = vunpack.c.l.b16 %v58
  %v164 = vunpack.c.h.b16 %v58
  %v165 = vunpack.c.l.b16 %v59
  %v166 = vunpack.c.h.b16 %v59
  %v167 = vunpack.c.l.b16 %v60
  %v168 = vunpack.c.h.b16 %v60
  %v169 = vunpack.c.l.b16 %v61
  %v170 = vunpack.c.h.b16 %v61
  %v171 = vunpack.c.l.b16 %v62
  %v172 = vunpack.c.h.b16 %v62
  %v173 = vunpack.c.l.b16 %v63
  %v174 = vunpack.c.h.b16 %v63
  %v175 = vunpack.c.l.b16 %v64
  %v176 = vunpack.c.h.b16 %v64
  %v177 = vpack.c.b16 %v147, %v145
  %v178 = vpack.c.b16 %v148, %v146
  %v179 = vpack.c.b16 %v151, %v149
  %v180 = vpack.c.b16 %v152, %v150
  %v181 = vpack.c.b16 %v155, %v153
  %v182 = vpack.c.b16 %v156, %v154
  %v183 = vpack.c.b16 %v159, %v157
  %v184 = vpack.c.b16 %v160, %v158
  %v185 = vpack.c.b16 %v163, %v161
  %v186 = vpack.c.b16 %v164, %v162
  %v187 = vpack.c.b16 %v167, %v165
  %v188 = vpack.c.b16 %v168, %v166
  %v189 = vpack.c.b16 %v171, %v169
  %v190 = vpack.c.b16 %v172, %v170
  %v191 = vpack.c.b16 %v175, %v173
  %v192 = vpack.c.b16 %v176, %v174
  %v273 = vunpack.c.l.b16 %v65
  %v274 = vunpack.c.h.b16 %v65
  %v275 = vunpack.c.l.b16 %v66
  %v276 = vunpack.c.h.b16 %v66
  %v277 = vunpack.c.l.b16 %v67
  %v278 = vunpack.c.h.b16 %v67
  %v279 = vunpack.c.l.b16 %v68
  %v280 = vunpack.c.h.b16 %v68
  %v281 = vunpack.c.l.b16 %v69
  %v282 = vunpack.c.h.b16 %v69
  %v283 = vunpack.c.l.b16 %v70
  %v284 = vunpack.c.h.b16 %v70
  %v285 = vunpack.c.l.b16 %v71
  %v286 = vunpack.c.h.b16 %v71
  %v287 = vunpack.c.l.b16 %v72
  %v288 = vunpack.c.h.b16 %v72
  %v289 = vunpack.c.l.b16 %v73
  %v290 = vunpack.c.h.b16 %v73
  %v291 = vunpack.c.l.b16 %v74
  %v292 = vunpack.c.h.b16 %v74
  %v293 = vunpack.c.l.b16 %v75
  %v294 = vunpack.c.h.b16 %v75
  %v295 = vunpack.c.l.b16 %v76
  %v296 = vunpack.c.h.b16 %v76
  %v297 = vunpack.c.l.b16 %v77
  %v298 = vunpack.c.h.b16 %v77
  %v299 = vunpack.c.l.b16 %v78
  %v300 = vunpack.c.h.b16 %v78
  %v301 = vunpack.c.l.b16 %v79
  %v302 = vunpack.c.h.b16 %v79
  %v303 = vunpack.c.l.b16 %v80
  %v304 = vunpack.c.h.b16 %v80
  %v305 = vunpack.c.l.b16 %v81
  %v306 = vunpack.c.h.b16 %v81
  %v307 = vunpack.c.l.b16 %v82
  %v308 = vunpack.c.h.b16 %v82
  %v309 = vunpack.c.l.b16 %v83
  %v310 = vunpack.c.h.b16 %v83
  %v311 = vunpack.c.l.b16 %v84
  %v312 = vunpack.c.h.b16 %v84
  %v313 = vunpack.c.l.b16 %v85
  %v314 = vunpack.c.h.b16 %v85
  %v315 = vunpack.c.l.b16 %v86
  %v316 = vunpack.c.h.b16 %v86
  %v317 = vunpack.c.l.b16 %v87
  %v318 = vunpack.c.h.b16 %v87
  %v319 = vunpack.c.l.b16 %v88
  %v320 = vunpack.c.h.b16 %v88
  %v321 = vunpack.c.l.b16 %v89
  %v322 = vunpack.c.h.b16 %v89
  %v323 = vunpack.c.l.b16 %v90
  %v324 = vunpack.c.h.b16 %v90
  %v325 = vunpack.c.l.b16 %v91
  %v326 = vunpack.c.h.b16 %v91
  %v327 = vunpack.c.l.b16 %v92
  %v328 = vunpack.c.h.b16 %v92
  %v329 = vunpack.c.l.b16 %v93
  %v330 = vunpack.c.h.b16 %v93
  %v331 = vunpack.c.l.b16 %v94
  %v332 = vunpack.c.h.b16 %v94
  %v333 = vunpack.c.l.b16 %v95
  %v334 = vunpack.c.h.b16 %v95
  %v335 = vunpack.c.l.b16 %v96
  %v336 = vunpack.c.h.b16 %v96
  %v337 = vunpack.c.l.b16 %v97
  %v338 = vunpack.c.h.b16 %v97
  %v339 = vunpack.c.l.b16 %v98
  %v340 = vunpack.c.h.b16 %v98
  %v341 = vunpack.c.l.b16 %v99
  %v342 = vunpack.c.h.b16 %v99
  %v343 = vunpack.c.l.b16 %v100
  %v344 = vunpack.c.h.b16 %v100
  %v345 = vunpack.c.l.b16 %v101
  %v346 = vunpack.c.h.b16 %v101
  %v347 = vunpack.c.l.b16 %v102
  %v348 = vunpack.c.h.b16 %v102
  %v349 = vunpack.c.l.b16 %v103
  %v350 = vunpack.c.h.b16 %v103
  %v351 = vunpack.c.l.b16 %v104
  %v352 = vunpack.c.h.b16 %v104
  %v353 = vunpack.c.l.b16 %v105
  %v354 = vunpack.c.h.b16 %v105
  %v355 = vunpack.c.l.b16 %v106
  %v356 = vunpack.c.h.b16 %v106
  %v357 = vunpack.c.l.b16 %v107
  %v358 = vunpack.c.h.b16 %v107
  %v359 = vunpack.c.l.b16 %v108
  %v360 = vunpack.c.h.b16 %v108
  %v361 = vunpack.c.l.b16 %v109
  %v362 = vunpack.c.h.b16 %v109
  %v363 = vunpack.c.l.b16 %v110
  %v364 = vunpack.c.h.b16 %v110
  %v365 = vunpack.c.l.b16 %v111
  %v366 = vunpack.c.h.b16 %v111
  %v367 = vunpack.c.l.b16 %v112
  %v368 = vunpack.c.h.b16 %v112
  %v369 = vunpack.c.l.b16 %v113
  %v370 = vunpack.c.h.b16 %v113
  %v371 = vunpack.c.l.b16 %v114
  %v372 = vunpack.c.h.b16 %v114
  %v373 = vunpack.c.l.b16 %v115
  %v374 = vunpack.c.h.b16 %v115
  %v375 = vunpack.c.l.b16 %v116
  %v376 = vunpack.c.h.b16 %v116
  %v377 = vunpack.c.l.b16 %v117
  %v378 = vunpack.c.h.b16 %v117
  %v379 = vunpack.c.l.b16 %v118
  %v380 = vunpack.c.h.b16 %v118
  %v381 = vunpack.c.l.b16 %v119
  %v382 = vunpack.c.h.b16 %v119
  %v383 = vunpack.c.l.b16 %v120
  %v384 = vunpack.c.h.b16 %v120
  %v385 = vunpack.c.l.b16 %v121
  %v386 = vunpack.c.h.b16 %v121
  %v387 = vunpack.c.l.b16 %v122
  %v388 = vunpack.c.h.b16 %v122
  %v389 = vunpack.c.l.b16 %v123
  %v390 = vunpack.c.h.b16 %v123
  %v391 = vunpack.c.l.b16 %v124
  %v392 = vunpack.c.h.b16 %v124
  %v393 = vunpack.c.l.b16 %v125
  %v394 = vunpack.c.h.b16 %v125
  %v395 = vunpack.c.l.b16 %v126
  %v396 = vunpack.c.h.b16 %v126
  %v397 = vunpack.c.l.b16 %v127
  %v398 = vunpack.c.h.b16 %v127
  %v399 = vunpack.c.l.b16 %v128
  %v400 = vunpack.c.h.b16 %v128
  %v401 = vpack.c.b16 %v277, %v273
  %v402 = vpack.c.b16 %v278, %v274
  %v403 = vpack.c.b16 %v279, %v275
  %v404 = vpack.c.b16 %v280, %v276
  %v405 = vpack.c.b16 %v285, %v281
  %v406 = vpack.c.b16 %v286, %v282
  %v407 = vpack.c.b16 %v287, %v283
  %v408 = vpack.c.b16 %v288, %v284
  %v409 = vpack.c.b16 %v293, %v289
  %v410 = vpack.c.b16 %v294, %v290
  %v411 = vpack.c.b16 %v295, %v291
  %v412 = vpack.c.b16 %v296, %v292
  %v413 = vpack.c.b16 %v301, %v297
  %v414 = vpack.c.b16 %v302, %v298
  %v415 = vpack.c.b16 %v303, %v299
  %v416 = vpack.c.b16 %v304, %v300
  %v417 = vpack.c.b16 %v309, %v305
  %v418 = vpack.c.b16 %v310, %v306
  %v419 = vpack.c.b16 %v311, %v307
  %v420 = vpack.c.b16 %v312, %v308
  %v421 = vpack.c.b16 %v317, %v313
  %v422 = vpack.c.b16 %v318, %v314
  %v423 = vpack.c.b16 %v319, %v315
  %v424 = vpack.c.b16 %v320, %v316
  %v425 = vpack.c.b16 %v325, %v321
  %v426 = vpack.c.b16 %v326, %v322
  %v427 = vpack.c.b16 %v327, %v323
  %v428 = vpack.c.b16 %v328, %v324
  %v429 = vpack.c.b16 %v333, %v329
  %v430 = vpack.c.b16 %v334, %v330
  %v431 = vpack.c.b16 %v335, %v331
  %v432 = vpack.c.b16 %v336, %v332
  %v433 = vpack.c.b16 %v341, %v337
  %v434 = vpack.c.b16 %v342, %v338
  %v435 = vpack.c.b16 %v343, %v339
  %v436 = vpack.c.b16 %v344, %v340
  %v437 = vpack.c.b16 %v349, %v345
  %v438 = vpack.c.b16 %v350, %v346
  %v439 = vpack.c.b16 %v351, %v347
  %v440 = vpack.c.b16 %v352, %v348
  %v441 = vpack.c.b16 %v357, %v353
  %v442 = vpack.c.b16 %v358, %v354
  %v443 = vpack.c.b16 %v359, %v355
  %v444 = vpack.c.b16 %v360, %v356
  %v445 = vpack.c.b16 %v365, %v361
  %v446 = vpack.c.b16 %v366, %v362
  %v447 = vpack.c.b16 %v367, %v363
  %v448 = vpack.c.b16 %v368, %v364
  %v449 = vpack.c.b16 %v373, %v369
  %v450 = vpack.c.b16 %v374, %v370
  %v451 = vpack.c.b16 %v375, %v371
  %v452 = vpack.c.b16 %v376, %v372
  %v453 = vpack.c.b16 %v381, %v377
  %v454 = vpack.c.b16 %v382, %v378
  %v455 = vpack.c.b16 %v383, %v379
  %v456 = vpack.c.b16 %v384, %v380
  %v457 = vpack.c.b16 %v389, %v385
  %v458 = vpack.c.b16 %v390, %v386
  %v459 = vpack.c.b16 %v391, %v387
  %v460 = vpack.c.b16 %v392, %v388
  %v461 = vpack.c.b16 %v397, %v393
  %v462 = vpack.c.b16 %v398, %v394
  %v463 = vpack.c.b16 %v399, %v395
  %v464 = vpack.c.b16 %v400, %v396
  %529 = vmatprep.subr.bf16.mxu0 %v430
  %530 = vmatpush1.bf16.msra.mxu0 %v429
  %531 = vmatprep.subr.bf16.mxu0 %v426
  %532 = vmatpush1.bf16.msra.mxu0 %v425
  %533 = vmatprep.subr.bf16.mxu0 %v422
  %534 = vmatpush1.bf16.msra.mxu0 %v421
  %535 = vmatprep.subr.bf16.mxu0 %v418
  %536 = vmatpush1.bf16.msra.mxu0 %v417
  %537 = vmatprep.subr.bf16.mxu0 %v414
  %538 = vmatpush1.bf16.msra.mxu0 %v413
  %539 = vmatprep.subr.bf16.mxu0 %v410
  %540 = vmatpush1.bf16.msra.mxu0 %v409
  %541 = vmatprep.subr.bf16.mxu0 %v406
  %542 = vmatpush1.bf16.msra.mxu0 %v405
  %543 = vmatprep.subr.bf16.mxu0 %v402
  %544 = vmatpush1.bf16.msra.mxu0 %v401
  %545 = vmatprep.subr.bf16.mxu0 %v462
  %546 = vmatpush2.bf16.msra.mxu0 %v461
  %547 = vmatprep.subr.bf16.mxu0 %v458
  %548 = vmatpush2.bf16.msra.mxu0 %v457
  %549 = vmatprep.subr.bf16.mxu0 %v454
  %550 = vmatpush2.bf16.msra.mxu0 %v453
  %551 = vmatprep.subr.bf16.mxu0 %v450
  %552 = vmatpush2.bf16.msra.mxu0 %v449
  %553 = vmatprep.subr.bf16.mxu0 %v446
  %554 = vmatpush2.bf16.msra.mxu0 %v445
  %555 = vmatprep.subr.bf16.mxu0 %v442
  %556 = vmatpush2.bf16.msra.mxu0 %v441
  %557 = vmatprep.subr.bf16.mxu0 %v438
  %558 = vmatpush2.bf16.msra.mxu0 %v437
  %559 = vmatprep.subr.bf16.mxu0 %v434
  %560 = vmatpush2.bf16.msra.mxu0 %v433
  %561 = vmatprep.mubr.bf16.mxu0 %v178
  %562 = vmatmul.mubr.bf16.gmra.mxu0 %v177
  %v563 = vpop.f32.mrf.mxu0
  %v564 = vadd.f32 0.0, %v563
  %v565 = vpop.f32.mrf.mxu0
  %v566 = vadd.f32 0.0, %v565
  %v567 = vpop.f32.mrf.mxu0
  %v568 = vadd.f32 0.0, %v567
  %v569 = vpop.f32.mrf.mxu0
  %v570 = vadd.f32 0.0, %v569
  %571 = vmatprep.mubr.bf16.mxu0 %v180
  %572 = vmatmul.mubr.bf16.gmra.mxu0 %v179
  %v573 = vpop.f32.mrf.mxu0
  %v574 = vadd.f32 0.0, %v573
  %v575 = vpop.f32.mrf.mxu0
  %v576 = vadd.f32 0.0, %v575
  %v577 = vpop.f32.mrf.mxu0
  %v578 = vadd.f32 0.0, %v577
  %v579 = vpop.f32.mrf.mxu0
  %v580 = vadd.f32 0.0, %v579
  %581 = vmatprep.mubr.bf16.mxu0 %v182
  %582 = vmatmul.mubr.bf16.gmra.mxu0 %v181
  %v583 = vpop.f32.mrf.mxu0
  %v584 = vadd.f32 0.0, %v583
  %v585 = vpop.f32.mrf.mxu0
  %v586 = vadd.f32 0.0, %v585
  %v587 = vpop.f32.mrf.mxu0
  %v588 = vadd.f32 0.0, %v587
  %v589 = vpop.f32.mrf.mxu0
  %v590 = vadd.f32 0.0, %v589
  %591 = vmatprep.mubr.bf16.mxu0 %v184
  %592 = vmatmul.mubr.bf16.gmra.mxu0 %v183
  %v593 = vpop.f32.mrf.mxu0
  %v594 = vadd.f32 0.0, %v593
  %v595 = vpop.f32.mrf.mxu0
  %v596 = vadd.f32 0.0, %v595
  %v597 = vpop.f32.mrf.mxu0
  %v598 = vadd.f32 0.0, %v597
  %v599 = vpop.f32.mrf.mxu0
  %v600 = vadd.f32 0.0, %v599
  %601 = vmatprep.mubr.bf16.mxu0 %v186
  %602 = vmatmul.mubr.bf16.gmra.mxu0 %v185
  %v603 = vpop.f32.mrf.mxu0
  %v604 = vadd.f32 0.0, %v603
  %v605 = vpop.f32.mrf.mxu0
  %v606 = vadd.f32 0.0, %v605
  %v607 = vpop.f32.mrf.mxu0
  %v608 = vadd.f32 0.0, %v607
  %v609 = vpop.f32.mrf.mxu0
  %v610 = vadd.f32 0.0, %v609
  %611 = vmatprep.mubr.bf16.mxu0 %v188
  %612 = vmatmul.mubr.bf16.gmra.mxu0 %v187
  %v613 = vpop.f32.mrf.mxu0
  %v614 = vadd.f32 0.0, %v613
  %v615 = vpop.f32.mrf.mxu0
  %v616 = vadd.f32 0.0, %v615
  %v617 = vpop.f32.mrf.mxu0
  %v618 = vadd.f32 0.0, %v617
  %v619 = vpop.f32.mrf.mxu0
  %v620 = vadd.f32 0.0, %v619
  %621 = vmatprep.mubr.bf16.mxu0 %v190
  %622 = vmatmul.mubr.bf16.gmra.mxu0 %v189
  %v623 = vpop.f32.mrf.mxu0
  %v624 = vadd.f32 0.0, %v623
  %v625 = vpop.f32.mrf.mxu0
  %v626 = vadd.f32 0.0, %v625
  %v627 = vpop.f32.mrf.mxu0
  %v628 = vadd.f32 0.0, %v627
  %v629 = vpop.f32.mrf.mxu0
  %v630 = vadd.f32 0.0, %v629
  %631 = vmatprep.mubr.bf16.mxu0 %v192
  %632 = vmatmul.mubr.bf16.gmra.mxu0 %v191
  %v633 = vpop.f32.mrf.mxu0
  %v634 = vadd.f32 0.0, %v633
  %v635 = vpop.f32.mrf.mxu0
  %v636 = vadd.f32 0.0, %v635
  %v637 = vpop.f32.mrf.mxu0
  %v638 = vadd.f32 0.0, %v637
  %v639 = vpop.f32.mrf.mxu0
  %v640 = vadd.f32 0.0, %v639
  %641 = vdwg.mxu0
  %642 = vmatprep.subr.bf16.mxu0 %v432
  %643 = vmatpush1.bf16.msra.mxu0 %v431
  %644 = vmatprep.subr.bf16.mxu0 %v428
  %645 = vmatpush1.bf16.msra.mxu0 %v427
  %646 = vmatprep.subr.bf16.mxu0 %v424
  %647 = vmatpush1.bf16.msra.mxu0 %v423
  %648 = vmatprep.subr.bf16.mxu0 %v420
  %649 = vmatpush1.bf16.msra.mxu0 %v419
  %650 = vmatprep.subr.bf16.mxu0 %v416
  %651 = vmatpush1.bf16.msra.mxu0 %v415
  %652 = vmatprep.subr.bf16.mxu0 %v412
  %653 = vmatpush1.bf16.msra.mxu0 %v411
  %654 = vmatprep.subr.bf16.mxu0 %v408
  %655 = vmatpush1.bf16.msra.mxu0 %v407
  %656 = vmatprep.subr.bf16.mxu0 %v404
  %657 = vmatpush1.bf16.msra.mxu0 %v403
  %658 = vmatprep.subr.bf16.mxu0 %v464
  %659 = vmatpush2.bf16.msra.mxu0 %v463
  %660 = vmatprep.subr.bf16.mxu0 %v460
  %661 = vmatpush2.bf16.msra.mxu0 %v459
  %662 = vmatprep.subr.bf16.mxu0 %v456
  %663 = vmatpush2.bf16.msra.mxu0 %v455
  %664 = vmatprep.subr.bf16.mxu0 %v452
  %665 = vmatpush2.bf16.msra.mxu0 %v451
  %666 = vmatprep.subr.bf16.mxu0 %v448
  %667 = vmatpush2.bf16.msra.mxu0 %v447
  %668 = vmatprep.subr.bf16.mxu0 %v444
  %669 = vmatpush2.bf16.msra.mxu0 %v443
  %670 = vmatprep.subr.bf16.mxu0 %v440
  %671 = vmatpush2.bf16.msra.mxu0 %v439
  %672 = vmatprep.subr.bf16.mxu0 %v436
  %673 = vmatpush2.bf16.msra.mxu0 %v435
  %674 = vmatprep.mubr.bf16.mxu0 %v178
  %675 = vmatmul.mubr.bf16.gmra.mxu0 %v177
  %v676 = vpop.f32.mrf.mxu0
  %v677 = vadd.f32 0.0, %v676
  %v678 = vpop.f32.mrf.mxu0
  %v679 = vadd.f32 0.0, %v678
  %v680 = vpop.f32.mrf.mxu0
  %v681 = vadd.f32 0.0, %v680
  %v682 = vpop.f32.mrf.mxu0
  %v683 = vadd.f32 0.0, %v682
  %684 = vmatprep.mubr.bf16.mxu0 %v180
  %685 = vmatmul.mubr.bf16.gmra.mxu0 %v179
  %v686 = vpop.f32.mrf.mxu0
  %v687 = vadd.f32 0.0, %v686
  %v688 = vpop.f32.mrf.mxu0
  %v689 = vadd.f32 0.0, %v688
  %v690 = vpop.f32.mrf.mxu0
  %v691 = vadd.f32 0.0, %v690
  %v692 = vpop.f32.mrf.mxu0
  %v693 = vadd.f32 0.0, %v692
  %694 = vmatprep.mubr.bf16.mxu0 %v182
  %695 = vmatmul.mubr.bf16.gmra.mxu0 %v181
  %v696 = vpop.f32.mrf.mxu0
  %v697 = vadd.f32 0.0, %v696
  %v698 = vpop.f32.mrf.mxu0
  %v699 = vadd.f32 0.0, %v698
  %v700 = vpop.f32.mrf.mxu0
  %v701 = vadd.f32 0.0, %v700
  %v702 = vpop.f32.mrf.mxu0
  %v703 = vadd.f32 0.0, %v702
  %704 = vmatprep.mubr.bf16.mxu0 %v184
  %705 = vmatmul.mubr.bf16.gmra.mxu0 %v183
  %v706 = vpop.f32.mrf.mxu0
  %v707 = vadd.f32 0.0, %v706
  %v708 = vpop.f32.mrf.mxu0
  %v709 = vadd.f32 0.0, %v708
  %v710 = vpop.f32.mrf.mxu0
  %v711 = vadd.f32 0.0, %v710
  %v712 = vpop.f32.mrf.mxu0
  %v713 = vadd.f32 0.0, %v712
  %714 = vmatprep.mubr.bf16.mxu0 %v186
  %715 = vmatmul.mubr.bf16.gmra.mxu0 %v185
  %v716 = vpop.f32.mrf.mxu0
  %v717 = vadd.f32 0.0, %v716
  %v718 = vpop.f32.mrf.mxu0
  %v719 = vadd.f32 0.0, %v718
  %v720 = vpop.f32.mrf.mxu0
  %v721 = vadd.f32 0.0, %v720
  %v722 = vpop.f32.mrf.mxu0
  %v723 = vadd.f32 0.0, %v722
  %724 = vmatprep.mubr.bf16.mxu0 %v188
  %725 = vmatmul.mubr.bf16.gmra.mxu0 %v187
  %v726 = vpop.f32.mrf.mxu0
  %v727 = vadd.f32 0.0, %v726
  %v728 = vpop.f32.mrf.mxu0
  %v729 = vadd.f32 0.0, %v728
  %v730 = vpop.f32.mrf.mxu0
  %v731 = vadd.f32 0.0, %v730
  %v732 = vpop.f32.mrf.mxu0
  %v733 = vadd.f32 0.0, %v732
  %734 = vmatprep.mubr.bf16.mxu0 %v190
  %735 = vmatmul.mubr.bf16.gmra.mxu0 %v189
  %v736 = vpop.f32.mrf.mxu0
  %v737 = vadd.f32 0.0, %v736
  %v738 = vpop.f32.mrf.mxu0
  %v739 = vadd.f32 0.0, %v738
  %v740 = vpop.f32.mrf.mxu0
  %v741 = vadd.f32 0.0, %v740
  %v742 = vpop.f32.mrf.mxu0
  %v743 = vadd.f32 0.0, %v742
  %744 = vmatprep.mubr.bf16.mxu0 %v192
  %745 = vmatmul.mubr.bf16.gmra.mxu0 %v191
  %v746 = vpop.f32.mrf.mxu0
  %v747 = vadd.f32 0.0, %v746
  %v748 = vpop.f32.mrf.mxu0
  %v749 = vadd.f32 0.0, %v748
  %v750 = vpop.f32.mrf.mxu0
  %v751 = vadd.f32 0.0, %v750
  %v752 = vpop.f32.mrf.mxu0
  %v753 = vadd.f32 0.0, %v752
  %754 = vdwg.mxu0
  %v755 = vmul.f32 %v564, %v564
  %v756 = vmul.f32 %v566, %v566
  %v757 = vmul.f32 %v568, %v568
  %v758 = vmul.f32 %v570, %v570
  %v759 = vmul.f32 %v574, %v574
  %v760 = vmul.f32 %v576, %v576
  %v761 = vmul.f32 %v578, %v578
  %v762 = vmul.f32 %v580, %v580
  %v763 = vmul.f32 %v584, %v584
  %v764 = vmul.f32 %v586, %v586
  %v765 = vmul.f32 %v588, %v588
  %v766 = vmul.f32 %v590, %v590
  %v767 = vmul.f32 %v594, %v594
  %v768 = vmul.f32 %v596, %v596
  %v769 = vmul.f32 %v598, %v598
  %v770 = vmul.f32 %v600, %v600
  %v771 = vmul.f32 %v604, %v604
  %v772 = vmul.f32 %v606, %v606
  %v773 = vmul.f32 %v608, %v608
  %v774 = vmul.f32 %v610, %v610
  %v775 = vmul.f32 %v614, %v614
  %v776 = vmul.f32 %v616, %v616
  %v777 = vmul.f32 %v618, %v618
  %v778 = vmul.f32 %v620, %v620
  %v779 = vmul.f32 %v624, %v624
  %v780 = vmul.f32 %v626, %v626
  %v781 = vmul.f32 %v628, %v628
  %v782 = vmul.f32 %v630, %v630
  %v783 = vmul.f32 %v634, %v634
  %v784 = vmul.f32 %v636, %v636
  %v785 = vmul.f32 %v638, %v638
  %v786 = vmul.f32 %v640, %v640
  %v787 = vmul.f32 %v677, %v677
  %v788 = vmul.f32 %v679, %v679
  %v789 = vmul.f32 %v681, %v681
  %v790 = vmul.f32 %v683, %v683
  %v791 = vmul.f32 %v687, %v687
  %v792 = vmul.f32 %v689, %v689
  %v793 = vmul.f32 %v691, %v691
  %v794 = vmul.f32 %v693, %v693
  %v795 = vmul.f32 %v697, %v697
  %v796 = vmul.f32 %v699, %v699
  %v797 = vmul.f32 %v701, %v701
  %v798 = vmul.f32 %v703, %v703
  %v799 = vmul.f32 %v707, %v707
  %v800 = vmul.f32 %v709, %v709
  %v801 = vmul.f32 %v711, %v711
  %v802 = vmul.f32 %v713, %v713
  %v803 = vmul.f32 %v717, %v717
  %v804 = vmul.f32 %v719, %v719
  %v805 = vmul.f32 %v721, %v721
  %v806 = vmul.f32 %v723, %v723
  %v807 = vmul.f32 %v727, %v727
  %v808 = vmul.f32 %v729, %v729
  %v809 = vmul.f32 %v731, %v731
  %v810 = vmul.f32 %v733, %v733
  %v811 = vmul.f32 %v737, %v737
  %v812 = vmul.f32 %v739, %v739
  %v813 = vmul.f32 %v741, %v741
  %v814 = vmul.f32 %v743, %v743
  %v815 = vmul.f32 %v747, %v747
  %v816 = vmul.f32 %v749, %v749
  %v817 = vmul.f32 %v751, %v751
  %v818 = vmul.f32 %v753, %v753
  %v819 = vadd.f32 %v755, %v787
  %v820 = vadd.f32 %v756, %v788
  %v821 = vadd.f32 %v757, %v789
  %v822 = vadd.f32 %v758, %v790
  %v823 = vadd.f32 %v759, %v791
  %v824 = vadd.f32 %v760, %v792
  %v825 = vadd.f32 %v761, %v793
  %v826 = vadd.f32 %v762, %v794
  %v827 = vadd.f32 %v763, %v795
  %v828 = vadd.f32 %v764, %v796
  %v829 = vadd.f32 %v765, %v797
  %v830 = vadd.f32 %v766, %v798
  %v831 = vadd.f32 %v767, %v799
  %v832 = vadd.f32 %v768, %v800
  %v833 = vadd.f32 %v769, %v801
  %v834 = vadd.f32 %v770, %v802
  %v835 = vadd.f32 %v771, %v803
  %v836 = vadd.f32 %v772, %v804
  %v837 = vadd.f32 %v773, %v805
  %v838 = vadd.f32 %v774, %v806
  %v839 = vadd.f32 %v775, %v807
  %v840 = vadd.f32 %v776, %v808
  %v841 = vadd.f32 %v777, %v809
  %v842 = vadd.f32 %v778, %v810
  %v843 = vadd.f32 %v779, %v811
  %v844 = vadd.f32 %v780, %v812
  %v845 = vadd.f32 %v781, %v813
  %v846 = vadd.f32 %v782, %v814
  %v847 = vadd.f32 %v783, %v815
  %v848 = vadd.f32 %v784, %v816
  %v849 = vadd.f32 %v785, %v817
  %v850 = vadd.f32 %v786, %v818
  %v851 = vrsqrt.pop %v819
  %v852 = vmul.f32 %v819, %v851
  %vm853 = vcmp.eq.f32.partialorder %v819, inf
  %v854 = vsel %vm853, %v819, %v852
  %vm855 = vcmp.eq.f32.partialorder %v819, 0.0
  %v856 = vand.u32 %v819, 2147483648
  %v857 = vsel %vm855, %v856, %v854
  %v858 = vrsqrt.pop %v820
  %v859 = vmul.f32 %v820, %v858
  %vm860 = vcmp.eq.f32.partialorder %v820, inf
  %v861 = vsel %vm860, %v820, %v859
  %vm862 = vcmp.eq.f32.partialorder %v820, 0.0
  %v863 = vand.u32 %v820, 2147483648
  %v864 = vsel %vm862, %v863, %v861
  %v865 = vrsqrt.pop %v821
  %v866 = vmul.f32 %v821, %v865
  %vm867 = vcmp.eq.f32.partialorder %v821, inf
  %v868 = vsel %vm867, %v821, %v866
  %vm869 = vcmp.eq.f32.partialorder %v821, 0.0
  %v870 = vand.u32 %v821, 2147483648
  %v871 = vsel %vm869, %v870, %v868
  %v872 = vrsqrt.pop %v822
  %v873 = vmul.f32 %v822, %v872
  %vm874 = vcmp.eq.f32.partialorder %v822, inf
  %v875 = vsel %vm874, %v822, %v873
  %vm876 = vcmp.eq.f32.partialorder %v822, 0.0
  %v877 = vand.u32 %v822, 2147483648
  %v878 = vsel %vm876, %v877, %v875
  %v879 = vrsqrt.pop %v823
  %v880 = vmul.f32 %v823, %v879
  %vm881 = vcmp.eq.f32.partialorder %v823, inf
  %v882 = vsel %vm881, %v823, %v880
  %vm883 = vcmp.eq.f32.partialorder %v823, 0.0
  %v884 = vand.u32 %v823, 2147483648
  %v885 = vsel %vm883, %v884, %v882
  %v886 = vrsqrt.pop %v824
  %v887 = vmul.f32 %v824, %v886
  %vm888 = vcmp.eq.f32.partialorder %v824, inf
  %v889 = vsel %vm888, %v824, %v887
  %vm890 = vcmp.eq.f32.partialorder %v824, 0.0
  %v891 = vand.u32 %v824, 2147483648
  %v892 = vsel %vm890, %v891, %v889
  %v893 = vrsqrt.pop %v825
  %v894 = vmul.f32 %v825, %v893
  %vm895 = vcmp.eq.f32.partialorder %v825, inf
  %v896 = vsel %vm895, %v825, %v894
  %vm897 = vcmp.eq.f32.partialorder %v825, 0.0
  %v898 = vand.u32 %v825, 2147483648
  %v899 = vsel %vm897, %v898, %v896
  %v900 = vrsqrt.pop %v826
  %v901 = vmul.f32 %v826, %v900
  %vm902 = vcmp.eq.f32.partialorder %v826, inf
  %v903 = vsel %vm902, %v826, %v901
  %vm904 = vcmp.eq.f32.partialorder %v826, 0.0
  %v905 = vand.u32 %v826, 2147483648
  %v906 = vsel %vm904, %v905, %v903
  %v907 = vrsqrt.pop %v827
  %v908 = vmul.f32 %v827, %v907
  %vm909 = vcmp.eq.f32.partialorder %v827, inf
  %v910 = vsel %vm909, %v827, %v908
  %vm911 = vcmp.eq.f32.partialorder %v827, 0.0
  %v912 = vand.u32 %v827, 2147483648
  %v913 = vsel %vm911, %v912, %v910
  %v914 = vrsqrt.pop %v828
  %v915 = vmul.f32 %v828, %v914
  %vm916 = vcmp.eq.f32.partialorder %v828, inf
  %v917 = vsel %vm916, %v828, %v915
  %vm918 = vcmp.eq.f32.partialorder %v828, 0.0
  %v919 = vand.u32 %v828, 2147483648
  %v920 = vsel %vm918, %v919, %v917
  %v921 = vrsqrt.pop %v829
  %v922 = vmul.f32 %v829, %v921
  %vm923 = vcmp.eq.f32.partialorder %v829, inf
  %v924 = vsel %vm923, %v829, %v922
  %vm925 = vcmp.eq.f32.partialorder %v829, 0.0
  %v926 = vand.u32 %v829, 2147483648
  %v927 = vsel %vm925, %v926, %v924
  %v928 = vrsqrt.pop %v830
  %v929 = vmul.f32 %v830, %v928
  %vm930 = vcmp.eq.f32.partialorder %v830, inf
  %v931 = vsel %vm930, %v830, %v929
  %vm932 = vcmp.eq.f32.partialorder %v830, 0.0
  %v933 = vand.u32 %v830, 2147483648
  %v934 = vsel %vm932, %v933, %v931
  %v935 = vrsqrt.pop %v831
  %v936 = vmul.f32 %v831, %v935
  %vm937 = vcmp.eq.f32.partialorder %v831, inf
  %v938 = vsel %vm937, %v831, %v936
  %vm939 = vcmp.eq.f32.partialorder %v831, 0.0
  %v940 = vand.u32 %v831, 2147483648
  %v941 = vsel %vm939, %v940, %v938
  %v942 = vrsqrt.pop %v832
  %v943 = vmul.f32 %v832, %v942
  %vm944 = vcmp.eq.f32.partialorder %v832, inf
  %v945 = vsel %vm944, %v832, %v943
  %vm946 = vcmp.eq.f32.partialorder %v832, 0.0
  %v947 = vand.u32 %v832, 2147483648
  %v948 = vsel %vm946, %v947, %v945
  %v949 = vrsqrt.pop %v833
  %v950 = vmul.f32 %v833, %v949
  %vm951 = vcmp.eq.f32.partialorder %v833, inf
  %v952 = vsel %vm951, %v833, %v950
  %vm953 = vcmp.eq.f32.partialorder %v833, 0.0
  %v954 = vand.u32 %v833, 2147483648
  %v955 = vsel %vm953, %v954, %v952
  %v956 = vrsqrt.pop %v834
  %v957 = vmul.f32 %v834, %v956
  %vm958 = vcmp.eq.f32.partialorder %v834, inf
  %v959 = vsel %vm958, %v834, %v957
  %vm960 = vcmp.eq.f32.partialorder %v834, 0.0
  %v961 = vand.u32 %v834, 2147483648
  %v962 = vsel %vm960, %v961, %v959
  %v963 = vrsqrt.pop %v835
  %v964 = vmul.f32 %v835, %v963
  %vm965 = vcmp.eq.f32.partialorder %v835, inf
  %v966 = vsel %vm965, %v835, %v964
  %vm967 = vcmp.eq.f32.partialorder %v835, 0.0
  %v968 = vand.u32 %v835, 2147483648
  %v969 = vsel %vm967, %v968, %v966
  %v970 = vrsqrt.pop %v836
  %v971 = vmul.f32 %v836, %v970
  %vm972 = vcmp.eq.f32.partialorder %v836, inf
  %v973 = vsel %vm972, %v836, %v971
  %vm974 = vcmp.eq.f32.partialorder %v836, 0.0
  %v975 = vand.u32 %v836, 2147483648
  %v976 = vsel %vm974, %v975, %v973
  %v977 = vrsqrt.pop %v837
  %v978 = vmul.f32 %v837, %v977
  %vm979 = vcmp.eq.f32.partialorder %v837, inf
  %v980 = vsel %vm979, %v837, %v978
  %vm981 = vcmp.eq.f32.partialorder %v837, 0.0
  %v982 = vand.u32 %v837, 2147483648
  %v983 = vsel %vm981, %v982, %v980
  %v984 = vrsqrt.pop %v838
  %v985 = vmul.f32 %v838, %v984
  %vm986 = vcmp.eq.f32.partialorder %v838, inf
  %v987 = vsel %vm986, %v838, %v985
  %vm988 = vcmp.eq.f32.partialorder %v838, 0.0
  %v989 = vand.u32 %v838, 2147483648
  %v990 = vsel %vm988, %v989, %v987
  %v991 = vrsqrt.pop %v839
  %v992 = vmul.f32 %v839, %v991
  %vm993 = vcmp.eq.f32.partialorder %v839, inf
  %v994 = vsel %vm993, %v839, %v992
  %vm995 = vcmp.eq.f32.partialorder %v839, 0.0
  %v996 = vand.u32 %v839, 2147483648
  %v997 = vsel %vm995, %v996, %v994
  %v998 = vrsqrt.pop %v840
  %v999 = vmul.f32 %v840, %v998
  %vm1000 = vcmp.eq.f32.partialorder %v840, inf
  %v1001 = vsel %vm1000, %v840, %v999
  %vm1002 = vcmp.eq.f32.partialorder %v840, 0.0
  %v1003 = vand.u32 %v840, 2147483648
  %v1004 = vsel %vm1002, %v1003, %v1001
  %v1005 = vrsqrt.pop %v841
  %v1006 = vmul.f32 %v841, %v1005
  %vm1007 = vcmp.eq.f32.partialorder %v841, inf
  %v1008 = vsel %vm1007, %v841, %v1006
  %vm1009 = vcmp.eq.f32.partialorder %v841, 0.0
  %v1010 = vand.u32 %v841, 2147483648
  %v1011 = vsel %vm1009, %v1010, %v1008
  %v1012 = vrsqrt.pop %v842
  %v1013 = vmul.f32 %v842, %v1012
  %vm1014 = vcmp.eq.f32.partialorder %v842, inf
  %v1015 = vsel %vm1014, %v842, %v1013
  %vm1016 = vcmp.eq.f32.partialorder %v842, 0.0
  %v1017 = vand.u32 %v842, 2147483648
  %v1018 = vsel %vm1016, %v1017, %v1015
  %v1019 = vrsqrt.pop %v843
  %v1020 = vmul.f32 %v843, %v1019
  %vm1021 = vcmp.eq.f32.partialorder %v843, inf
  %v1022 = vsel %vm1021, %v843, %v1020
  %vm1023 = vcmp.eq.f32.partialorder %v843, 0.0
  %v1024 = vand.u32 %v843, 2147483648
  %v1025 = vsel %vm1023, %v1024, %v1022
  %v1026 = vrsqrt.pop %v844
  %v1027 = vmul.f32 %v844, %v1026
  %vm1028 = vcmp.eq.f32.partialorder %v844, inf
  %v1029 = vsel %vm1028, %v844, %v1027
  %vm1030 = vcmp.eq.f32.partialorder %v844, 0.0
  %v1031 = vand.u32 %v844, 2147483648
  %v1032 = vsel %vm1030, %v1031, %v1029
  %v1033 = vrsqrt.pop %v845
  %v1034 = vmul.f32 %v845, %v1033
  %vm1035 = vcmp.eq.f32.partialorder %v845, inf
  %v1036 = vsel %vm1035, %v845, %v1034
  %vm1037 = vcmp.eq.f32.partialorder %v845, 0.0
  %v1038 = vand.u32 %v845, 2147483648
  %v1039 = vsel %vm1037, %v1038, %v1036
  %v1040 = vrsqrt.pop %v846
  %v1041 = vmul.f32 %v846, %v1040
  %vm1042 = vcmp.eq.f32.partialorder %v846, inf
  %v1043 = vsel %vm1042, %v846, %v1041
  %vm1044 = vcmp.eq.f32.partialorder %v846, 0.0
  %v1045 = vand.u32 %v846, 2147483648
  %v1046 = vsel %vm1044, %v1045, %v1043
  %v1047 = vrsqrt.pop %v847
  %v1048 = vmul.f32 %v847, %v1047
  %vm1049 = vcmp.eq.f32.partialorder %v847, inf
  %v1050 = vsel %vm1049, %v847, %v1048
  %vm1051 = vcmp.eq.f32.partialorder %v847, 0.0
  %v1052 = vand.u32 %v847, 2147483648
  %v1053 = vsel %vm1051, %v1052, %v1050
  %v1054 = vrsqrt.pop %v848
  %v1055 = vmul.f32 %v848, %v1054
  %vm1056 = vcmp.eq.f32.partialorder %v848, inf
  %v1057 = vsel %vm1056, %v848, %v1055
  %vm1058 = vcmp.eq.f32.partialorder %v848, 0.0
  %v1059 = vand.u32 %v848, 2147483648
  %v1060 = vsel %vm1058, %v1059, %v1057
  %v1061 = vrsqrt.pop %v849
  %v1062 = vmul.f32 %v849, %v1061
  %vm1063 = vcmp.eq.f32.partialorder %v849, inf
  %v1064 = vsel %vm1063, %v849, %v1062
  %vm1065 = vcmp.eq.f32.partialorder %v849, 0.0
  %v1066 = vand.u32 %v849, 2147483648
  %v1067 = vsel %vm1065, %v1066, %v1064
  %v1068 = vrsqrt.pop %v850
  %v1069 = vmul.f32 %v850, %v1068
  %vm1070 = vcmp.eq.f32.partialorder %v850, inf
  %v1071 = vsel %vm1070, %v850, %v1069
  %vm1072 = vcmp.eq.f32.partialorder %v850, 0.0
  %v1073 = vand.u32 %v850, 2147483648
  %v1074 = vsel %vm1072, %v1073, %v1071
  %v1075 = vsub.f32 %v969, %v857
  %v1076 = vsub.f32 %v976, %v864
  %v1077 = vsub.f32 %v983, %v871
  %v1078 = vsub.f32 %v990, %v878
  %v1079 = vsub.f32 %v997, %v885
  %v1080 = vsub.f32 %v1004, %v892
  %v1081 = vsub.f32 %v1011, %v899
  %v1082 = vsub.f32 %v1018, %v906
  %v1083 = vsub.f32 %v1025, %v913
  %v1084 = vsub.f32 %v1032, %v920
  %v1085 = vsub.f32 %v1039, %v927
  %v1086 = vsub.f32 %v1046, %v934
  %v1087 = vsub.f32 %v1053, %v941
  %v1088 = vsub.f32 %v1060, %v948
  %v1089 = vsub.f32 %v1067, %v955
  %v1090 = vsub.f32 %v1074, %v962
  %v1091 = vand.u32 2147483647, %v1075
  %v1092 = vand.u32 2147483647, %v1076
  %v1093 = vand.u32 2147483647, %v1077
  %v1094 = vand.u32 2147483647, %v1078
  %v1095 = vand.u32 2147483647, %v1079
  %v1096 = vand.u32 2147483647, %v1080
  %v1097 = vand.u32 2147483647, %v1081
  %v1098 = vand.u32 2147483647, %v1082
  %v1099 = vand.u32 2147483647, %v1083
  %v1100 = vand.u32 2147483647, %v1084
  %v1101 = vand.u32 2147483647, %v1085
  %v1102 = vand.u32 2147483647, %v1086
  %v1103 = vand.u32 2147483647, %v1087
  %v1104 = vand.u32 2147483647, %v1088
  %v1105 = vand.u32 2147483647, %v1089
  %v1106 = vand.u32 2147483647, %v1090
  %v1107 = vld [vmem:[%s2] sm:$0xff]
  %v1108 = vld [vmem:[%s2 + $0x8] sm:$0xff]
  %v1109 = vld [vmem:[%s2 + $0x10] sm:$0xff]
  %v1110 = vld [vmem:[%s2 + $0x18] sm:$0xff]
  %v1111 = vld [vmem:[%s2 + $0x20] sm:$0xff]
  %v1112 = vld [vmem:[%s2 + $0x28] sm:$0xff]
  %v1113 = vld [vmem:[%s2 + $0x30] sm:$0xff]
  %v1114 = vld [vmem:[%s2 + $0x38] sm:$0xff]
  %v1115 = vld [vmem:[%s2 + $0x40] sm:$0xff]
  %v1116 = vld [vmem:[%s2 + $0x48] sm:$0xff]
  %v1117 = vld [vmem:[%s2 + $0x50] sm:$0xff]
  %v1118 = vld [vmem:[%s2 + $0x58] sm:$0xff]
  %v1119 = vld [vmem:[%s2 + $0x60] sm:$0xff]
  %v1120 = vld [vmem:[%s2 + $0x68] sm:$0xff]
  %v1121 = vld [vmem:[%s2 + $0x70] sm:$0xff]
  %v1122 = vld [vmem:[%s2 + $0x78] sm:$0xff]
  %v1123 = vadd.f32 %v1107, %v1091
  %v1124 = vadd.f32 %v1108, %v1092
  %v1125 = vadd.f32 %v1109, %v1093
  %v1126 = vadd.f32 %v1110, %v1094
  %v1127 = vadd.f32 %v1111, %v1095
  %v1128 = vadd.f32 %v1112, %v1096
  %v1129 = vadd.f32 %v1113, %v1097
  %v1130 = vadd.f32 %v1114, %v1098
  %v1131 = vadd.f32 %v1115, %v1099
  %v1132 = vadd.f32 %v1116, %v1100
  %v1133 = vadd.f32 %v1117, %v1101
  %v1134 = vadd.f32 %v1118, %v1102
  %v1135 = vadd.f32 %v1119, %v1103
  %v1136 = vadd.f32 %v1120, %v1104
  %v1137 = vadd.f32 %v1121, %v1105
  %v1138 = vadd.f32 %v1122, %v1106
  %1139 = vst [vmem:[%s2] sm:$0xff] %v1123
  %1140 = vst [vmem:[%s2 + $0x8] sm:$0xff] %v1124
  %1141 = vst [vmem:[%s2 + $0x10] sm:$0xff] %v1125
  %1142 = vst [vmem:[%s2 + $0x18] sm:$0xff] %v1126
  %1143 = vst [vmem:[%s2 + $0x20] sm:$0xff] %v1127
  %1144 = vst [vmem:[%s2 + $0x28] sm:$0xff] %v1128
  %1145 = vst [vmem:[%s2 + $0x30] sm:$0xff] %v1129
  %1146 = vst [vmem:[%s2 + $0x38] sm:$0xff] %v1130
  %1147 = vst [vmem:[%s2 + $0x40] sm:$0xff] %v1131
  %1148 = vst [vmem:[%s2 + $0x48] sm:$0xff] %v1132
  %1149 = vst [vmem:[%s2 + $0x50] sm:$0xff] %v1133
  %1150 = vst [vmem:[%s2 + $0x58] sm:$0xff] %v1134
  %1151 = vst [vmem:[%s2 + $0x60] sm:$0xff] %v1135
  %1152 = vst [vmem:[%s2 + $0x68] sm:$0xff] %v1136
  %1153 = vst [vmem:[%s2 + $0x70] sm:$0xff] %v1137
  %1154 = vst [vmem:[%s2 + $0x78] sm:$0xff] %v1138
  %v1155 = vadd.f32 %v969, 1e-05
  %v1156 = vadd.f32 %v976, 1e-05
  %v1157 = vadd.f32 %v983, 1e-05
  %v1158 = vadd.f32 %v990, 1e-05
  %v1159 = vadd.f32 %v997, 1e-05
  %v1160 = vadd.f32 %v1004, 1e-05
  %v1161 = vadd.f32 %v1011, 1e-05
  %v1162 = vadd.f32 %v1018, 1e-05
  %v1163 = vadd.f32 %v1025, 1e-05
  %v1164 = vadd.f32 %v1032, 1e-05
  %v1165 = vadd.f32 %v1039, 1e-05
  %v1166 = vadd.f32 %v1046, 1e-05
  %v1167 = vadd.f32 %v1053, 1e-05
  %v1168 = vadd.f32 %v1060, 1e-05
  %v1169 = vadd.f32 %v1067, 1e-05
  %v1170 = vadd.f32 %v1074, 1e-05
  %v1171 = vadd.f32 %v857, 1e-05
  %v1172 = vadd.f32 %v864, 1e-05
  %v1173 = vadd.f32 %v871, 1e-05
  %v1174 = vadd.f32 %v878, 1e-05
  %v1175 = vadd.f32 %v885, 1e-05
  %v1176 = vadd.f32 %v892, 1e-05
  %v1177 = vadd.f32 %v899, 1e-05
  %v1178 = vadd.f32 %v906, 1e-05
  %v1179 = vadd.f32 %v913, 1e-05
  %v1180 = vadd.f32 %v920, 1e-05
  %v1181 = vadd.f32 %v927, 1e-05
  %v1182 = vadd.f32 %v934, 1e-05
  %v1183 = vadd.f32 %v941, 1e-05
  %v1184 = vadd.f32 %v948, 1e-05
  %v1185 = vadd.f32 %v955, 1e-05
  %v1186 = vadd.f32 %v962, 1e-05
  %v1187 = vrcp.pop %v1171
  %v1188 = vrcp.pop %v1172
  %v1189 = vrcp.pop %v1173
  %v1190 = vrcp.pop %v1174
  %v1191 = vrcp.pop %v1175
  %v1192 = vrcp.pop %v1176
  %v1193 = vrcp.pop %v1177
  %v1194 = vrcp.pop %v1178
  %v1195 = vrcp.pop %v1179
  %v1196 = vrcp.pop %v1180
  %v1197 = vrcp.pop %v1181
  %v1198 = vrcp.pop %v1182
  %v1199 = vrcp.pop %v1183
  %v1200 = vrcp.pop %v1184
  %v1201 = vrcp.pop %v1185
  %v1202 = vrcp.pop %v1186
  %v1203 = vmul.f32 %v1155, %v1187
  %v1204 = vmul.f32 %v1156, %v1188
  %v1205 = vmul.f32 %v1157, %v1189
  %v1206 = vmul.f32 %v1158, %v1190
  %v1207 = vmul.f32 %v1159, %v1191
  %v1208 = vmul.f32 %v1160, %v1192
  %v1209 = vmul.f32 %v1161, %v1193
  %v1210 = vmul.f32 %v1162, %v1194
  %v1211 = vmul.f32 %v1163, %v1195
  %v1212 = vmul.f32 %v1164, %v1196
  %v1213 = vmul.f32 %v1165, %v1197
  %v1214 = vmul.f32 %v1166, %v1198
  %v1215 = vmul.f32 %v1167, %v1199
  %v1216 = vmul.f32 %v1168, %v1200
  %v1217 = vmul.f32 %v1169, %v1201
  %v1218 = vmul.f32 %v1170, %v1202
  %v1219 = vlog2.pop %v1203
  %v1220 = vmul.f32 %v1219, 0.6931472
  %v1221 = vlog2.pop %v1204
  %v1222 = vmul.f32 %v1221, 0.6931472
  %v1223 = vlog2.pop %v1205
  %v1224 = vmul.f32 %v1223, 0.6931472
  %v1225 = vlog2.pop %v1206
  %v1226 = vmul.f32 %v1225, 0.6931472
  %v1227 = vlog2.pop %v1207
  %v1228 = vmul.f32 %v1227, 0.6931472
  %v1229 = vlog2.pop %v1208
  %v1230 = vmul.f32 %v1229, 0.6931472
  %v1231 = vlog2.pop %v1209
  %v1232 = vmul.f32 %v1231, 0.6931472
  %v1233 = vlog2.pop %v1210
  %v1234 = vmul.f32 %v1233, 0.6931472
  %v1235 = vlog2.pop %v1211
  %v1236 = vmul.f32 %v1235, 0.6931472
  %v1237 = vlog2.pop %v1212
  %v1238 = vmul.f32 %v1237, 0.6931472
  %v1239 = vlog2.pop %v1213
  %v1240 = vmul.f32 %v1239, 0.6931472
  %v1241 = vlog2.pop %v1214
  %v1242 = vmul.f32 %v1241, 0.6931472
  %v1243 = vlog2.pop %v1215
  %v1244 = vmul.f32 %v1243, 0.6931472
  %v1245 = vlog2.pop %v1216
  %v1246 = vmul.f32 %v1245, 0.6931472
  %v1247 = vlog2.pop %v1217
  %v1248 = vmul.f32 %v1247, 0.6931472
  %v1249 = vlog2.pop %v1218
  %v1250 = vmul.f32 %v1249, 0.6931472
  %v1251 = vand.u32 2147483647, %v1220
  %v1252 = vand.u32 2147483647, %v1222
  %v1253 = vand.u32 2147483647, %v1224
  %v1254 = vand.u32 2147483647, %v1226
  %v1255 = vand.u32 2147483647, %v1228
  %v1256 = vand.u32 2147483647, %v1230
  %v1257 = vand.u32 2147483647, %v1232
  %v1258 = vand.u32 2147483647, %v1234
  %v1259 = vand.u32 2147483647, %v1236
  %v1260 = vand.u32 2147483647, %v1238
  %v1261 = vand.u32 2147483647, %v1240
  %v1262 = vand.u32 2147483647, %v1242
  %v1263 = vand.u32 2147483647, %v1244
  %v1264 = vand.u32 2147483647, %v1246
  %v1265 = vand.u32 2147483647, %v1248
  %v1266 = vand.u32 2147483647, %v1250
  %v1267 = vld [vmem:[%s3] sm:$0xff]
  %v1268 = vld [vmem:[%s3 + $0x8] sm:$0xff]
  %v1269 = vld [vmem:[%s3 + $0x10] sm:$0xff]
  %v1270 = vld [vmem:[%s3 + $0x18] sm:$0xff]
  %v1271 = vld [vmem:[%s3 + $0x20] sm:$0xff]
  %v1272 = vld [vmem:[%s3 + $0x28] sm:$0xff]
  %v1273 = vld [vmem:[%s3 + $0x30] sm:$0xff]
  %v1274 = vld [vmem:[%s3 + $0x38] sm:$0xff]
  %v1275 = vld [vmem:[%s3 + $0x40] sm:$0xff]
  %v1276 = vld [vmem:[%s3 + $0x48] sm:$0xff]
  %v1277 = vld [vmem:[%s3 + $0x50] sm:$0xff]
  %v1278 = vld [vmem:[%s3 + $0x58] sm:$0xff]
  %v1279 = vld [vmem:[%s3 + $0x60] sm:$0xff]
  %v1280 = vld [vmem:[%s3 + $0x68] sm:$0xff]
  %v1281 = vld [vmem:[%s3 + $0x70] sm:$0xff]
  %v1282 = vld [vmem:[%s3 + $0x78] sm:$0xff]
  %v1283 = vadd.f32 %v1267, %v1251
  %v1284 = vadd.f32 %v1268, %v1252
  %v1285 = vadd.f32 %v1269, %v1253
  %v1286 = vadd.f32 %v1270, %v1254
  %v1287 = vadd.f32 %v1271, %v1255
  %v1288 = vadd.f32 %v1272, %v1256
  %v1289 = vadd.f32 %v1273, %v1257
  %v1290 = vadd.f32 %v1274, %v1258
  %v1291 = vadd.f32 %v1275, %v1259
  %v1292 = vadd.f32 %v1276, %v1260
  %v1293 = vadd.f32 %v1277, %v1261
  %v1294 = vadd.f32 %v1278, %v1262
  %v1295 = vadd.f32 %v1279, %v1263
  %v1296 = vadd.f32 %v1280, %v1264
  %v1297 = vadd.f32 %v1281, %v1265
  %v1298 = vadd.f32 %v1282, %v1266
  %1299 = vst [vmem:[%s3] sm:$0xff] %v1283
  %1300 = vst [vmem:[%s3 + $0x8] sm:$0xff] %v1284
  %1301 = vst [vmem:[%s3 + $0x10] sm:$0xff] %v1285
  %1302 = vst [vmem:[%s3 + $0x18] sm:$0xff] %v1286
  %1303 = vst [vmem:[%s3 + $0x20] sm:$0xff] %v1287
  %1304 = vst [vmem:[%s3 + $0x28] sm:$0xff] %v1288
  %1305 = vst [vmem:[%s3 + $0x30] sm:$0xff] %v1289
  %1306 = vst [vmem:[%s3 + $0x38] sm:$0xff] %v1290
  %1307 = vst [vmem:[%s3 + $0x40] sm:$0xff] %v1291
  %1308 = vst [vmem:[%s3 + $0x48] sm:$0xff] %v1292
  %1309 = vst [vmem:[%s3 + $0x50] sm:$0xff] %v1293
  %1310 = vst [vmem:[%s3 + $0x58] sm:$0xff] %v1294
  %1311 = vst [vmem:[%s3 + $0x60] sm:$0xff] %v1295
  %1312 = vst [vmem:[%s3 + $0x68] sm:$0xff] %v1296
  %1313 = vst [vmem:[%s3 + $0x70] sm:$0xff] %v1297
  %1314 = vst [vmem:[%s3 + $0x78] sm:$0xff] %v1298
  // Predicated region
  $region14: #{_multi_scale_spectral_loss.5} parent=0 // pred_check
    _
  $region15: #{_multi_scale_spectral_loss.5} parent=0 // pred_check_branch
    %1316 = sbr.rel (0) target = $region17
  $region16: #{_multi_scale_spectral_loss.5} parent=0 // pred_region
    _
  $region17: #{_multi_scale_spectral_loss.5} parent=0 // pred_fallthru
    _
  // Predicated region
  $region18: #{_multi_scale_spectral_loss.5} parent=0 // pred_check
    _
  $region19: #{_multi_scale_spectral_loss.5} parent=0 // pred_check_branch
    %1318 = sbr.rel (0) target = $region21
  $region20: #{_multi_scale_spectral_loss.5} parent=0 // pred_region
    _
  $region21: #{_multi_scale_spectral_loss.5} parent=0 // pred_fallthru
    _
  // Predicated region
  $region22: #{_multi_scale_spectral_loss.5} parent=0 // pred_check
    _
  $region23: #{_multi_scale_spectral_loss.5} parent=0 // pred_check_branch
    %1320 = sbr.rel (0) target = $region25
  $region24: #{_multi_scale_spectral_loss.5} parent=0 // pred_region
    _
  $region25: #{_multi_scale_spectral_loss.5} parent=0 // pred_fallthru
    _
  // Predicated region
  $region26: #{_multi_scale_spectral_loss.5} parent=0 // pred_check
    _
  $region27: #{_multi_scale_spectral_loss.5} parent=0 // pred_check_branch
    %1322 = sbr.rel (0) target = $region29
  $region28: #{_multi_scale_spectral_loss.5} parent=0 // pred_region
    _
  $region29: #{_multi_scale_spectral_loss.5} parent=0 // pred_fallthru
    _

// kernel: _multi_scale_spectral_loss.6
$region0: #{_multi_scale_spectral_loss.6}
  #allocation0 [shape = 'u32[]', space=smem, size = 0x4, offset = 0x4, fixed_abs, tag = 'smem constant byte address 0x4 - core index']
  #allocation1 [shape = 'u32[144,128]{1,0:T(1,128)}', space=vmem, size = 0x12000, scoped, tag = 'internal scratch']
  %s0 = inlined_call_operand.vmem [shape: bf16[2,128,128], index: 0, kind: input, shape index: {}]
  %s1 = inlined_call_operand.vmem [shape: bf16[128,256], index: 1, kind: input, shape index: {}]
  %s2 = inlined_call_operand.vmem [shape: f32[128,128], index: 2, kind: output, shape index: {0}]
  %s3 = inlined_call_operand.vmem [shape: f32[128,128], index: 3, kind: output, shape index: {1}]
  %4 = xla_tuple %s2, %s3
  %s5 = sld [smem:[#allocation0]]
  $region30: #{_multi_scale_spectral_loss.6} parent=0
    _
  %s7 = ssub.s32 1, %s5
  %s8 = scalar_select 0, %s7, %s5
  // Predicated region
  $region2: #{_multi_scale_spectral_loss.6} parent=0 // pred_check
    _
  $region3: #{_multi_scale_spectral_loss.6} parent=0 // pred_check_branch
    %10 = sbr.rel (0) target = $region5
  $region4: #{_multi_scale_spectral_loss.6} parent=0 // pred_region
    _
  $region5: #{_multi_scale_spectral_loss.6} parent=0 // pred_fallthru
    _
  // Predicated region
  $region6: #{_multi_scale_spectral_loss.6} parent=0 // pred_check
    _
  $region7: #{_multi_scale_spectral_loss.6} parent=0 // pred_check_branch
    %12 = sbr.rel (0) target = $region9
  $region8: #{_multi_scale_spectral_loss.6} parent=0 // pred_region
    _
  $region9: #{_multi_scale_spectral_loss.6} parent=0 // pred_fallthru
    _
  %p14 = scmp.eq.s32.totalorder 0, 0
  // Predicated region
  $region10: #{_multi_scale_spectral_loss.6} parent=0 // pred_check
    %p15 = pneg %p14
  $region11: #{_multi_scale_spectral_loss.6} parent=0 // pred_check_branch
    %17 = sbr.rel (%p15) target = $region13
  $region12: #{_multi_scale_spectral_loss.6} parent=0 // pred_region
    %18 = vst [vmem:[%s2] sm:$0xff] 0.0
    %19 = vst [vmem:[%s2 + $0x8] sm:$0xff] 0.0
    %20 = vst [vmem:[%s2 + $0x10] sm:$0xff] 0.0
    %21 = vst [vmem:[%s2 + $0x18] sm:$0xff] 0.0
    %22 = vst [vmem:[%s2 + $0x20] sm:$0xff] 0.0
    %23 = vst [vmem:[%s2 + $0x28] sm:$0xff] 0.0
    %24 = vst [vmem:[%s2 + $0x30] sm:$0xff] 0.0
    %25 = vst [vmem:[%s2 + $0x38] sm:$0xff] 0.0
    %26 = vst [vmem:[%s2 + $0x40] sm:$0xff] 0.0
    %27 = vst [vmem:[%s2 + $0x48] sm:$0xff] 0.0
    %28 = vst [vmem:[%s2 + $0x50] sm:$0xff] 0.0
    %29 = vst [vmem:[%s2 + $0x58] sm:$0xff] 0.0
    %30 = vst [vmem:[%s2 + $0x60] sm:$0xff] 0.0
    %31 = vst [vmem:[%s2 + $0x68] sm:$0xff] 0.0
    %32 = vst [vmem:[%s2 + $0x70] sm:$0xff] 0.0
    %33 = vst [vmem:[%s2 + $0x78] sm:$0xff] 0.0
    %34 = vst [vmem:[%s3] sm:$0xff] 0.0
    %35 = vst [vmem:[%s3 + $0x8] sm:$0xff] 0.0
    %36 = vst [vmem:[%s3 + $0x10] sm:$0xff] 0.0
    %37 = vst [vmem:[%s3 + $0x18] sm:$0xff] 0.0
    %38 = vst [vmem:[%s3 + $0x20] sm:$0xff] 0.0
    %39 = vst [vmem:[%s3 + $0x28] sm:$0xff] 0.0
    %40 = vst [vmem:[%s3 + $0x30] sm:$0xff] 0.0
    %41 = vst [vmem:[%s3 + $0x38] sm:$0xff] 0.0
    %42 = vst [vmem:[%s3 + $0x40] sm:$0xff] 0.0
    %43 = vst [vmem:[%s3 + $0x48] sm:$0xff] 0.0
    %44 = vst [vmem:[%s3 + $0x50] sm:$0xff] 0.0
    %45 = vst [vmem:[%s3 + $0x58] sm:$0xff] 0.0
    %46 = vst [vmem:[%s3 + $0x60] sm:$0xff] 0.0
    %47 = vst [vmem:[%s3 + $0x68] sm:$0xff] 0.0
    %48 = vst [vmem:[%s3 + $0x70] sm:$0xff] 0.0
    %49 = vst [vmem:[%s3 + $0x78] sm:$0xff] 0.0
  $region13: #{_multi_scale_spectral_loss.6} parent=0 // pred_fallthru
    _
  %v50 = vld [vmem:[%s0] sm:$0xf]
  %v51 = vld [vmem:[%s0 + $0x4] sm:$0xf]
  %v52 = vld [vmem:[%s0 + $0x8] sm:$0xf]
  %v53 = vld [vmem:[%s0 + $0xc] sm:$0xf]
  %v54 = vld [vmem:[%s0 + $0x10] sm:$0xf]
  %v55 = vld [vmem:[%s0 + $0x14] sm:$0xf]
  %v56 = vld [vmem:[%s0 + $0x18] sm:$0xf]
  %v57 = vld [vmem:[%s0 + $0x1c] sm:$0xf]
  %v58 = vld [vmem:[%s0 + $0x20] sm:$0xf]
  %v59 = vld [vmem:[%s0 + $0x24] sm:$0xf]
  %v60 = vld [vmem:[%s0 + $0x28] sm:$0xf]
  %v61 = vld [vmem:[%s0 + $0x2c] sm:$0xf]
  %v62 = vld [vmem:[%s0 + $0x30] sm:$0xf]
  %v63 = vld [vmem:[%s0 + $0x34] sm:$0xf]
  %v64 = vld [vmem:[%s0 + $0x38] sm:$0xf]
  %v65 = vld [vmem:[%s0 + $0x3c] sm:$0xf]
  %v66 = vld [vmem:[%s0 + $0x40] sm:$0xf]
  %v67 = vld [vmem:[%s0 + $0x44] sm:$0xf]
  %v68 = vld [vmem:[%s0 + $0x48] sm:$0xf]
  %v69 = vld [vmem:[%s0 + $0x4c] sm:$0xf]
  %v70 = vld [vmem:[%s0 + $0x50] sm:$0xf]
  %v71 = vld [vmem:[%s0 + $0x54] sm:$0xf]
  %v72 = vld [vmem:[%s0 + $0x58] sm:$0xf]
  %v73 = vld [vmem:[%s0 + $0x5c] sm:$0xf]
  %v74 = vld [vmem:[%s0 + $0x60] sm:$0xf]
  %v75 = vld [vmem:[%s0 + $0x64] sm:$0xf]
  %v76 = vld [vmem:[%s0 + $0x68] sm:$0xf]
  %v77 = vld [vmem:[%s0 + $0x6c] sm:$0xf]
  %v78 = vld [vmem:[%s0 + $0x70] sm:$0xf]
  %v79 = vld [vmem:[%s0 + $0x74] sm:$0xf]
  %v80 = vld [vmem:[%s0 + $0x78] sm:$0xf]
  %v81 = vld [vmem:[%s0 + $0x7c] sm:$0xf]
  %v82 = vld [vmem:[%s1] sm:$0xff]
  %v83 = vld [vmem:[%s1 + $0x8] sm:$0xff]
  %v84 = vld [vmem:[%s1 + $0x10] sm:$0xff]
  %v85 = vld [vmem:[%s1 + $0x18] sm:$0xff]
  %v86 = vld [vmem:[%s1 + $0x20] sm:$0xff]
  %v87 = vld [vmem:[%s1 + $0x28] sm:$0xff]
  %v88 = vld [vmem:[%s1 + $0x30] sm:$0xff]
  %v89 = vld [vmem:[%s1 + $0x38] sm:$0xff]
  %v90 = vld [vmem:[%s1 + $0x40] sm:$0xff]
  %v91 = vld [vmem:[%s1 + $0x48] sm:$0xff]
  %v92 = vld [vmem:[%s1 + $0x50] sm:$0xff]
  %v93 = vld [vmem:[%s1 + $0x58] sm:$0xff]
  %v94 = vld [vmem:[%s1 + $0x60] sm:$0xff]
  %v95 = vld [vmem:[%s1 + $0x68] sm:$0xff]
  %v96 = vld [vmem:[%s1 + $0x70] sm:$0xff]
  %v97 = vld [vmem:[%s1 + $0x78] sm:$0xff]
  %v130 = vunpack.c.l.b16 %v50
  %v131 = vunpack.c.l.b16 %v51
  %v132 = vunpack.c.l.b16 %v52
  %v133 = vunpack.c.l.b16 %v53
  %v134 = vunpack.c.l.b16 %v54
  %v135 = vunpack.c.l.b16 %v55
  %v136 = vunpack.c.l.b16 %v56
  %v137 = vunpack.c.l.b16 %v57
  %v138 = vunpack.c.l.b16 %v58
  %v139 = vunpack.c.l.b16 %v59
  %v140 = vunpack.c.l.b16 %v60
  %v141 = vunpack.c.l.b16 %v61
  %v142 = vunpack.c.l.b16 %v62
  %v143 = vunpack.c.l.b16 %v63
  %v144 = vunpack.c.l.b16 %v64
  %v145 = vunpack.c.l.b16 %v65
  %v146 = vunpack.c.l.b16 %v66
  %v147 = vunpack.c.l.b16 %v67
  %v148 = vunpack.c.l.b16 %v68
  %v149 = vunpack.c.l.b16 %v69
  %v150 = vunpack.c.l.b16 %v70
  %v151 = vunpack.c.l.b16 %v71
  %v152 = vunpack.c.l.b16 %v72
  %v153 = vunpack.c.l.b16 %v73
  %v154 = vunpack.c.l.b16 %v74
  %v155 = vunpack.c.l.b16 %v75
  %v156 = vunpack.c.l.b16 %v76
  %v157 = vunpack.c.l.b16 %v77
  %v158 = vunpack.c.l.b16 %v78
  %v159 = vunpack.c.l.b16 %v79
  %v160 = vunpack.c.l.b16 %v80
  %v161 = vunpack.c.l.b16 %v81
  %v162 = vpack.c.b16 %v131, %v130
  %v163 = vpack.c.b16 %v133, %v132
  %v164 = vpack.c.b16 %v135, %v134
  %v165 = vpack.c.b16 %v137, %v136
  %v166 = vpack.c.b16 %v139, %v138
  %v167 = vpack.c.b16 %v141, %v140
  %v168 = vpack.c.b16 %v143, %v142
  %v169 = vpack.c.b16 %v145, %v144
  %v170 = vpack.c.b16 %v147, %v146
  %v171 = vpack.c.b16 %v149, %v148
  %v172 = vpack.c.b16 %v151, %v150
  %v173 = vpack.c.b16 %v153, %v152
  %v174 = vpack.c.b16 %v155, %v154
  %v175 = vpack.c.b16 %v157, %v156
  %v176 = vpack.c.b16 %v159, %v158
  %v177 = vpack.c.b16 %v161, %v160
  %v210 = vunpack.c.l.b16 %v82
  %v211 = vunpack.c.h.b16 %v82
  %v212 = vunpack.c.l.b16 %v83
  %v213 = vunpack.c.h.b16 %v83
  %v214 = vunpack.c.l.b16 %v84
  %v215 = vunpack.c.h.b16 %v84
  %v216 = vunpack.c.l.b16 %v85
  %v217 = vunpack.c.h.b16 %v85
  %v218 = vunpack.c.l.b16 %v86
  %v219 = vunpack.c.h.b16 %v86
  %v220 = vunpack.c.l.b16 %v87
  %v221 = vunpack.c.h.b16 %v87
  %v222 = vunpack.c.l.b16 %v88
  %v223 = vunpack.c.h.b16 %v88
  %v224 = vunpack.c.l.b16 %v89
  %v225 = vunpack.c.h.b16 %v89
  %v226 = vunpack.c.l.b16 %v90
  %v227 = vunpack.c.h.b16 %v90
  %v228 = vunpack.c.l.b16 %v91
  %v229 = vunpack.c.h.b16 %v91
  %v230 = vunpack.c.l.b16 %v92
  %v231 = vunpack.c.h.b16 %v92
  %v232 = vunpack.c.l.b16 %v93
  %v233 = vunpack.c.h.b16 %v93
  %v234 = vunpack.c.l.b16 %v94
  %v235 = vunpack.c.h.b16 %v94
  %v236 = vunpack.c.l.b16 %v95
  %v237 = vunpack.c.h.b16 %v95
  %v238 = vunpack.c.l.b16 %v96
  %v239 = vunpack.c.h.b16 %v96
  %v240 = vunpack.c.l.b16 %v97
  %v241 = vunpack.c.h.b16 %v97
  %v242 = vpack.c.b16 %v212, %v210
  %v243 = vpack.c.b16 %v213, %v211
  %v244 = vpack.c.b16 %v216, %v214
  %v245 = vpack.c.b16 %v217, %v215
  %v246 = vpack.c.b16 %v220, %v218
  %v247 = vpack.c.b16 %v221, %v219
  %v248 = vpack.c.b16 %v224, %v222
  %v249 = vpack.c.b16 %v225, %v223
  %v250 = vpack.c.b16 %v228, %v226
  %v251 = vpack.c.b16 %v229, %v227
  %v252 = vpack.c.b16 %v232, %v230
  %v253 = vpack.c.b16 %v233, %v231
  %v254 = vpack.c.b16 %v236, %v234
  %v255 = vpack.c.b16 %v237, %v235
  %v256 = vpack.c.b16 %v240, %v238
  %v257 = vpack.c.b16 %v241, %v239
  %274 = vmatprep.subr.bf16.mxu0 %v257
  %275 = vmatpush1.bf16.msra.mxu0 %v256
  %276 = vmatprep.subr.bf16.mxu0 %v255
  %277 = vmatpush1.bf16.msra.mxu0 %v254
  %278 = vmatprep.subr.bf16.mxu0 %v253
  %279 = vmatpush1.bf16.msra.mxu0 %v252
  %280 = vmatprep.subr.bf16.mxu0 %v251
  %281 = vmatpush1.bf16.msra.mxu0 %v250
  %282 = vmatprep.subr.bf16.mxu0 %v249
  %283 = vmatpush1.bf16.msra.mxu0 %v248
  %284 = vmatprep.subr.bf16.mxu0 %v247
  %285 = vmatpush1.bf16.msra.mxu0 %v246
  %286 = vmatprep.subr.bf16.mxu0 %v245
  %287 = vmatpush1.bf16.msra.mxu0 %v244
  %288 = vmatprep.subr.bf16.mxu0 %v243
  %289 = vmatpush1.bf16.msra.mxu0 %v242
  %290 = vmatprep.subr.bf16.mxu0 0
  %291 = vmatpush2.bf16.msra.mxu0 0
  %292 = vmatprep.subr.bf16.mxu0 0
  %293 = vmatpush2.bf16.msra.mxu0 0
  %294 = vmatprep.subr.bf16.mxu0 0
  %295 = vmatpush2.bf16.msra.mxu0 0
  %296 = vmatprep.subr.bf16.mxu0 0
  %297 = vmatpush2.bf16.msra.mxu0 0
  %298 = vmatprep.subr.bf16.mxu0 0
  %299 = vmatpush2.bf16.msra.mxu0 0
  %300 = vmatprep.subr.bf16.mxu0 0
  %301 = vmatpush2.bf16.msra.mxu0 0
  %302 = vmatprep.subr.bf16.mxu0 0
  %303 = vmatpush2.bf16.msra.mxu0 0
  %304 = vmatprep.subr.bf16.mxu0 0
  %305 = vmatpush2.bf16.msra.mxu0 0
  %306 = vmatprep.mubr.bf16.mxu0 0
  %307 = vmatmul.mubr.bf16.gmra.mxu0 %v162
  %v308 = vpop.f32.mrf.mxu0
  %v309 = vadd.f32 0.0, %v308
  %v310 = vpop.f32.mrf.mxu0
  %v311 = vadd.f32 0.0, %v310
  %v312 = vpop.f32.mrf.mxu0
  %v313 = vadd.f32 0.0, %v312
  %v314 = vpop.f32.mrf.mxu0
  %v315 = vadd.f32 0.0, %v314
  %316 = vmatprep.mubr.bf16.mxu0 0
  %317 = vmatmul.mubr.bf16.gmra.mxu0 %v163
  %v318 = vpop.f32.mrf.mxu0
  %v319 = vadd.f32 0.0, %v318
  %v320 = vpop.f32.mrf.mxu0
  %v321 = vadd.f32 0.0, %v320
  %v322 = vpop.f32.mrf.mxu0
  %v323 = vadd.f32 0.0, %v322
  %v324 = vpop.f32.mrf.mxu0
  %v325 = vadd.f32 0.0, %v324
  %326 = vmatprep.mubr.bf16.mxu0 0
  %327 = vmatmul.mubr.bf16.gmra.mxu0 %v164
  %v328 = vpop.f32.mrf.mxu0
  %v329 = vadd.f32 0.0, %v328
  %v330 = vpop.f32.mrf.mxu0
  %v331 = vadd.f32 0.0, %v330
  %v332 = vpop.f32.mrf.mxu0
  %v333 = vadd.f32 0.0, %v332
  %v334 = vpop.f32.mrf.mxu0
  %v335 = vadd.f32 0.0, %v334
  %336 = vmatprep.mubr.bf16.mxu0 0
  %337 = vmatmul.mubr.bf16.gmra.mxu0 %v165
  %v338 = vpop.f32.mrf.mxu0
  %v339 = vadd.f32 0.0, %v338
  %v340 = vpop.f32.mrf.mxu0
  %v341 = vadd.f32 0.0, %v340
  %v342 = vpop.f32.mrf.mxu0
  %v343 = vadd.f32 0.0, %v342
  %v344 = vpop.f32.mrf.mxu0
  %v345 = vadd.f32 0.0, %v344
  %346 = vmatprep.mubr.bf16.mxu0 0
  %347 = vmatmul.mubr.bf16.gmra.mxu0 %v166
  %v348 = vpop.f32.mrf.mxu0
  %v349 = vadd.f32 0.0, %v348
  %v350 = vpop.f32.mrf.mxu0
  %v351 = vadd.f32 0.0, %v350
  %v352 = vpop.f32.mrf.mxu0
  %v353 = vadd.f32 0.0, %v352
  %v354 = vpop.f32.mrf.mxu0
  %v355 = vadd.f32 0.0, %v354
  %356 = vmatprep.mubr.bf16.mxu0 0
  %357 = vmatmul.mubr.bf16.gmra.mxu0 %v167
  %v358 = vpop.f32.mrf.mxu0
  %v359 = vadd.f32 0.0, %v358
  %v360 = vpop.f32.mrf.mxu0
  %v361 = vadd.f32 0.0, %v360
  %v362 = vpop.f32.mrf.mxu0
  %v363 = vadd.f32 0.0, %v362
  %v364 = vpop.f32.mrf.mxu0
  %v365 = vadd.f32 0.0, %v364
  %366 = vmatprep.mubr.bf16.mxu0 0
  %367 = vmatmul.mubr.bf16.gmra.mxu0 %v168
  %v368 = vpop.f32.mrf.mxu0
  %v369 = vadd.f32 0.0, %v368
  %v370 = vpop.f32.mrf.mxu0
  %v371 = vadd.f32 0.0, %v370
  %v372 = vpop.f32.mrf.mxu0
  %v373 = vadd.f32 0.0, %v372
  %v374 = vpop.f32.mrf.mxu0
  %v375 = vadd.f32 0.0, %v374
  %376 = vmatprep.mubr.bf16.mxu0 0
  %377 = vmatmul.mubr.bf16.gmra.mxu0 %v169
  %v378 = vpop.f32.mrf.mxu0
  %v379 = vadd.f32 0.0, %v378
  %v380 = vpop.f32.mrf.mxu0
  %v381 = vadd.f32 0.0, %v380
  %v382 = vpop.f32.mrf.mxu0
  %v383 = vadd.f32 0.0, %v382
  %v384 = vpop.f32.mrf.mxu0
  %v385 = vadd.f32 0.0, %v384
  %386 = vmatprep.mubr.bf16.mxu0 0
  %387 = vmatmul.mubr.bf16.gmra.mxu0 %v170
  %v388 = vpop.f32.mrf.mxu0
  %v389 = vadd.f32 0.0, %v388
  %v390 = vpop.f32.mrf.mxu0
  %v391 = vadd.f32 0.0, %v390
  %v392 = vpop.f32.mrf.mxu0
  %v393 = vadd.f32 0.0, %v392
  %v394 = vpop.f32.mrf.mxu0
  %v395 = vadd.f32 0.0, %v394
  %396 = vmatprep.mubr.bf16.mxu0 0
  %397 = vmatmul.mubr.bf16.gmra.mxu0 %v171
  %v398 = vpop.f32.mrf.mxu0
  %v399 = vadd.f32 0.0, %v398
  %v400 = vpop.f32.mrf.mxu0
  %v401 = vadd.f32 0.0, %v400
  %v402 = vpop.f32.mrf.mxu0
  %v403 = vadd.f32 0.0, %v402
  %v404 = vpop.f32.mrf.mxu0
  %v405 = vadd.f32 0.0, %v404
  %406 = vmatprep.mubr.bf16.mxu0 0
  %407 = vmatmul.mubr.bf16.gmra.mxu0 %v172
  %v408 = vpop.f32.mrf.mxu0
  %v409 = vadd.f32 0.0, %v408
  %v410 = vpop.f32.mrf.mxu0
  %v411 = vadd.f32 0.0, %v410
  %v412 = vpop.f32.mrf.mxu0
  %v413 = vadd.f32 0.0, %v412
  %v414 = vpop.f32.mrf.mxu0
  %v415 = vadd.f32 0.0, %v414
  %416 = vmatprep.mubr.bf16.mxu0 0
  %417 = vmatmul.mubr.bf16.gmra.mxu0 %v173
  %v418 = vpop.f32.mrf.mxu0
  %v419 = vadd.f32 0.0, %v418
  %v420 = vpop.f32.mrf.mxu0
  %v421 = vadd.f32 0.0, %v420
  %v422 = vpop.f32.mrf.mxu0
  %v423 = vadd.f32 0.0, %v422
  %v424 = vpop.f32.mrf.mxu0
  %v425 = vadd.f32 0.0, %v424
  %426 = vmatprep.mubr.bf16.mxu0 0
  %427 = vmatmul.mubr.bf16.gmra.mxu0 %v174
  %v428 = vpop.f32.mrf.mxu0
  %v429 = vadd.f32 0.0, %v428
  %v430 = vpop.f32.mrf.mxu0
  %v431 = vadd.f32 0.0, %v430
  %v432 = vpop.f32.mrf.mxu0
  %v433 = vadd.f32 0.0, %v432
  %v434 = vpop.f32.mrf.mxu0
  %v435 = vadd.f32 0.0, %v434
  %436 = vmatprep.mubr.bf16.mxu0 0
  %437 = vmatmul.mubr.bf16.gmra.mxu0 %v175
  %v438 = vpop.f32.mrf.mxu0
  %v439 = vadd.f32 0.0, %v438
  %v440 = vpop.f32.mrf.mxu0
  %v441 = vadd.f32 0.0, %v440
  %v442 = vpop.f32.mrf.mxu0
  %v443 = vadd.f32 0.0, %v442
  %v444 = vpop.f32.mrf.mxu0
  %v445 = vadd.f32 0.0, %v444
  %446 = vmatprep.mubr.bf16.mxu0 0
  %447 = vmatmul.mubr.bf16.gmra.mxu0 %v176
  %v448 = vpop.f32.mrf.mxu0
  %v449 = vadd.f32 0.0, %v448
  %v450 = vpop.f32.mrf.mxu0
  %v451 = vadd.f32 0.0, %v450
  %v452 = vpop.f32.mrf.mxu0
  %v453 = vadd.f32 0.0, %v452
  %v454 = vpop.f32.mrf.mxu0
  %v455 = vadd.f32 0.0, %v454
  %456 = vmatprep.mubr.bf16.mxu0 0
  %457 = vmatmul.mubr.bf16.gmra.mxu0 %v177
  %v458 = vpop.f32.mrf.mxu0
  %v459 = vadd.f32 0.0, %v458
  %v460 = vpop.f32.mrf.mxu0
  %v461 = vadd.f32 0.0, %v460
  %v462 = vpop.f32.mrf.mxu0
  %v463 = vadd.f32 0.0, %v462
  %v464 = vpop.f32.mrf.mxu0
  %v465 = vadd.f32 0.0, %v464
  %466 = vdwg.mxu0
  %v467 = vmul.f32 %v309, %v309
  %v468 = vmul.f32 %v313, %v313
  %v469 = vmul.f32 %v319, %v319
  %v470 = vmul.f32 %v323, %v323
  %v471 = vmul.f32 %v329, %v329
  %v472 = vmul.f32 %v333, %v333
  %v473 = vmul.f32 %v339, %v339
  %v474 = vmul.f32 %v343, %v343
  %v475 = vmul.f32 %v349, %v349
  %v476 = vmul.f32 %v353, %v353
  %v477 = vmul.f32 %v359, %v359
  %v478 = vmul.f32 %v363, %v363
  %v479 = vmul.f32 %v369, %v369
  %v480 = vmul.f32 %v373, %v373
  %v481 = vmul.f32 %v379, %v379
  %v482 = vmul.f32 %v383, %v383
  %v483 = vmul.f32 %v389, %v389
  %v484 = vmul.f32 %v393, %v393
  %v485 = vmul.f32 %v399, %v399
  %v486 = vmul.f32 %v403, %v403
  %v487 = vmul.f32 %v409, %v409
  %v488 = vmul.f32 %v413, %v413
  %v489 = vmul.f32 %v419, %v419
  %v490 = vmul.f32 %v423, %v423
  %v491 = vmul.f32 %v429, %v429
  %v492 = vmul.f32 %v433, %v433
  %v493 = vmul.f32 %v439, %v439
  %v494 = vmul.f32 %v443, %v443
  %v495 = vmul.f32 %v449, %v449
  %v496 = vmul.f32 %v453, %v453
  %v497 = vmul.f32 %v459, %v459
  %v498 = vmul.f32 %v463, %v463
  %v499 = vmul.f32 %v311, %v311
  %v500 = vmul.f32 %v315, %v315
  %v501 = vmul.f32 %v321, %v321
  %v502 = vmul.f32 %v325, %v325
  %v503 = vmul.f32 %v331, %v331
  %v504 = vmul.f32 %v335, %v335
  %v505 = vmul.f32 %v341, %v341
  %v506 = vmul.f32 %v345, %v345
  %v507 = vmul.f32 %v351, %v351
  %v508 = vmul.f32 %v355, %v355
  %v509 = vmul.f32 %v361, %v361
  %v510 = vmul.f32 %v365, %v365
  %v511 = vmul.f32 %v371, %v371
  %v512 = vmul.f32 %v375, %v375
  %v513 = vmul.f32 %v381, %v381
  %v514 = vmul.f32 %v385, %v385
  %v515 = vmul.f32 %v391, %v391
  %v516 = vmul.f32 %v395, %v395
  %v517 = vmul.f32 %v401, %v401
  %v518 = vmul.f32 %v405, %v405
  %v519 = vmul.f32 %v411, %v411
  %v520 = vmul.f32 %v415, %v415
  %v521 = vmul.f32 %v421, %v421
  %v522 = vmul.f32 %v425, %v425
  %v523 = vmul.f32 %v431, %v431
  %v524 = vmul.f32 %v435, %v435
  %v525 = vmul.f32 %v441, %v441
  %v526 = vmul.f32 %v445, %v445
  %v527 = vmul.f32 %v451, %v451
  %v528 = vmul.f32 %v455, %v455
  %v529 = vmul.f32 %v461, %v461
  %v530 = vmul.f32 %v465, %v465
  %v531 = vadd.f32 %v467, %v499
  %v532 = vadd.f32 %v468, %v500
  %v533 = vadd.f32 %v469, %v501
  %v534 = vadd.f32 %v470, %v502
  %v535 = vadd.f32 %v471, %v503
  %v536 = vadd.f32 %v472, %v504
  %v537 = vadd.f32 %v473, %v505
  %v538 = vadd.f32 %v474, %v506
  %v539 = vadd.f32 %v475, %v507
  %v540 = vadd.f32 %v476, %v508
  %v541 = vadd.f32 %v477, %v509
  %v542 = vadd.f32 %v478, %v510
  %v543 = vadd.f32 %v479, %v511
  %v544 = vadd.f32 %v480, %v512
  %v545 = vadd.f32 %v481, %v513
  %v546 = vadd.f32 %v482, %v514
  %v547 = vadd.f32 %v483, %v515
  %v548 = vadd.f32 %v484, %v516
  %v549 = vadd.f32 %v485, %v517
  %v550 = vadd.f32 %v486, %v518
  %v551 = vadd.f32 %v487, %v519
  %v552 = vadd.f32 %v488, %v520
  %v553 = vadd.f32 %v489, %v521
  %v554 = vadd.f32 %v490, %v522
  %v555 = vadd.f32 %v491, %v523
  %v556 = vadd.f32 %v492, %v524
  %v557 = vadd.f32 %v493, %v525
  %v558 = vadd.f32 %v494, %v526
  %v559 = vadd.f32 %v495, %v527
  %v560 = vadd.f32 %v496, %v528
  %v561 = vadd.f32 %v497, %v529
  %v562 = vadd.f32 %v498, %v530
  %v563 = vrsqrt.pop %v531
  %v564 = vmul.f32 %v531, %v563
  %vm565 = vcmp.eq.f32.partialorder %v531, inf
  %v566 = vsel %vm565, %v531, %v564
  %vm567 = vcmp.eq.f32.partialorder %v531, 0.0
  %v568 = vand.u32 %v531, 2147483648
  %v569 = vsel %vm567, %v568, %v566
  %v570 = vrsqrt.pop %v532
  %v571 = vmul.f32 %v532, %v570
  %vm572 = vcmp.eq.f32.partialorder %v532, inf
  %v573 = vsel %vm572, %v532, %v571
  %vm574 = vcmp.eq.f32.partialorder %v532, 0.0
  %v575 = vand.u32 %v532, 2147483648
  %v576 = vsel %vm574, %v575, %v573
  %v577 = vrsqrt.pop %v533
  %v578 = vmul.f32 %v533, %v577
  %vm579 = vcmp.eq.f32.partialorder %v533, inf
  %v580 = vsel %vm579, %v533, %v578
  %vm581 = vcmp.eq.f32.partialorder %v533, 0.0
  %v582 = vand.u32 %v533, 2147483648
  %v583 = vsel %vm581, %v582, %v580
  %v584 = vrsqrt.pop %v534
  %v585 = vmul.f32 %v534, %v584
  %vm586 = vcmp.eq.f32.partialorder %v534, inf
  %v587 = vsel %vm586, %v534, %v585
  %vm588 = vcmp.eq.f32.partialorder %v534, 0.0
  %v589 = vand.u32 %v534, 2147483648
  %v590 = vsel %vm588, %v589, %v587
  %v591 = vrsqrt.pop %v535
  %v592 = vmul.f32 %v535, %v591
  %vm593 = vcmp.eq.f32.partialorder %v535, inf
  %v594 = vsel %vm593, %v535, %v592
  %vm595 = vcmp.eq.f32.partialorder %v535, 0.0
  %v596 = vand.u32 %v535, 2147483648
  %v597 = vsel %vm595, %v596, %v594
  %v598 = vrsqrt.pop %v536
  %v599 = vmul.f32 %v536, %v598
  %vm600 = vcmp.eq.f32.partialorder %v536, inf
  %v601 = vsel %vm600, %v536, %v599
  %vm602 = vcmp.eq.f32.partialorder %v536, 0.0
  %v603 = vand.u32 %v536, 2147483648
  %v604 = vsel %vm602, %v603, %v601
  %v605 = vrsqrt.pop %v537
  %v606 = vmul.f32 %v537, %v605
  %vm607 = vcmp.eq.f32.partialorder %v537, inf
  %v608 = vsel %vm607, %v537, %v606
  %vm609 = vcmp.eq.f32.partialorder %v537, 0.0
  %v610 = vand.u32 %v537, 2147483648
  %v611 = vsel %vm609, %v610, %v608
  %v612 = vrsqrt.pop %v538
  %v613 = vmul.f32 %v538, %v612
  %vm614 = vcmp.eq.f32.partialorder %v538, inf
  %v615 = vsel %vm614, %v538, %v613
  %vm616 = vcmp.eq.f32.partialorder %v538, 0.0
  %v617 = vand.u32 %v538, 2147483648
  %v618 = vsel %vm616, %v617, %v615
  %v619 = vrsqrt.pop %v539
  %v620 = vmul.f32 %v539, %v619
  %vm621 = vcmp.eq.f32.partialorder %v539, inf
  %v622 = vsel %vm621, %v539, %v620
  %vm623 = vcmp.eq.f32.partialorder %v539, 0.0
  %v624 = vand.u32 %v539, 2147483648
  %v625 = vsel %vm623, %v624, %v622
  %v626 = vrsqrt.pop %v540
  %v627 = vmul.f32 %v540, %v626
  %vm628 = vcmp.eq.f32.partialorder %v540, inf
  %v629 = vsel %vm628, %v540, %v627
  %vm630 = vcmp.eq.f32.partialorder %v540, 0.0
  %v631 = vand.u32 %v540, 2147483648
  %v632 = vsel %vm630, %v631, %v629
  %v633 = vrsqrt.pop %v541
  %v634 = vmul.f32 %v541, %v633
  %vm635 = vcmp.eq.f32.partialorder %v541, inf
  %v636 = vsel %vm635, %v541, %v634
  %vm637 = vcmp.eq.f32.partialorder %v541, 0.0
  %v638 = vand.u32 %v541, 2147483648
  %v639 = vsel %vm637, %v638, %v636
  %v640 = vrsqrt.pop %v542
  %v641 = vmul.f32 %v542, %v640
  %vm642 = vcmp.eq.f32.partialorder %v542, inf
  %v643 = vsel %vm642, %v542, %v641
  %vm644 = vcmp.eq.f32.partialorder %v542, 0.0
  %v645 = vand.u32 %v542, 2147483648
  %v646 = vsel %vm644, %v645, %v643
  %v647 = vrsqrt.pop %v543
  %v648 = vmul.f32 %v543, %v647
  %vm649 = vcmp.eq.f32.partialorder %v543, inf
  %v650 = vsel %vm649, %v543, %v648
  %vm651 = vcmp.eq.f32.partialorder %v543, 0.0
  %v652 = vand.u32 %v543, 2147483648
  %v653 = vsel %vm651, %v652, %v650
  %v654 = vrsqrt.pop %v544
  %v655 = vmul.f32 %v544, %v654
  %vm656 = vcmp.eq.f32.partialorder %v544, inf
  %v657 = vsel %vm656, %v544, %v655
  %vm658 = vcmp.eq.f32.partialorder %v544, 0.0
  %v659 = vand.u32 %v544, 2147483648
  %v660 = vsel %vm658, %v659, %v657
  %v661 = vrsqrt.pop %v545
  %v662 = vmul.f32 %v545, %v661
  %vm663 = vcmp.eq.f32.partialorder %v545, inf
  %v664 = vsel %vm663, %v545, %v662
  %vm665 = vcmp.eq.f32.partialorder %v545, 0.0
  %v666 = vand.u32 %v545, 2147483648
  %v667 = vsel %vm665, %v666, %v664
  %v668 = vrsqrt.pop %v546
  %v669 = vmul.f32 %v546, %v668
  %vm670 = vcmp.eq.f32.partialorder %v546, inf
  %v671 = vsel %vm670, %v546, %v669
  %vm672 = vcmp.eq.f32.partialorder %v546, 0.0
  %v673 = vand.u32 %v546, 2147483648
  %v674 = vsel %vm672, %v673, %v671
  %v675 = vrsqrt.pop %v547
  %v676 = vmul.f32 %v547, %v675
  %vm677 = vcmp.eq.f32.partialorder %v547, inf
  %v678 = vsel %vm677, %v547, %v676
  %vm679 = vcmp.eq.f32.partialorder %v547, 0.0
  %v680 = vand.u32 %v547, 2147483648
  %v681 = vsel %vm679, %v680, %v678
  %v682 = vrsqrt.pop %v548
  %v683 = vmul.f32 %v548, %v682
  %vm684 = vcmp.eq.f32.partialorder %v548, inf
  %v685 = vsel %vm684, %v548, %v683
  %vm686 = vcmp.eq.f32.partialorder %v548, 0.0
  %v687 = vand.u32 %v548, 2147483648
  %v688 = vsel %vm686, %v687, %v685
  %v689 = vrsqrt.pop %v549
  %v690 = vmul.f32 %v549, %v689
  %vm691 = vcmp.eq.f32.partialorder %v549, inf
  %v692 = vsel %vm691, %v549, %v690
  %vm693 = vcmp.eq.f32.partialorder %v549, 0.0
  %v694 = vand.u32 %v549, 2147483648
  %v695 = vsel %vm693, %v694, %v692
  %v696 = vrsqrt.pop %v550
  %v697 = vmul.f32 %v550, %v696
  %vm698 = vcmp.eq.f32.partialorder %v550, inf
  %v699 = vsel %vm698, %v550, %v697
  %vm700 = vcmp.eq.f32.partialorder %v550, 0.0
  %v701 = vand.u32 %v550, 2147483648
  %v702 = vsel %vm700, %v701, %v699
  %v703 = vrsqrt.pop %v551
  %v704 = vmul.f32 %v551, %v703
  %vm705 = vcmp.eq.f32.partialorder %v551, inf
  %v706 = vsel %vm705, %v551, %v704
  %vm707 = vcmp.eq.f32.partialorder %v551, 0.0
  %v708 = vand.u32 %v551, 2147483648
  %v709 = vsel %vm707, %v708, %v706
  %v710 = vrsqrt.pop %v552
  %v711 = vmul.f32 %v552, %v710
  %vm712 = vcmp.eq.f32.partialorder %v552, inf
  %v713 = vsel %vm712, %v552, %v711
  %vm714 = vcmp.eq.f32.partialorder %v552, 0.0
  %v715 = vand.u32 %v552, 2147483648
  %v716 = vsel %vm714, %v715, %v713
  %v717 = vrsqrt.pop %v553
  %v718 = vmul.f32 %v553, %v717
  %vm719 = vcmp.eq.f32.partialorder %v553, inf
  %v720 = vsel %vm719, %v553, %v718
  %vm721 = vcmp.eq.f32.partialorder %v553, 0.0
  %v722 = vand.u32 %v553, 2147483648
  %v723 = vsel %vm721, %v722, %v720
  %v724 = vrsqrt.pop %v554
  %v725 = vmul.f32 %v554, %v724
  %vm726 = vcmp.eq.f32.partialorder %v554, inf
  %v727 = vsel %vm726, %v554, %v725
  %vm728 = vcmp.eq.f32.partialorder %v554, 0.0
  %v729 = vand.u32 %v554, 2147483648
  %v730 = vsel %vm728, %v729, %v727
  %v731 = vrsqrt.pop %v555
  %v732 = vmul.f32 %v555, %v731
  %vm733 = vcmp.eq.f32.partialorder %v555, inf
  %v734 = vsel %vm733, %v555, %v732
  %vm735 = vcmp.eq.f32.partialorder %v555, 0.0
  %v736 = vand.u32 %v555, 2147483648
  %v737 = vsel %vm735, %v736, %v734
  %v738 = vrsqrt.pop %v556
  %v739 = vmul.f32 %v556, %v738
  %vm740 = vcmp.eq.f32.partialorder %v556, inf
  %v741 = vsel %vm740, %v556, %v739
  %vm742 = vcmp.eq.f32.partialorder %v556, 0.0
  %v743 = vand.u32 %v556, 2147483648
  %v744 = vsel %vm742, %v743, %v741
  %v745 = vrsqrt.pop %v557
  %v746 = vmul.f32 %v557, %v745
  %vm747 = vcmp.eq.f32.partialorder %v557, inf
  %v748 = vsel %vm747, %v557, %v746
  %vm749 = vcmp.eq.f32.partialorder %v557, 0.0
  %v750 = vand.u32 %v557, 2147483648
  %v751 = vsel %vm749, %v750, %v748
  %v752 = vrsqrt.pop %v558
  %v753 = vmul.f32 %v558, %v752
  %vm754 = vcmp.eq.f32.partialorder %v558, inf
  %v755 = vsel %vm754, %v558, %v753
  %vm756 = vcmp.eq.f32.partialorder %v558, 0.0
  %v757 = vand.u32 %v558, 2147483648
  %v758 = vsel %vm756, %v757, %v755
  %v759 = vrsqrt.pop %v559
  %v760 = vmul.f32 %v559, %v759
  %vm761 = vcmp.eq.f32.partialorder %v559, inf
  %v762 = vsel %vm761, %v559, %v760
  %vm763 = vcmp.eq.f32.partialorder %v559, 0.0
  %v764 = vand.u32 %v559, 2147483648
  %v765 = vsel %vm763, %v764, %v762
  %v766 = vrsqrt.pop %v560
  %v767 = vmul.f32 %v560, %v766
  %vm768 = vcmp.eq.f32.partialorder %v560, inf
  %v769 = vsel %vm768, %v560, %v767
  %vm770 = vcmp.eq.f32.partialorder %v560, 0.0
  %v771 = vand.u32 %v560, 2147483648
  %v772 = vsel %vm770, %v771, %v769
  %v773 = vrsqrt.pop %v561
  %v774 = vmul.f32 %v561, %v773
  %vm775 = vcmp.eq.f32.partialorder %v561, inf
  %v776 = vsel %vm775, %v561, %v774
  %vm777 = vcmp.eq.f32.partialorder %v561, 0.0
  %v778 = vand.u32 %v561, 2147483648
  %v779 = vsel %vm777, %v778, %v776
  %v780 = vrsqrt.pop %v562
  %v781 = vmul.f32 %v562, %v780
  %vm782 = vcmp.eq.f32.partialorder %v562, inf
  %v783 = vsel %vm782, %v562, %v781
  %vm784 = vcmp.eq.f32.partialorder %v562, 0.0
  %v785 = vand.u32 %v562, 2147483648
  %v786 = vsel %vm784, %v785, %v783
  %v787 = vsub.f32 %v681, %v569
  %v788 = vsub.f32 %v688, %v576
  %v789 = vsub.f32 %v695, %v583
  %v790 = vsub.f32 %v702, %v590
  %v791 = vsub.f32 %v709, %v597
  %v792 = vsub.f32 %v716, %v604
  %v793 = vsub.f32 %v723, %v611
  %v794 = vsub.f32 %v730, %v618
  %v795 = vsub.f32 %v737, %v625
  %v796 = vsub.f32 %v744, %v632
  %v797 = vsub.f32 %v751, %v639
  %v798 = vsub.f32 %v758, %v646
  %v799 = vsub.f32 %v765, %v653
  %v800 = vsub.f32 %v772, %v660
  %v801 = vsub.f32 %v779, %v667
  %v802 = vsub.f32 %v786, %v674
  %v803 = vand.u32 2147483647, %v787
  %v804 = vand.u32 2147483647, %v788
  %v805 = vand.u32 2147483647, %v789
  %v806 = vand.u32 2147483647, %v790
  %v807 = vand.u32 2147483647, %v791
  %v808 = vand.u32 2147483647, %v792
  %v809 = vand.u32 2147483647, %v793
  %v810 = vand.u32 2147483647, %v794
  %v811 = vand.u32 2147483647, %v795
  %v812 = vand.u32 2147483647, %v796
  %v813 = vand.u32 2147483647, %v797
  %v814 = vand.u32 2147483647, %v798
  %v815 = vand.u32 2147483647, %v799
  %v816 = vand.u32 2147483647, %v800
  %v817 = vand.u32 2147483647, %v801
  %v818 = vand.u32 2147483647, %v802
  %v819 = vld [vmem:[%s2] sm:$0xff]
  %v820 = vld [vmem:[%s2 + $0x8] sm:$0xff]
  %v821 = vld [vmem:[%s2 + $0x10] sm:$0xff]
  %v822 = vld [vmem:[%s2 + $0x18] sm:$0xff]
  %v823 = vld [vmem:[%s2 + $0x20] sm:$0xff]
  %v824 = vld [vmem:[%s2 + $0x28] sm:$0xff]
  %v825 = vld [vmem:[%s2 + $0x30] sm:$0xff]
  %v826 = vld [vmem:[%s2 + $0x38] sm:$0xff]
  %v827 = vld [vmem:[%s2 + $0x40] sm:$0xff]
  %v828 = vld [vmem:[%s2 + $0x48] sm:$0xff]
  %v829 = vld [vmem:[%s2 + $0x50] sm:$0xff]
  %v830 = vld [vmem:[%s2 + $0x58] sm:$0xff]
  %v831 = vld [vmem:[%s2 + $0x60] sm:$0xff]
  %v832 = vld [vmem:[%s2 + $0x68] sm:$0xff]
  %v833 = vld [vmem:[%s2 + $0x70] sm:$0xff]
  %v834 = vld [vmem:[%s2 + $0x78] sm:$0xff]
  %v835 = vadd.f32 %v819, %v803
  %v836 = vadd.f32 %v820, %v804
  %v837 = vadd.f32 %v821, %v805
  %v838 = vadd.f32 %v822, %v806
  %v839 = vadd.f32 %v823, %v807
  %v840 = vadd.f32 %v824, %v808
  %v841 = vadd.f32 %v825, %v809
  %v842 = vadd.f32 %v826, %v810
  %v843 = vadd.f32 %v827, %v811
  %v844 = vadd.f32 %v828, %v812
  %v845 = vadd.f32 %v829, %v813
  %v846 = vadd.f32 %v830, %v814
  %v847 = vadd.f32 %v831, %v815
  %v848 = vadd.f32 %v832, %v816
  %v849 = vadd.f32 %v833, %v817
  %v850 = vadd.f32 %v834, %v818
  %851 = vst [vmem:[%s2] sm:$0xff] %v835
  %852 = vst [vmem:[%s2 + $0x8] sm:$0xff] %v836
  %853 = vst [vmem:[%s2 + $0x10] sm:$0xff] %v837
  %854 = vst [vmem:[%s2 + $0x18] sm:$0xff] %v838
  %855 = vst [vmem:[%s2 + $0x20] sm:$0xff] %v839
  %856 = vst [vmem:[%s2 + $0x28] sm:$0xff] %v840
  %857 = vst [vmem:[%s2 + $0x30] sm:$0xff] %v841
  %858 = vst [vmem:[%s2 + $0x38] sm:$0xff] %v842
  %859 = vst [vmem:[%s2 + $0x40] sm:$0xff] %v843
  %860 = vst [vmem:[%s2 + $0x48] sm:$0xff] %v844
  %861 = vst [vmem:[%s2 + $0x50] sm:$0xff] %v845
  %862 = vst [vmem:[%s2 + $0x58] sm:$0xff] %v846
  %863 = vst [vmem:[%s2 + $0x60] sm:$0xff] %v847
  %864 = vst [vmem:[%s2 + $0x68] sm:$0xff] %v848
  %865 = vst [vmem:[%s2 + $0x70] sm:$0xff] %v849
  %866 = vst [vmem:[%s2 + $0x78] sm:$0xff] %v850
  %v867 = vadd.f32 %v681, 1e-05
  %v868 = vadd.f32 %v688, 1e-05
  %v869 = vadd.f32 %v695, 1e-05
  %v870 = vadd.f32 %v702, 1e-05
  %v871 = vadd.f32 %v709, 1e-05
  %v872 = vadd.f32 %v716, 1e-05
  %v873 = vadd.f32 %v723, 1e-05
  %v874 = vadd.f32 %v730, 1e-05
  %v875 = vadd.f32 %v737, 1e-05
  %v876 = vadd.f32 %v744, 1e-05
  %v877 = vadd.f32 %v751, 1e-05
  %v878 = vadd.f32 %v758, 1e-05
  %v879 = vadd.f32 %v765, 1e-05
  %v880 = vadd.f32 %v772, 1e-05
  %v881 = vadd.f32 %v779, 1e-05
  %v882 = vadd.f32 %v786, 1e-05
  %v883 = vadd.f32 %v569, 1e-05
  %v884 = vadd.f32 %v576, 1e-05
  %v885 = vadd.f32 %v583, 1e-05
  %v886 = vadd.f32 %v590, 1e-05
  %v887 = vadd.f32 %v597, 1e-05
  %v888 = vadd.f32 %v604, 1e-05
  %v889 = vadd.f32 %v611, 1e-05
  %v890 = vadd.f32 %v618, 1e-05
  %v891 = vadd.f32 %v625, 1e-05
  %v892 = vadd.f32 %v632, 1e-05
  %v893 = vadd.f32 %v639, 1e-05
  %v894 = vadd.f32 %v646, 1e-05
  %v895 = vadd.f32 %v653, 1e-05
  %v896 = vadd.f32 %v660, 1e-05
  %v897 = vadd.f32 %v667, 1e-05
  %v898 = vadd.f32 %v674, 1e-05
  %v899 = vrcp.pop %v883
  %v900 = vrcp.pop %v884
  %v901 = vrcp.pop %v885
  %v902 = vrcp.pop %v886
  %v903 = vrcp.pop %v887
  %v904 = vrcp.pop %v888
  %v905 = vrcp.pop %v889
  %v906 = vrcp.pop %v890
  %v907 = vrcp.pop %v891
  %v908 = vrcp.pop %v892
  %v909 = vrcp.pop %v893
  %v910 = vrcp.pop %v894
  %v911 = vrcp.pop %v895
  %v912 = vrcp.pop %v896
  %v913 = vrcp.pop %v897
  %v914 = vrcp.pop %v898
  %v915 = vmul.f32 %v867, %v899
  %v916 = vmul.f32 %v868, %v900
  %v917 = vmul.f32 %v869, %v901
  %v918 = vmul.f32 %v870, %v902
  %v919 = vmul.f32 %v871, %v903
  %v920 = vmul.f32 %v872, %v904
  %v921 = vmul.f32 %v873, %v905
  %v922 = vmul.f32 %v874, %v906
  %v923 = vmul.f32 %v875, %v907
  %v924 = vmul.f32 %v876, %v908
  %v925 = vmul.f32 %v877, %v909
  %v926 = vmul.f32 %v878, %v910
  %v927 = vmul.f32 %v879, %v911
  %v928 = vmul.f32 %v880, %v912
  %v929 = vmul.f32 %v881, %v913
  %v930 = vmul.f32 %v882, %v914
  %v931 = vlog2.pop %v915
  %v932 = vmul.f32 %v931, 0.6931472
  %v933 = vlog2.pop %v916
  %v934 = vmul.f32 %v933, 0.6931472
  %v935 = vlog2.pop %v917
  %v936 = vmul.f32 %v935, 0.6931472
  %v937 = vlog2.pop %v918
  %v938 = vmul.f32 %v937, 0.6931472
  %v939 = vlog2.pop %v919
  %v940 = vmul.f32 %v939, 0.6931472
  %v941 = vlog2.pop %v920
  %v942 = vmul.f32 %v941, 0.6931472
  %v943 = vlog2.pop %v921
  %v944 = vmul.f32 %v943, 0.6931472
  %v945 = vlog2.pop %v922
  %v946 = vmul.f32 %v945, 0.6931472
  %v947 = vlog2.pop %v923
  %v948 = vmul.f32 %v947, 0.6931472
  %v949 = vlog2.pop %v924
  %v950 = vmul.f32 %v949, 0.6931472
  %v951 = vlog2.pop %v925
  %v952 = vmul.f32 %v951, 0.6931472
  %v953 = vlog2.pop %v926
  %v954 = vmul.f32 %v953, 0.6931472
  %v955 = vlog2.pop %v927
  %v956 = vmul.f32 %v955, 0.6931472
  %v957 = vlog2.pop %v928
  %v958 = vmul.f32 %v957, 0.6931472
  %v959 = vlog2.pop %v929
  %v960 = vmul.f32 %v959, 0.6931472
  %v961 = vlog2.pop %v930
  %v962 = vmul.f32 %v961, 0.6931472
  %v963 = vand.u32 2147483647, %v932
  %v964 = vand.u32 2147483647, %v934
  %v965 = vand.u32 2147483647, %v936
  %v966 = vand.u32 2147483647, %v938
  %v967 = vand.u32 2147483647, %v940
  %v968 = vand.u32 2147483647, %v942
  %v969 = vand.u32 2147483647, %v944
  %v970 = vand.u32 2147483647, %v946
  %v971 = vand.u32 2147483647, %v948
  %v972 = vand.u32 2147483647, %v950
  %v973 = vand.u32 2147483647, %v952
  %v974 = vand.u32 2147483647, %v954
  %v975 = vand.u32 2147483647, %v956
  %v976 = vand.u32 2147483647, %v958
  %v977 = vand.u32 2147483647, %v960
  %v978 = vand.u32 2147483647, %v962
  %v979 = vld [vmem:[%s3] sm:$0xff]
  %v980 = vld [vmem:[%s3 + $0x8] sm:$0xff]
  %v981 = vld [vmem:[%s3 + $0x10] sm:$0xff]
  %v982 = vld [vmem:[%s3 + $0x18] sm:$0xff]
  %v983 = vld [vmem:[%s3 + $0x20] sm:$0xff]
  %v984 = vld [vmem:[%s3 + $0x28] sm:$0xff]
  %v985 = vld [vmem:[%s3 + $0x30] sm:$0xff]
  %v986 = vld [vmem:[%s3 + $0x38] sm:$0xff]
  %v987 = vld [vmem:[%s3 + $0x40] sm:$0xff]
  %v988 = vld [vmem:[%s3 + $0x48] sm:$0xff]
  %v989 = vld [vmem:[%s3 + $0x50] sm:$0xff]
  %v990 = vld [vmem:[%s3 + $0x58] sm:$0xff]
  %v991 = vld [vmem:[%s3 + $0x60] sm:$0xff]
  %v992 = vld [vmem:[%s3 + $0x68] sm:$0xff]
  %v993 = vld [vmem:[%s3 + $0x70] sm:$0xff]
  %v994 = vld [vmem:[%s3 + $0x78] sm:$0xff]
  %v995 = vadd.f32 %v979, %v963
  %v996 = vadd.f32 %v980, %v964
  %v997 = vadd.f32 %v981, %v965
  %v998 = vadd.f32 %v982, %v966
  %v999 = vadd.f32 %v983, %v967
  %v1000 = vadd.f32 %v984, %v968
  %v1001 = vadd.f32 %v985, %v969
  %v1002 = vadd.f32 %v986, %v970
  %v1003 = vadd.f32 %v987, %v971
  %v1004 = vadd.f32 %v988, %v972
  %v1005 = vadd.f32 %v989, %v973
  %v1006 = vadd.f32 %v990, %v974
  %v1007 = vadd.f32 %v991, %v975
  %v1008 = vadd.f32 %v992, %v976
  %v1009 = vadd.f32 %v993, %v977
  %v1010 = vadd.f32 %v994, %v978
  %1011 = vst [vmem:[%s3] sm:$0xff] %v995
  %1012 = vst [vmem:[%s3 + $0x8] sm:$0xff] %v996
  %1013 = vst [vmem:[%s3 + $0x10] sm:$0xff] %v997
  %1014 = vst [vmem:[%s3 + $0x18] sm:$0xff] %v998
  %1015 = vst [vmem:[%s3 + $0x20] sm:$0xff] %v999
  %1016 = vst [vmem:[%s3 + $0x28] sm:$0xff] %v1000
  %1017 = vst [vmem:[%s3 + $0x30] sm:$0xff] %v1001
  %1018 = vst [vmem:[%s3 + $0x38] sm:$0xff] %v1002
  %1019 = vst [vmem:[%s3 + $0x40] sm:$0xff] %v1003
  %1020 = vst [vmem:[%s3 + $0x48] sm:$0xff] %v1004
  %1021 = vst [vmem:[%s3 + $0x50] sm:$0xff] %v1005
  %1022 = vst [vmem:[%s3 + $0x58] sm:$0xff] %v1006
  %1023 = vst [vmem:[%s3 + $0x60] sm:$0xff] %v1007
  %1024 = vst [vmem:[%s3 + $0x68] sm:$0xff] %v1008
  %1025 = vst [vmem:[%s3 + $0x70] sm:$0xff] %v1009
  %1026 = vst [vmem:[%s3 + $0x78] sm:$0xff] %v1010
  // Predicated region
  $region14: #{_multi_scale_spectral_loss.6} parent=0 // pred_check
    _
  $region15: #{_multi_scale_spectral_loss.6} parent=0 // pred_check_branch
    %1028 = sbr.rel (0) target = $region17
  $region16: #{_multi_scale_spectral_loss.6} parent=0 // pred_region
    _
  $region17: #{_multi_scale_spectral_loss.6} parent=0 // pred_fallthru
    _
  // Predicated region
  $region18: #{_multi_scale_spectral_loss.6} parent=0 // pred_check
    _
  $region19: #{_multi_scale_spectral_loss.6} parent=0 // pred_check_branch
    %1030 = sbr.rel (0) target = $region21
  $region20: #{_multi_scale_spectral_loss.6} parent=0 // pred_region
    _
  $region21: #{_multi_scale_spectral_loss.6} parent=0 // pred_fallthru
    _
  // Predicated region
  $region22: #{_multi_scale_spectral_loss.6} parent=0 // pred_check
    _
  $region23: #{_multi_scale_spectral_loss.6} parent=0 // pred_check_branch
    %1032 = sbr.rel (0) target = $region25
  $region24: #{_multi_scale_spectral_loss.6} parent=0 // pred_region
    _
  $region25: #{_multi_scale_spectral_loss.6} parent=0 // pred_fallthru
    _
  // Predicated region
  $region26: #{_multi_scale_spectral_loss.6} parent=0 // pred_check
    _
  $region27: #{_multi_scale_spectral_loss.6} parent=0 // pred_check_branch
    %1034 = sbr.rel (0) target = $region29
  $region28: #{_multi_scale_spectral_loss.6} parent=0 // pred_region
    _
  $region29: #{_multi_scale_spectral_loss.6} parent=0 // pred_fallthru
    _

// kernel: _multi_scale_spectral_loss.7
$region0: #{_multi_scale_spectral_loss.7}
  #allocation0 [shape = 'u32[]', space=smem, size = 0x4, offset = 0x4, fixed_abs, tag = 'smem constant byte address 0x4 - core index']
  #allocation1 [shape = 'u32[144,128]{1,0:T(1,128)}', space=vmem, size = 0x12000, scoped, tag = 'internal scratch']
  %s0 = inlined_call_operand.vmem [shape: bf16[2,256,64], index: 0, kind: input, shape index: {}]
  %s1 = inlined_call_operand.vmem [shape: bf16[64,256], index: 1, kind: input, shape index: {}]
  %s2 = inlined_call_operand.vmem [shape: f32[256,128], index: 2, kind: output, shape index: {0}]
  %s3 = inlined_call_operand.vmem [shape: f32[256,128], index: 3, kind: output, shape index: {1}]
  %4 = xla_tuple %s2, %s3
  %s5 = sld [smem:[#allocation0]]
  $region30: #{_multi_scale_spectral_loss.7} parent=0
    _
  %s7 = ssub.s32 1, %s5
  %s8 = scalar_select 0, %s7, %s5
  // Predicated region
  $region2: #{_multi_scale_spectral_loss.7} parent=0 // pred_check
    _
  $region3: #{_multi_scale_spectral_loss.7} parent=0 // pred_check_branch
    %10 = sbr.rel (0) target = $region5
  $region4: #{_multi_scale_spectral_loss.7} parent=0 // pred_region
    _
  $region5: #{_multi_scale_spectral_loss.7} parent=0 // pred_fallthru
    _
  // Predicated region
  $region6: #{_multi_scale_spectral_loss.7} parent=0 // pred_check
    _
  $region7: #{_multi_scale_spectral_loss.7} parent=0 // pred_check_branch
    %12 = sbr.rel (0) target = $region9
  $region8: #{_multi_scale_spectral_loss.7} parent=0 // pred_region
    _
  $region9: #{_multi_scale_spectral_loss.7} parent=0 // pred_fallthru
    _
  %p14 = scmp.eq.s32.totalorder 0, 0
  // Predicated region
  $region10: #{_multi_scale_spectral_loss.7} parent=0 // pred_check
    %p15 = pneg %p14
  $region11: #{_multi_scale_spectral_loss.7} parent=0 // pred_check_branch
    %17 = sbr.rel (%p15) target = $region13
  $region12: #{_multi_scale_spectral_loss.7} parent=0 // pred_region
    %18 = vst [vmem:[%s2] sm:$0xff] 0.0
    %19 = vst [vmem:[%s2 + $0x8] sm:$0xff] 0.0
    %20 = vst [vmem:[%s2 + $0x10] sm:$0xff] 0.0
    %21 = vst [vmem:[%s2 + $0x18] sm:$0xff] 0.0
    %22 = vst [vmem:[%s2 + $0x20] sm:$0xff] 0.0
    %23 = vst [vmem:[%s2 + $0x28] sm:$0xff] 0.0
    %24 = vst [vmem:[%s2 + $0x30] sm:$0xff] 0.0
    %25 = vst [vmem:[%s2 + $0x38] sm:$0xff] 0.0
    %26 = vst [vmem:[%s2 + $0x40] sm:$0xff] 0.0
    %27 = vst [vmem:[%s2 + $0x48] sm:$0xff] 0.0
    %28 = vst [vmem:[%s2 + $0x50] sm:$0xff] 0.0
    %29 = vst [vmem:[%s2 + $0x58] sm:$0xff] 0.0
    %30 = vst [vmem:[%s2 + $0x60] sm:$0xff] 0.0
    %31 = vst [vmem:[%s2 + $0x68] sm:$0xff] 0.0
    %32 = vst [vmem:[%s2 + $0x70] sm:$0xff] 0.0
    %33 = vst [vmem:[%s2 + $0x78] sm:$0xff] 0.0
    %34 = vst [vmem:[%s2 + $0x80] sm:$0xff] 0.0
    %35 = vst [vmem:[%s2 + $0x88] sm:$0xff] 0.0
    %36 = vst [vmem:[%s2 + $0x90] sm:$0xff] 0.0
    %37 = vst [vmem:[%s2 + $0x98] sm:$0xff] 0.0
    %38 = vst [vmem:[%s2 + $0xa0] sm:$0xff] 0.0
    %39 = vst [vmem:[%s2 + $0xa8] sm:$0xff] 0.0
    %40 = vst [vmem:[%s2 + $0xb0] sm:$0xff] 0.0
    %41 = vst [vmem:[%s2 + $0xb8] sm:$0xff] 0.0
    %42 = vst [vmem:[%s2 + $0xc0] sm:$0xff] 0.0
    %43 = vst [vmem:[%s2 + $0xc8] sm:$0xff] 0.0
    %44 = vst [vmem:[%s2 + $0xd0] sm:$0xff] 0.0
    %45 = vst [vmem:[%s2 + $0xd8] sm:$0xff] 0.0
    %46 = vst [vmem:[%s2 + $0xe0] sm:$0xff] 0.0
    %47 = vst [vmem:[%s2 + $0xe8] sm:$0xff] 0.0
    %48 = vst [vmem:[%s2 + $0xf0] sm:$0xff] 0.0
    %49 = vst [vmem:[%s2 + $0xf8] sm:$0xff] 0.0
    %50 = vst [vmem:[%s3] sm:$0xff] 0.0
    %51 = vst [vmem:[%s3 + $0x8] sm:$0xff] 0.0
    %52 = vst [vmem:[%s3 + $0x10] sm:$0xff] 0.0
    %53 = vst [vmem:[%s3 + $0x18] sm:$0xff] 0.0
    %54 = vst [vmem:[%s3 + $0x20] sm:$0xff] 0.0
    %55 = vst [vmem:[%s3 + $0x28] sm:$0xff] 0.0
    %56 = vst [vmem:[%s3 + $0x30] sm:$0xff] 0.0
    %57 = vst [vmem:[%s3 + $0x38] sm:$0xff] 0.0
    %58 = vst [vmem:[%s3 + $0x40] sm:$0xff] 0.0
    %59 = vst [vmem:[%s3 + $0x48] sm:$0xff] 0.0
    %60 = vst [vmem:[%s3 + $0x50] sm:$0xff] 0.0
    %61 = vst [vmem:[%s3 + $0x58] sm:$0xff] 0.0
    %62 = vst [vmem:[%s3 + $0x60] sm:$0xff] 0.0
    %63 = vst [vmem:[%s3 + $0x68] sm:$0xff] 0.0
    %64 = vst [vmem:[%s3 + $0x70] sm:$0xff] 0.0
    %65 = vst [vmem:[%s3 + $0x78] sm:$0xff] 0.0
    %66 = vst [vmem:[%s3 + $0x80] sm:$0xff] 0.0
    %67 = vst [vmem:[%s3 + $0x88] sm:$0xff] 0.0
    %68 = vst [vmem:[%s3 + $0x90] sm:$0xff] 0.0
    %69 = vst [vmem:[%s3 + $0x98] sm:$0xff] 0.0
    %70 = vst [vmem:[%s3 + $0xa0] sm:$0xff] 0.0
    %71 = vst [vmem:[%s3 + $0xa8] sm:$0xff] 0.0
    %72 = vst [vmem:[%s3 + $0xb0] sm:$0xff] 0.0
    %73 = vst [vmem:[%s3 + $0xb8] sm:$0xff] 0.0
    %74 = vst [vmem:[%s3 + $0xc0] sm:$0xff] 0.0
    %75 = vst [vmem:[%s3 + $0xc8] sm:$0xff] 0.0
    %76 = vst [vmem:[%s3 + $0xd0] sm:$0xff] 0.0
    %77 = vst [vmem:[%s3 + $0xd8] sm:$0xff] 0.0
    %78 = vst [vmem:[%s3 + $0xe0] sm:$0xff] 0.0
    %79 = vst [vmem:[%s3 + $0xe8] sm:$0xff] 0.0
    %80 = vst [vmem:[%s3 + $0xf0] sm:$0xff] 0.0
    %81 = vst [vmem:[%s3 + $0xf8] sm:$0xff] 0.0
  $region13: #{_multi_scale_spectral_loss.7} parent=0 // pred_fallthru
    _
  %v82 = vld [vmem:[%s0] sm:$0xf]
  %v83 = vld [vmem:[%s0 + $0x4] sm:$0xf]
  %v84 = vld [vmem:[%s0 + $0x8] sm:$0xf]
  %v85 = vld [vmem:[%s0 + $0xc] sm:$0xf]
  %v86 = vld [vmem:[%s0 + $0x10] sm:$0xf]
  %v87 = vld [vmem:[%s0 + $0x14] sm:$0xf]
  %v88 = vld [vmem:[%s0 + $0x18] sm:$0xf]
  %v89 = vld [vmem:[%s0 + $0x1c] sm:$0xf]
  %v90 = vld [vmem:[%s0 + $0x20] sm:$0xf]
  %v91 = vld [vmem:[%s0 + $0x24] sm:$0xf]
  %v92 = vld [vmem:[%s0 + $0x28] sm:$0xf]
  %v93 = vld [vmem:[%s0 + $0x2c] sm:$0xf]
  %v94 = vld [vmem:[%s0 + $0x30] sm:$0xf]
  %v95 = vld [vmem:[%s0 + $0x34] sm:$0xf]
  %v96 = vld [vmem:[%s0 + $0x38] sm:$0xf]
  %v97 = vld [vmem:[%s0 + $0x3c] sm:$0xf]
  %v98 = vld [vmem:[%s0 + $0x40] sm:$0xf]
  %v99 = vld [vmem:[%s0 + $0x44] sm:$0xf]
  %v100 = vld [vmem:[%s0 + $0x48] sm:$0xf]
  %v101 = vld [vmem:[%s0 + $0x4c] sm:$0xf]
  %v102 = vld [vmem:[%s0 + $0x50] sm:$0xf]
  %v103 = vld [vmem:[%s0 + $0x54] sm:$0xf]
  %v104 = vld [vmem:[%s0 + $0x58] sm:$0xf]
  %v105 = vld [vmem:[%s0 + $0x5c] sm:$0xf]
  %v106 = vld [vmem:[%s0 + $0x60] sm:$0xf]
  %v107 = vld [vmem:[%s0 + $0x64] sm:$0xf]
  %v108 = vld [vmem:[%s0 + $0x68] sm:$0xf]
  %v109 = vld [vmem:[%s0 + $0x6c] sm:$0xf]
  %v110 = vld [vmem:[%s0 + $0x70] sm:$0xf]
  %v111 = vld [vmem:[%s0 + $0x74] sm:$0xf]
  %v112 = vld [vmem:[%s0 + $0x78] sm:$0xf]
  %v113 = vld [vmem:[%s0 + $0x7c] sm:$0xf]
  %v114 = vld [vmem:[%s0 + $0x80] sm:$0xf]
  %v115 = vld [vmem:[%s0 + $0x84] sm:$0xf]
  %v116 = vld [vmem:[%s0 + $0x88] sm:$0xf]
  %v117 = vld [vmem:[%s0 + $0x8c] sm:$0xf]
  %v118 = vld [vmem:[%s0 + $0x90] sm:$0xf]
  %v119 = vld [vmem:[%s0 + $0x94] sm:$0xf]
  %v120 = vld [vmem:[%s0 + $0x98] sm:$0xf]
  %v121 = vld [vmem:[%s0 + $0x9c] sm:$0xf]
  %v122 = vld [vmem:[%s0 + $0xa0] sm:$0xf]
  %v123 = vld [vmem:[%s0 + $0xa4] sm:$0xf]
  %v124 = vld [vmem:[%s0 + $0xa8] sm:$0xf]
  %v125 = vld [vmem:[%s0 + $0xac] sm:$0xf]
  %v126 = vld [vmem:[%s0 + $0xb0] sm:$0xf]
  %v127 = vld [vmem:[%s0 + $0xb4] sm:$0xf]
  %v128 = vld [vmem:[%s0 + $0xb8] sm:$0xf]
  %v129 = vld [vmem:[%s0 + $0xbc] sm:$0xf]
  %v130 = vld [vmem:[%s0 + $0xc0] sm:$0xf]
  %v131 = vld [vmem:[%s0 + $0xc4] sm:$0xf]
  %v132 = vld [vmem:[%s0 + $0xc8] sm:$0xf]
  %v133 = vld [vmem:[%s0 + $0xcc] sm:$0xf]
  %v134 = vld [vmem:[%s0 + $0xd0] sm:$0xf]
  %v135 = vld [vmem:[%s0 + $0xd4] sm:$0xf]
  %v136 = vld [vmem:[%s0 + $0xd8] sm:$0xf]
  %v137 = vld [vmem:[%s0 + $0xdc] sm:$0xf]
  %v138 = vld [vmem:[%s0 + $0xe0] sm:$0xf]
  %v139 = vld [vmem:[%s0 + $0xe4] sm:$0xf]
  %v140 = vld [vmem:[%s0 + $0xe8] sm:$0xf]
  %v141 = vld [vmem:[%s0 + $0xec] sm:$0xf]
  %v142 = vld [vmem:[%s0 + $0xf0] sm:$0xf]
  %v143 = vld [vmem:[%s0 + $0xf4] sm:$0xf]
  %v144 = vld [vmem:[%s0 + $0xf8] sm:$0xf]
  %v145 = vld [vmem:[%s0 + $0xfc] sm:$0xf]
  %v146 = vld [vmem:[%s1] sm:$0xff]
  %v147 = vld [vmem:[%s1 + $0x8] sm:$0xff]
  %v148 = vld [vmem:[%s1 + $0x10] sm:$0xff]
  %v149 = vld [vmem:[%s1 + $0x18] sm:$0xff]
  %v150 = vld [vmem:[%s1 + $0x20] sm:$0xff]
  %v151 = vld [vmem:[%s1 + $0x28] sm:$0xff]
  %v152 = vld [vmem:[%s1 + $0x30] sm:$0xff]
  %v153 = vld [vmem:[%s1 + $0x38] sm:$0xff]
  %v218 = vunpack.c.l.b16 %v82
  %v219 = vunpack.c.l.b16 %v83
  %v220 = vunpack.c.l.b16 %v84
  %v221 = vunpack.c.l.b16 %v85
  %v222 = vunpack.c.l.b16 %v86
  %v223 = vunpack.c.l.b16 %v87
  %v224 = vunpack.c.l.b16 %v88
  %v225 = vunpack.c.l.b16 %v89
  %v226 = vunpack.c.l.b16 %v90
  %v227 = vunpack.c.l.b16 %v91
  %v228 = vunpack.c.l.b16 %v92
  %v229 = vunpack.c.l.b16 %v93
  %v230 = vunpack.c.l.b16 %v94
  %v231 = vunpack.c.l.b16 %v95
  %v232 = vunpack.c.l.b16 %v96
  %v233 = vunpack.c.l.b16 %v97
  %v234 = vunpack.c.l.b16 %v98
  %v235 = vunpack.c.l.b16 %v99
  %v236 = vunpack.c.l.b16 %v100
  %v237 = vunpack.c.l.b16 %v101
  %v238 = vunpack.c.l.b16 %v102
  %v239 = vunpack.c.l.b16 %v103
  %v240 = vunpack.c.l.b16 %v104
  %v241 = vunpack.c.l.b16 %v105
  %v242 = vunpack.c.l.b16 %v106
  %v243 = vunpack.c.l.b16 %v107
  %v244 = vunpack.c.l.b16 %v108
  %v245 = vunpack.c.l.b16 %v109
  %v246 = vunpack.c.l.b16 %v110
  %v247 = vunpack.c.l.b16 %v111
  %v248 = vunpack.c.l.b16 %v112
  %v249 = vunpack.c.l.b16 %v113
  %v250 = vunpack.c.l.b16 %v114
  %v251 = vunpack.c.l.b16 %v115
  %v252 = vunpack.c.l.b16 %v116
  %v253 = vunpack.c.l.b16 %v117
  %v254 = vunpack.c.l.b16 %v118
  %v255 = vunpack.c.l.b16 %v119
  %v256 = vunpack.c.l.b16 %v120
  %v257 = vunpack.c.l.b16 %v121
  %v258 = vunpack.c.l.b16 %v122
  %v259 = vunpack.c.l.b16 %v123
  %v260 = vunpack.c.l.b16 %v124
  %v261 = vunpack.c.l.b16 %v125
  %v262 = vunpack.c.l.b16 %v126
  %v263 = vunpack.c.l.b16 %v127
  %v264 = vunpack.c.l.b16 %v128
  %v265 = vunpack.c.l.b16 %v129
  %v266 = vunpack.c.l.b16 %v130
  %v267 = vunpack.c.l.b16 %v131
  %v268 = vunpack.c.l.b16 %v132
  %v269 = vunpack.c.l.b16 %v133
  %v270 = vunpack.c.l.b16 %v134
  %v271 = vunpack.c.l.b16 %v135
  %v272 = vunpack.c.l.b16 %v136
  %v273 = vunpack.c.l.b16 %v137
  %v274 = vunpack.c.l.b16 %v138
  %v275 = vunpack.c.l.b16 %v139
  %v276 = vunpack.c.l.b16 %v140
  %v277 = vunpack.c.l.b16 %v141
  %v278 = vunpack.c.l.b16 %v142
  %v279 = vunpack.c.l.b16 %v143
  %v280 = vunpack.c.l.b16 %v144
  %v281 = vunpack.c.l.b16 %v145
  %v282 = vpack.c.b16 %v219, %v218
  %v283 = vpack.c.b16 %v221, %v220
  %v284 = vpack.c.b16 %v223, %v222
  %v285 = vpack.c.b16 %v225, %v224
  %v286 = vpack.c.b16 %v227, %v226
  %v287 = vpack.c.b16 %v229, %v228
  %v288 = vpack.c.b16 %v231, %v230
  %v289 = vpack.c.b16 %v233, %v232
  %v290 = vpack.c.b16 %v235, %v234
  %v291 = vpack.c.b16 %v237, %v236
  %v292 = vpack.c.b16 %v239, %v238
  %v293 = vpack.c.b16 %v241, %v240
  %v294 = vpack.c.b16 %v243, %v242
  %v295 = vpack.c.b16 %v245, %v244
  %v296 = vpack.c.b16 %v247, %v246
  %v297 = vpack.c.b16 %v249, %v248
  %v298 = vpack.c.b16 %v251, %v250
  %v299 = vpack.c.b16 %v253, %v252
  %v300 = vpack.c.b16 %v255, %v254
  %v301 = vpack.c.b16 %v257, %v256
  %v302 = vpack.c.b16 %v259, %v258
  %v303 = vpack.c.b16 %v261, %v260
  %v304 = vpack.c.b16 %v263, %v262
  %v305 = vpack.c.b16 %v265, %v264
  %v306 = vpack.c.b16 %v267, %v266
  %v307 = vpack.c.b16 %v269, %v268
  %v308 = vpack.c.b16 %v271, %v270
  %v309 = vpack.c.b16 %v273, %v272
  %v310 = vpack.c.b16 %v275, %v274
  %v311 = vpack.c.b16 %v277, %v276
  %v312 = vpack.c.b16 %v279, %v278
  %v313 = vpack.c.b16 %v281, %v280
  %v322 = vunpack.c.l.b16 %v146
  %v323 = vunpack.c.h.b16 %v146
  %v324 = vunpack.c.l.b16 %v147
  %v325 = vunpack.c.h.b16 %v147
  %v326 = vunpack.c.l.b16 %v148
  %v327 = vunpack.c.h.b16 %v148
  %v328 = vunpack.c.l.b16 %v149
  %v329 = vunpack.c.h.b16 %v149
  %v330 = vunpack.c.l.b16 %v150
  %v331 = vunpack.c.h.b16 %v150
  %v332 = vunpack.c.l.b16 %v151
  %v333 = vunpack.c.h.b16 %v151
  %v334 = vunpack.c.l.b16 %v152
  %v335 = vunpack.c.h.b16 %v152
  %v336 = vunpack.c.l.b16 %v153
  %v337 = vunpack.c.h.b16 %v153
  %v338 = vpack.c.b16 %v324, %v322
  %v339 = vpack.c.b16 %v325, %v323
  %v340 = vpack.c.b16 %v328, %v326
  %v341 = vpack.c.b16 %v329, %v327
  %v342 = vpack.c.b16 %v332, %v330
  %v343 = vpack.c.b16 %v333, %v331
  %v344 = vpack.c.b16 %v336, %v334
  %v345 = vpack.c.b16 %v337, %v335
  %vm354 = vcmask 523264
  %v356 = vsel %vm354, %v282, 0
  %v359 = vsel %vm354, %v283, 0
  %v362 = vsel %vm354, %v284, 0
  %v365 = vsel %vm354, %v285, 0
  %v368 = vsel %vm354, %v286, 0
  %v371 = vsel %vm354, %v287, 0
  %v374 = vsel %vm354, %v288, 0
  %v377 = vsel %vm354, %v289, 0
  %v380 = vsel %vm354, %v290, 0
  %v383 = vsel %vm354, %v291, 0
  %v386 = vsel %vm354, %v292, 0
  %v389 = vsel %vm354, %v293, 0
  %v392 = vsel %vm354, %v294, 0
  %v395 = vsel %vm354, %v295, 0
  %v398 = vsel %vm354, %v296, 0
  %v401 = vsel %vm354, %v297, 0
  %v404 = vsel %vm354, %v298, 0
  %v407 = vsel %vm354, %v299, 0
  %v410 = vsel %vm354, %v300, 0
  %v413 = vsel %vm354, %v301, 0
  %v416 = vsel %vm354, %v302, 0
  %v419 = vsel %vm354, %v303, 0
  %v422 = vsel %vm354, %v304, 0
  %v425 = vsel %vm354, %v305, 0
  %v428 = vsel %vm354, %v306, 0
  %v431 = vsel %vm354, %v307, 0
  %v434 = vsel %vm354, %v308, 0
  %v437 = vsel %vm354, %v309, 0
  %v440 = vsel %vm354, %v310, 0
  %v443 = vsel %vm354, %v311, 0
  %v446 = vsel %vm354, %v312, 0
  %v449 = vsel %vm354, %v313, 0
  %451 = vmatprep.subr.bf16.mxu0 0
  %452 = vmatpush1.bf16.msra.mxu0 0
  %453 = vmatprep.subr.bf16.mxu0 0
  %454 = vmatpush1.bf16.msra.mxu0 0
  %455 = vmatprep.subr.bf16.mxu0 0
  %456 = vmatpush1.bf16.msra.mxu0 0
  %457 = vmatprep.subr.bf16.mxu0 0
  %458 = vmatpush1.bf16.msra.mxu0 0
  %459 = vmatprep.subr.bf16.mxu0 %v345
  %460 = vmatpush1.bf16.msra.mxu0 %v344
  %461 = vmatprep.subr.bf16.mxu0 %v343
  %462 = vmatpush1.bf16.msra.mxu0 %v342
  %463 = vmatprep.subr.bf16.mxu0 %v341
  %464 = vmatpush1.bf16.msra.mxu0 %v340
  %465 = vmatprep.subr.bf16.mxu0 %v339
  %466 = vmatpush1.bf16.msra.mxu0 %v338
  %467 = vmatprep.subr.bf16.mxu0 0
  %468 = vmatpush2.bf16.msra.mxu0 0
  %469 = vmatprep.subr.bf16.mxu0 0
  %470 = vmatpush2.bf16.msra.mxu0 0
  %471 = vmatprep.subr.bf16.mxu0 0
  %472 = vmatpush2.bf16.msra.mxu0 0
  %473 = vmatprep.subr.bf16.mxu0 0
  %474 = vmatpush2.bf16.msra.mxu0 0
  %475 = vmatprep.subr.bf16.mxu0 0
  %476 = vmatpush2.bf16.msra.mxu0 0
  %477 = vmatprep.subr.bf16.mxu0 0
  %478 = vmatpush2.bf16.msra.mxu0 0
  %479 = vmatprep.subr.bf16.mxu0 0
  %480 = vmatpush2.bf16.msra.mxu0 0
  %481 = vmatprep.subr.bf16.mxu0 0
  %482 = vmatpush2.bf16.msra.mxu0 0
  %483 = vmatprep.mubr.bf16.mxu0 0
  %484 = vmatmul.mubr.bf16.gmra.mxu0 %v356
  %v485 = vpop.f32.mrf.mxu0
  %v486 = vadd.f32 0.0, %v485
  %v487 = vpop.f32.mrf.mxu0
  %v488 = vadd.f32 0.0, %v487
  %v489 = vpop.f32.mrf.mxu0
  %v490 = vadd.f32 0.0, %v489
  %v491 = vpop.f32.mrf.mxu0
  %v492 = vadd.f32 0.0, %v491
  %493 = vmatprep.mubr.bf16.mxu0 0
  %494 = vmatmul.mubr.bf16.gmra.mxu0 %v359
  %v495 = vpop.f32.mrf.mxu0
  %v496 = vadd.f32 0.0, %v495
  %v497 = vpop.f32.mrf.mxu0
  %v498 = vadd.f32 0.0, %v497
  %v499 = vpop.f32.mrf.mxu0
  %v500 = vadd.f32 0.0, %v499
  %v501 = vpop.f32.mrf.mxu0
  %v502 = vadd.f32 0.0, %v501
  %503 = vmatprep.mubr.bf16.mxu0 0
  %504 = vmatmul.mubr.bf16.gmra.mxu0 %v362
  %v505 = vpop.f32.mrf.mxu0
  %v506 = vadd.f32 0.0, %v505
  %v507 = vpop.f32.mrf.mxu0
  %v508 = vadd.f32 0.0, %v507
  %v509 = vpop.f32.mrf.mxu0
  %v510 = vadd.f32 0.0, %v509
  %v511 = vpop.f32.mrf.mxu0
  %v512 = vadd.f32 0.0, %v511
  %513 = vmatprep.mubr.bf16.mxu0 0
  %514 = vmatmul.mubr.bf16.gmra.mxu0 %v365
  %v515 = vpop.f32.mrf.mxu0
  %v516 = vadd.f32 0.0, %v515
  %v517 = vpop.f32.mrf.mxu0
  %v518 = vadd.f32 0.0, %v517
  %v519 = vpop.f32.mrf.mxu0
  %v520 = vadd.f32 0.0, %v519
  %v521 = vpop.f32.mrf.mxu0
  %v522 = vadd.f32 0.0, %v521
  %523 = vmatprep.mubr.bf16.mxu0 0
  %524 = vmatmul.mubr.bf16.gmra.mxu0 %v368
  %v525 = vpop.f32.mrf.mxu0
  %v526 = vadd.f32 0.0, %v525
  %v527 = vpop.f32.mrf.mxu0
  %v528 = vadd.f32 0.0, %v527
  %v529 = vpop.f32.mrf.mxu0
  %v530 = vadd.f32 0.0, %v529
  %v531 = vpop.f32.mrf.mxu0
  %v532 = vadd.f32 0.0, %v531
  %533 = vmatprep.mubr.bf16.mxu0 0
  %534 = vmatmul.mubr.bf16.gmra.mxu0 %v371
  %v535 = vpop.f32.mrf.mxu0
  %v536 = vadd.f32 0.0, %v535
  %v537 = vpop.f32.mrf.mxu0
  %v538 = vadd.f32 0.0, %v537
  %v539 = vpop.f32.mrf.mxu0
  %v540 = vadd.f32 0.0, %v539
  %v541 = vpop.f32.mrf.mxu0
  %v542 = vadd.f32 0.0, %v541
  %543 = vmatprep.mubr.bf16.mxu0 0
  %544 = vmatmul.mubr.bf16.gmra.mxu0 %v374
  %v545 = vpop.f32.mrf.mxu0
  %v546 = vadd.f32 0.0, %v545
  %v547 = vpop.f32.mrf.mxu0
  %v548 = vadd.f32 0.0, %v547
  %v549 = vpop.f32.mrf.mxu0
  %v550 = vadd.f32 0.0, %v549
  %v551 = vpop.f32.mrf.mxu0
  %v552 = vadd.f32 0.0, %v551
  %553 = vmatprep.mubr.bf16.mxu0 0
  %554 = vmatmul.mubr.bf16.gmra.mxu0 %v377
  %v555 = vpop.f32.mrf.mxu0
  %v556 = vadd.f32 0.0, %v555
  %v557 = vpop.f32.mrf.mxu0
  %v558 = vadd.f32 0.0, %v557
  %v559 = vpop.f32.mrf.mxu0
  %v560 = vadd.f32 0.0, %v559
  %v561 = vpop.f32.mrf.mxu0
  %v562 = vadd.f32 0.0, %v561
  %563 = vmatprep.mubr.bf16.mxu0 0
  %564 = vmatmul.mubr.bf16.gmra.mxu0 %v380
  %v565 = vpop.f32.mrf.mxu0
  %v566 = vadd.f32 0.0, %v565
  %v567 = vpop.f32.mrf.mxu0
  %v568 = vadd.f32 0.0, %v567
  %v569 = vpop.f32.mrf.mxu0
  %v570 = vadd.f32 0.0, %v569
  %v571 = vpop.f32.mrf.mxu0
  %v572 = vadd.f32 0.0, %v571
  %573 = vmatprep.mubr.bf16.mxu0 0
  %574 = vmatmul.mubr.bf16.gmra.mxu0 %v383
  %v575 = vpop.f32.mrf.mxu0
  %v576 = vadd.f32 0.0, %v575
  %v577 = vpop.f32.mrf.mxu0
  %v578 = vadd.f32 0.0, %v577
  %v579 = vpop.f32.mrf.mxu0
  %v580 = vadd.f32 0.0, %v579
  %v581 = vpop.f32.mrf.mxu0
  %v582 = vadd.f32 0.0, %v581
  %583 = vmatprep.mubr.bf16.mxu0 0
  %584 = vmatmul.mubr.bf16.gmra.mxu0 %v386
  %v585 = vpop.f32.mrf.mxu0
  %v586 = vadd.f32 0.0, %v585
  %v587 = vpop.f32.mrf.mxu0
  %v588 = vadd.f32 0.0, %v587
  %v589 = vpop.f32.mrf.mxu0
  %v590 = vadd.f32 0.0, %v589
  %v591 = vpop.f32.mrf.mxu0
  %v592 = vadd.f32 0.0, %v591
  %593 = vmatprep.mubr.bf16.mxu0 0
  %594 = vmatmul.mubr.bf16.gmra.mxu0 %v389
  %v595 = vpop.f32.mrf.mxu0
  %v596 = vadd.f32 0.0, %v595
  %v597 = vpop.f32.mrf.mxu0
  %v598 = vadd.f32 0.0, %v597
  %v599 = vpop.f32.mrf.mxu0
  %v600 = vadd.f32 0.0, %v599
  %v601 = vpop.f32.mrf.mxu0
  %v602 = vadd.f32 0.0, %v601
  %603 = vmatprep.mubr.bf16.mxu0 0
  %604 = vmatmul.mubr.bf16.gmra.mxu0 %v392
  %v605 = vpop.f32.mrf.mxu0
  %v606 = vadd.f32 0.0, %v605
  %v607 = vpop.f32.mrf.mxu0
  %v608 = vadd.f32 0.0, %v607
  %v609 = vpop.f32.mrf.mxu0
  %v610 = vadd.f32 0.0, %v609
  %v611 = vpop.f32.mrf.mxu0
  %v612 = vadd.f32 0.0, %v611
  %613 = vmatprep.mubr.bf16.mxu0 0
  %614 = vmatmul.mubr.bf16.gmra.mxu0 %v395
  %v615 = vpop.f32.mrf.mxu0
  %v616 = vadd.f32 0.0, %v615
  %v617 = vpop.f32.mrf.mxu0
  %v618 = vadd.f32 0.0, %v617
  %v619 = vpop.f32.mrf.mxu0
  %v620 = vadd.f32 0.0, %v619
  %v621 = vpop.f32.mrf.mxu0
  %v622 = vadd.f32 0.0, %v621
  %623 = vmatprep.mubr.bf16.mxu0 0
  %624 = vmatmul.mubr.bf16.gmra.mxu0 %v398
  %v625 = vpop.f32.mrf.mxu0
  %v626 = vadd.f32 0.0, %v625
  %v627 = vpop.f32.mrf.mxu0
  %v628 = vadd.f32 0.0, %v627
  %v629 = vpop.f32.mrf.mxu0
  %v630 = vadd.f32 0.0, %v629
  %v631 = vpop.f32.mrf.mxu0
  %v632 = vadd.f32 0.0, %v631
  %633 = vmatprep.mubr.bf16.mxu0 0
  %634 = vmatmul.mubr.bf16.gmra.mxu0 %v401
  %v635 = vpop.f32.mrf.mxu0
  %v636 = vadd.f32 0.0, %v635
  %v637 = vpop.f32.mrf.mxu0
  %v638 = vadd.f32 0.0, %v637
  %v639 = vpop.f32.mrf.mxu0
  %v640 = vadd.f32 0.0, %v639
  %v641 = vpop.f32.mrf.mxu0
  %v642 = vadd.f32 0.0, %v641
  %643 = vmatprep.mubr.bf16.mxu0 0
  %644 = vmatmul.mubr.bf16.gmra.mxu0 %v404
  %v645 = vpop.f32.mrf.mxu0
  %v646 = vadd.f32 0.0, %v645
  %v647 = vpop.f32.mrf.mxu0
  %v648 = vadd.f32 0.0, %v647
  %v649 = vpop.f32.mrf.mxu0
  %v650 = vadd.f32 0.0, %v649
  %v651 = vpop.f32.mrf.mxu0
  %v652 = vadd.f32 0.0, %v651
  %653 = vmatprep.mubr.bf16.mxu0 0
  %654 = vmatmul.mubr.bf16.gmra.mxu0 %v407
  %v655 = vpop.f32.mrf.mxu0
  %v656 = vadd.f32 0.0, %v655
  %v657 = vpop.f32.mrf.mxu0
  %v658 = vadd.f32 0.0, %v657
  %v659 = vpop.f32.mrf.mxu0
  %v660 = vadd.f32 0.0, %v659
  %v661 = vpop.f32.mrf.mxu0
  %v662 = vadd.f32 0.0, %v661
  %663 = vmatprep.mubr.bf16.mxu0 0
  %664 = vmatmul.mubr.bf16.gmra.mxu0 %v410
  %v665 = vpop.f32.mrf.mxu0
  %v666 = vadd.f32 0.0, %v665
  %v667 = vpop.f32.mrf.mxu0
  %v668 = vadd.f32 0.0, %v667
  %v669 = vpop.f32.mrf.mxu0
  %v670 = vadd.f32 0.0, %v669
  %v671 = vpop.f32.mrf.mxu0
  %v672 = vadd.f32 0.0, %v671
  %673 = vmatprep.mubr.bf16.mxu0 0
  %674 = vmatmul.mubr.bf16.gmra.mxu0 %v413
  %v675 = vpop.f32.mrf.mxu0
  %v676 = vadd.f32 0.0, %v675
  %v677 = vpop.f32.mrf.mxu0
  %v678 = vadd.f32 0.0, %v677
  %v679 = vpop.f32.mrf.mxu0
  %v680 = vadd.f32 0.0, %v679
  %v681 = vpop.f32.mrf.mxu0
  %v682 = vadd.f32 0.0, %v681
  %683 = vmatprep.mubr.bf16.mxu0 0
  %684 = vmatmul.mubr.bf16.gmra.mxu0 %v416
  %v685 = vpop.f32.mrf.mxu0
  %v686 = vadd.f32 0.0, %v685
  %v687 = vpop.f32.mrf.mxu0
  %v688 = vadd.f32 0.0, %v687
  %v689 = vpop.f32.mrf.mxu0
  %v690 = vadd.f32 0.0, %v689
  %v691 = vpop.f32.mrf.mxu0
  %v692 = vadd.f32 0.0, %v691
  %693 = vmatprep.mubr.bf16.mxu0 0
  %694 = vmatmul.mubr.bf16.gmra.mxu0 %v419
  %v695 = vpop.f32.mrf.mxu0
  %v696 = vadd.f32 0.0, %v695
  %v697 = vpop.f32.mrf.mxu0
  %v698 = vadd.f32 0.0, %v697
  %v699 = vpop.f32.mrf.mxu0
  %v700 = vadd.f32 0.0, %v699
  %v701 = vpop.f32.mrf.mxu0
  %v702 = vadd.f32 0.0, %v701
  %703 = vmatprep.mubr.bf16.mxu0 0
  %704 = vmatmul.mubr.bf16.gmra.mxu0 %v422
  %v705 = vpop.f32.mrf.mxu0
  %v706 = vadd.f32 0.0, %v705
  %v707 = vpop.f32.mrf.mxu0
  %v708 = vadd.f32 0.0, %v707
  %v709 = vpop.f32.mrf.mxu0
  %v710 = vadd.f32 0.0, %v709
  %v711 = vpop.f32.mrf.mxu0
  %v712 = vadd.f32 0.0, %v711
  %713 = vmatprep.mubr.bf16.mxu0 0
  %714 = vmatmul.mubr.bf16.gmra.mxu0 %v425
  %v715 = vpop.f32.mrf.mxu0
  %v716 = vadd.f32 0.0, %v715
  %v717 = vpop.f32.mrf.mxu0
  %v718 = vadd.f32 0.0, %v717
  %v719 = vpop.f32.mrf.mxu0
  %v720 = vadd.f32 0.0, %v719
  %v721 = vpop.f32.mrf.mxu0
  %v722 = vadd.f32 0.0, %v721
  %723 = vmatprep.mubr.bf16.mxu0 0
  %724 = vmatmul.mubr.bf16.gmra.mxu0 %v428
  %v725 = vpop.f32.mrf.mxu0
  %v726 = vadd.f32 0.0, %v725
  %v727 = vpop.f32.mrf.mxu0
  %v728 = vadd.f32 0.0, %v727
  %v729 = vpop.f32.mrf.mxu0
  %v730 = vadd.f32 0.0, %v729
  %v731 = vpop.f32.mrf.mxu0
  %v732 = vadd.f32 0.0, %v731
  %733 = vmatprep.mubr.bf16.mxu0 0
  %734 = vmatmul.mubr.bf16.gmra.mxu0 %v431
  %v735 = vpop.f32.mrf.mxu0
  %v736 = vadd.f32 0.0, %v735
  %v737 = vpop.f32.mrf.mxu0
  %v738 = vadd.f32 0.0, %v737
  %v739 = vpop.f32.mrf.mxu0
  %v740 = vadd.f32 0.0, %v739
  %v741 = vpop.f32.mrf.mxu0
  %v742 = vadd.f32 0.0, %v741
  %743 = vmatprep.mubr.bf16.mxu0 0
  %744 = vmatmul.mubr.bf16.gmra.mxu0 %v434
  %v745 = vpop.f32.mrf.mxu0
  %v746 = vadd.f32 0.0, %v745
  %v747 = vpop.f32.mrf.mxu0
  %v748 = vadd.f32 0.0, %v747
  %v749 = vpop.f32.mrf.mxu0
  %v750 = vadd.f32 0.0, %v749
  %v751 = vpop.f32.mrf.mxu0
  %v752 = vadd.f32 0.0, %v751
  %753 = vmatprep.mubr.bf16.mxu0 0
  %754 = vmatmul.mubr.bf16.gmra.mxu0 %v437
  %v755 = vpop.f32.mrf.mxu0
  %v756 = vadd.f32 0.0, %v755
  %v757 = vpop.f32.mrf.mxu0
  %v758 = vadd.f32 0.0, %v757
  %v759 = vpop.f32.mrf.mxu0
  %v760 = vadd.f32 0.0, %v759
  %v761 = vpop.f32.mrf.mxu0
  %v762 = vadd.f32 0.0, %v761
  %763 = vmatprep.mubr.bf16.mxu0 0
  %764 = vmatmul.mubr.bf16.gmra.mxu0 %v440
  %v765 = vpop.f32.mrf.mxu0
  %v766 = vadd.f32 0.0, %v765
  %v767 = vpop.f32.mrf.mxu0
  %v768 = vadd.f32 0.0, %v767
  %v769 = vpop.f32.mrf.mxu0
  %v770 = vadd.f32 0.0, %v769
  %v771 = vpop.f32.mrf.mxu0
  %v772 = vadd.f32 0.0, %v771
  %773 = vmatprep.mubr.bf16.mxu0 0
  %774 = vmatmul.mubr.bf16.gmra.mxu0 %v443
  %v775 = vpop.f32.mrf.mxu0
  %v776 = vadd.f32 0.0, %v775
  %v777 = vpop.f32.mrf.mxu0
  %v778 = vadd.f32 0.0, %v777
  %v779 = vpop.f32.mrf.mxu0
  %v780 = vadd.f32 0.0, %v779
  %v781 = vpop.f32.mrf.mxu0
  %v782 = vadd.f32 0.0, %v781
  %783 = vmatprep.mubr.bf16.mxu0 0
  %784 = vmatmul.mubr.bf16.gmra.mxu0 %v446
  %v785 = vpop.f32.mrf.mxu0
  %v786 = vadd.f32 0.0, %v785
  %v787 = vpop.f32.mrf.mxu0
  %v788 = vadd.f32 0.0, %v787
  %v789 = vpop.f32.mrf.mxu0
  %v790 = vadd.f32 0.0, %v789
  %v791 = vpop.f32.mrf.mxu0
  %v792 = vadd.f32 0.0, %v791
  %793 = vmatprep.mubr.bf16.mxu0 0
  %794 = vmatmul.mubr.bf16.gmra.mxu0 %v449
  %v795 = vpop.f32.mrf.mxu0
  %v796 = vadd.f32 0.0, %v795
  %v797 = vpop.f32.mrf.mxu0
  %v798 = vadd.f32 0.0, %v797
  %v799 = vpop.f32.mrf.mxu0
  %v800 = vadd.f32 0.0, %v799
  %v801 = vpop.f32.mrf.mxu0
  %v802 = vadd.f32 0.0, %v801
  %803 = vdwg.mxu0
  %v804 = vmul.f32 %v486, %v486
  %v805 = vmul.f32 %v490, %v490
  %v806 = vmul.f32 %v496, %v496
  %v807 = vmul.f32 %v500, %v500
  %v808 = vmul.f32 %v506, %v506
  %v809 = vmul.f32 %v510, %v510
  %v810 = vmul.f32 %v516, %v516
  %v811 = vmul.f32 %v520, %v520
  %v812 = vmul.f32 %v526, %v526
  %v813 = vmul.f32 %v530, %v530
  %v814 = vmul.f32 %v536, %v536
  %v815 = vmul.f32 %v540, %v540
  %v816 = vmul.f32 %v546, %v546
  %v817 = vmul.f32 %v550, %v550
  %v818 = vmul.f32 %v556, %v556
  %v819 = vmul.f32 %v560, %v560
  %v820 = vmul.f32 %v566, %v566
  %v821 = vmul.f32 %v570, %v570
  %v822 = vmul.f32 %v576, %v576
  %v823 = vmul.f32 %v580, %v580
  %v824 = vmul.f32 %v586, %v586
  %v825 = vmul.f32 %v590, %v590
  %v826 = vmul.f32 %v596, %v596
  %v827 = vmul.f32 %v600, %v600
  %v828 = vmul.f32 %v606, %v606
  %v829 = vmul.f32 %v610, %v610
  %v830 = vmul.f32 %v616, %v616
  %v831 = vmul.f32 %v620, %v620
  %v832 = vmul.f32 %v626, %v626
  %v833 = vmul.f32 %v630, %v630
  %v834 = vmul.f32 %v636, %v636
  %v835 = vmul.f32 %v640, %v640
  %v836 = vmul.f32 %v646, %v646
  %v837 = vmul.f32 %v650, %v650
  %v838 = vmul.f32 %v656, %v656
  %v839 = vmul.f32 %v660, %v660
  %v840 = vmul.f32 %v666, %v666
  %v841 = vmul.f32 %v670, %v670
  %v842 = vmul.f32 %v676, %v676
  %v843 = vmul.f32 %v680, %v680
  %v844 = vmul.f32 %v686, %v686
  %v845 = vmul.f32 %v690, %v690
  %v846 = vmul.f32 %v696, %v696
  %v847 = vmul.f32 %v700, %v700
  %v848 = vmul.f32 %v706, %v706
  %v849 = vmul.f32 %v710, %v710
  %v850 = vmul.f32 %v716, %v716
  %v851 = vmul.f32 %v720, %v720
  %v852 = vmul.f32 %v726, %v726
  %v853 = vmul.f32 %v730, %v730
  %v854 = vmul.f32 %v736, %v736
  %v855 = vmul.f32 %v740, %v740
  %v856 = vmul.f32 %v746, %v746
  %v857 = vmul.f32 %v750, %v750
  %v858 = vmul.f32 %v756, %v756
  %v859 = vmul.f32 %v760, %v760
  %v860 = vmul.f32 %v766, %v766
  %v861 = vmul.f32 %v770, %v770
  %v862 = vmul.f32 %v776, %v776
  %v863 = vmul.f32 %v780, %v780
  %v864 = vmul.f32 %v786, %v786
  %v865 = vmul.f32 %v790, %v790
  %v866 = vmul.f32 %v796, %v796
  %v867 = vmul.f32 %v800, %v800
  %v868 = vmul.f32 %v488, %v488
  %v869 = vmul.f32 %v492, %v492
  %v870 = vmul.f32 %v498, %v498
  %v871 = vmul.f32 %v502, %v502
  %v872 = vmul.f32 %v508, %v508
  %v873 = vmul.f32 %v512, %v512
  %v874 = vmul.f32 %v518, %v518
  %v875 = vmul.f32 %v522, %v522
  %v876 = vmul.f32 %v528, %v528
  %v877 = vmul.f32 %v532, %v532
  %v878 = vmul.f32 %v538, %v538
  %v879 = vmul.f32 %v542, %v542
  %v880 = vmul.f32 %v548, %v548
  %v881 = vmul.f32 %v552, %v552
  %v882 = vmul.f32 %v558, %v558
  %v883 = vmul.f32 %v562, %v562
  %v884 = vmul.f32 %v568, %v568
  %v885 = vmul.f32 %v572, %v572
  %v886 = vmul.f32 %v578, %v578
  %v887 = vmul.f32 %v582, %v582
  %v888 = vmul.f32 %v588, %v588
  %v889 = vmul.f32 %v592, %v592
  %v890 = vmul.f32 %v598, %v598
  %v891 = vmul.f32 %v602, %v602
  %v892 = vmul.f32 %v608, %v608
  %v893 = vmul.f32 %v612, %v612
  %v894 = vmul.f32 %v618, %v618
  %v895 = vmul.f32 %v622, %v622
  %v896 = vmul.f32 %v628, %v628
  %v897 = vmul.f32 %v632, %v632
  %v898 = vmul.f32 %v638, %v638
  %v899 = vmul.f32 %v642, %v642
  %v900 = vmul.f32 %v648, %v648
  %v901 = vmul.f32 %v652, %v652
  %v902 = vmul.f32 %v658, %v658
  %v903 = vmul.f32 %v662, %v662
  %v904 = vmul.f32 %v668, %v668
  %v905 = vmul.f32 %v672, %v672
  %v906 = vmul.f32 %v678, %v678
  %v907 = vmul.f32 %v682, %v682
  %v908 = vmul.f32 %v688, %v688
  %v909 = vmul.f32 %v692, %v692
  %v910 = vmul.f32 %v698, %v698
  %v911 = vmul.f32 %v702, %v702
  %v912 = vmul.f32 %v708, %v708
  %v913 = vmul.f32 %v712, %v712
  %v914 = vmul.f32 %v718, %v718
  %v915 = vmul.f32 %v722, %v722
  %v916 = vmul.f32 %v728, %v728
  %v917 = vmul.f32 %v732, %v732
  %v918 = vmul.f32 %v738, %v738
  %v919 = vmul.f32 %v742, %v742
  %v920 = vmul.f32 %v748, %v748
  %v921 = vmul.f32 %v752, %v752
  %v922 = vmul.f32 %v758, %v758
  %v923 = vmul.f32 %v762, %v762
  %v924 = vmul.f32 %v768, %v768
  %v925 = vmul.f32 %v772, %v772
  %v926 = vmul.f32 %v778, %v778
  %v927 = vmul.f32 %v782, %v782
  %v928 = vmul.f32 %v788, %v788
  %v929 = vmul.f32 %v792, %v792
  %v930 = vmul.f32 %v798, %v798
  %v931 = vmul.f32 %v802, %v802
  %v932 = vadd.f32 %v804, %v868
  %v933 = vadd.f32 %v805, %v869
  %v934 = vadd.f32 %v806, %v870
  %v935 = vadd.f32 %v807, %v871
  %v936 = vadd.f32 %v808, %v872
  %v937 = vadd.f32 %v809, %v873
  %v938 = vadd.f32 %v810, %v874
  %v939 = vadd.f32 %v811, %v875
  %v940 = vadd.f32 %v812, %v876
  %v941 = vadd.f32 %v813, %v877
  %v942 = vadd.f32 %v814, %v878
  %v943 = vadd.f32 %v815, %v879
  %v944 = vadd.f32 %v816, %v880
  %v945 = vadd.f32 %v817, %v881
  %v946 = vadd.f32 %v818, %v882
  %v947 = vadd.f32 %v819, %v883
  %v948 = vadd.f32 %v820, %v884
  %v949 = vadd.f32 %v821, %v885
  %v950 = vadd.f32 %v822, %v886
  %v951 = vadd.f32 %v823, %v887
  %v952 = vadd.f32 %v824, %v888
  %v953 = vadd.f32 %v825, %v889
  %v954 = vadd.f32 %v826, %v890
  %v955 = vadd.f32 %v827, %v891
  %v956 = vadd.f32 %v828, %v892
  %v957 = vadd.f32 %v829, %v893
  %v958 = vadd.f32 %v830, %v894
  %v959 = vadd.f32 %v831, %v895
  %v960 = vadd.f32 %v832, %v896
  %v961 = vadd.f32 %v833, %v897
  %v962 = vadd.f32 %v834, %v898
  %v963 = vadd.f32 %v835, %v899
  %v964 = vadd.f32 %v836, %v900
  %v965 = vadd.f32 %v837, %v901
  %v966 = vadd.f32 %v838, %v902
  %v967 = vadd.f32 %v839, %v903
  %v968 = vadd.f32 %v840, %v904
  %v969 = vadd.f32 %v841, %v905
  %v970 = vadd.f32 %v842, %v906
  %v971 = vadd.f32 %v843, %v907
  %v972 = vadd.f32 %v844, %v908
  %v973 = vadd.f32 %v845, %v909
  %v974 = vadd.f32 %v846, %v910
  %v975 = vadd.f32 %v847, %v911
  %v976 = vadd.f32 %v848, %v912
  %v977 = vadd.f32 %v849, %v913
  %v978 = vadd.f32 %v850, %v914
  %v979 = vadd.f32 %v851, %v915
  %v980 = vadd.f32 %v852, %v916
  %v981 = vadd.f32 %v853, %v917
  %v982 = vadd.f32 %v854, %v918
  %v983 = vadd.f32 %v855, %v919
  %v984 = vadd.f32 %v856, %v920
  %v985 = vadd.f32 %v857, %v921
  %v986 = vadd.f32 %v858, %v922
  %v987 = vadd.f32 %v859, %v923
  %v988 = vadd.f32 %v860, %v924
  %v989 = vadd.f32 %v861, %v925
  %v990 = vadd.f32 %v862, %v926
  %v991 = vadd.f32 %v863, %v927
  %v992 = vadd.f32 %v864, %v928
  %v993 = vadd.f32 %v865, %v929
  %v994 = vadd.f32 %v866, %v930
  %v995 = vadd.f32 %v867, %v931
  %v996 = vrsqrt.pop %v932
  %v997 = vmul.f32 %v932, %v996
  %vm998 = vcmp.eq.f32.partialorder %v932, inf
  %v999 = vsel %vm998, %v932, %v997
  %vm1000 = vcmp.eq.f32.partialorder %v932, 0.0
  %v1001 = vand.u32 %v932, 2147483648
  %v1002 = vsel %vm1000, %v1001, %v999
  %v1003 = vrsqrt.pop %v933
  %v1004 = vmul.f32 %v933, %v1003
  %vm1005 = vcmp.eq.f32.partialorder %v933, inf
  %v1006 = vsel %vm1005, %v933, %v1004
  %vm1007 = vcmp.eq.f32.partialorder %v933, 0.0
  %v1008 = vand.u32 %v933, 2147483648
  %v1009 = vsel %vm1007, %v1008, %v1006
  %v1010 = vrsqrt.pop %v934
  %v1011 = vmul.f32 %v934, %v1010
  %vm1012 = vcmp.eq.f32.partialorder %v934, inf
  %v1013 = vsel %vm1012, %v934, %v1011
  %vm1014 = vcmp.eq.f32.partialorder %v934, 0.0
  %v1015 = vand.u32 %v934, 2147483648
  %v1016 = vsel %vm1014, %v1015, %v1013
  %v1017 = vrsqrt.pop %v935
  %v1018 = vmul.f32 %v935, %v1017
  %vm1019 = vcmp.eq.f32.partialorder %v935, inf
  %v1020 = vsel %vm1019, %v935, %v1018
  %vm1021 = vcmp.eq.f32.partialorder %v935, 0.0
  %v1022 = vand.u32 %v935, 2147483648
  %v1023 = vsel %vm1021, %v1022, %v1020
  %v1024 = vrsqrt.pop %v936
  %v1025 = vmul.f32 %v936, %v1024
  %vm1026 = vcmp.eq.f32.partialorder %v936, inf
  %v1027 = vsel %vm1026, %v936, %v1025
  %vm1028 = vcmp.eq.f32.partialorder %v936, 0.0
  %v1029 = vand.u32 %v936, 2147483648
  %v1030 = vsel %vm1028, %v1029, %v1027
  %v1031 = vrsqrt.pop %v937
  %v1032 = vmul.f32 %v937, %v1031
  %vm1033 = vcmp.eq.f32.partialorder %v937, inf
  %v1034 = vsel %vm1033, %v937, %v1032
  %vm1035 = vcmp.eq.f32.partialorder %v937, 0.0
  %v1036 = vand.u32 %v937, 2147483648
  %v1037 = vsel %vm1035, %v1036, %v1034
  %v1038 = vrsqrt.pop %v938
  %v1039 = vmul.f32 %v938, %v1038
  %vm1040 = vcmp.eq.f32.partialorder %v938, inf
  %v1041 = vsel %vm1040, %v938, %v1039
  %vm1042 = vcmp.eq.f32.partialorder %v938, 0.0
  %v1043 = vand.u32 %v938, 2147483648
  %v1044 = vsel %vm1042, %v1043, %v1041
  %v1045 = vrsqrt.pop %v939
  %v1046 = vmul.f32 %v939, %v1045
  %vm1047 = vcmp.eq.f32.partialorder %v939, inf
  %v1048 = vsel %vm1047, %v939, %v1046
  %vm1049 = vcmp.eq.f32.partialorder %v939, 0.0
  %v1050 = vand.u32 %v939, 2147483648
  %v1051 = vsel %vm1049, %v1050, %v1048
  %v1052 = vrsqrt.pop %v940
  %v1053 = vmul.f32 %v940, %v1052
  %vm1054 = vcmp.eq.f32.partialorder %v940, inf
  %v1055 = vsel %vm1054, %v940, %v1053
  %vm1056 = vcmp.eq.f32.partialorder %v940, 0.0
  %v1057 = vand.u32 %v940, 2147483648
  %v1058 = vsel %vm1056, %v1057, %v1055
  %v1059 = vrsqrt.pop %v941
  %v1060 = vmul.f32 %v941, %v1059
  %vm1061 = vcmp.eq.f32.partialorder %v941, inf
  %v1062 = vsel %vm1061, %v941, %v1060
  %vm1063 = vcmp.eq.f32.partialorder %v941, 0.0
  %v1064 = vand.u32 %v941, 2147483648
  %v1065 = vsel %vm1063, %v1064, %v1062
  %v1066 = vrsqrt.pop %v942
  %v1067 = vmul.f32 %v942, %v1066
  %vm1068 = vcmp.eq.f32.partialorder %v942, inf
  %v1069 = vsel %vm1068, %v942, %v1067
  %vm1070 = vcmp.eq.f32.partialorder %v942, 0.0
  %v1071 = vand.u32 %v942, 2147483648
  %v1072 = vsel %vm1070, %v1071, %v1069
  %v1073 = vrsqrt.pop %v943
  %v1074 = vmul.f32 %v943, %v1073
  %vm1075 = vcmp.eq.f32.partialorder %v943, inf
  %v1076 = vsel %vm1075, %v943, %v1074
  %vm1077 = vcmp.eq.f32.partialorder %v943, 0.0
  %v1078 = vand.u32 %v943, 2147483648
  %v1079 = vsel %vm1077, %v1078, %v1076
  %v1080 = vrsqrt.pop %v944
  %v1081 = vmul.f32 %v944, %v1080
  %vm1082 = vcmp.eq.f32.partialorder %v944, inf
  %v1083 = vsel %vm1082, %v944, %v1081
  %vm1084 = vcmp.eq.f32.partialorder %v944, 0.0
  %v1085 = vand.u32 %v944, 2147483648
  %v1086 = vsel %vm1084, %v1085, %v1083
  %v1087 = vrsqrt.pop %v945
  %v1088 = vmul.f32 %v945, %v1087
  %vm1089 = vcmp.eq.f32.partialorder %v945, inf
  %v1090 = vsel %vm1089, %v945, %v1088
  %vm1091 = vcmp.eq.f32.partialorder %v945, 0.0
  %v1092 = vand.u32 %v945, 2147483648
  %v1093 = vsel %vm1091, %v1092, %v1090
  %v1094 = vrsqrt.pop %v946
  %v1095 = vmul.f32 %v946, %v1094
  %vm1096 = vcmp.eq.f32.partialorder %v946, inf
  %v1097 = vsel %vm1096, %v946, %v1095
  %vm1098 = vcmp.eq.f32.partialorder %v946, 0.0
  %v1099 = vand.u32 %v946, 2147483648
  %v1100 = vsel %vm1098, %v1099, %v1097
  %v1101 = vrsqrt.pop %v947
  %v1102 = vmul.f32 %v947, %v1101
  %vm1103 = vcmp.eq.f32.partialorder %v947, inf
  %v1104 = vsel %vm1103, %v947, %v1102
  %vm1105 = vcmp.eq.f32.partialorder %v947, 0.0
  %v1106 = vand.u32 %v947, 2147483648
  %v1107 = vsel %vm1105, %v1106, %v1104
  %v1108 = vrsqrt.pop %v948
  %v1109 = vmul.f32 %v948, %v1108
  %vm1110 = vcmp.eq.f32.partialorder %v948, inf
  %v1111 = vsel %vm1110, %v948, %v1109
  %vm1112 = vcmp.eq.f32.partialorder %v948, 0.0
  %v1113 = vand.u32 %v948, 2147483648
  %v1114 = vsel %vm1112, %v1113, %v1111
  %v1115 = vrsqrt.pop %v949
  %v1116 = vmul.f32 %v949, %v1115
  %vm1117 = vcmp.eq.f32.partialorder %v949, inf
  %v1118 = vsel %vm1117, %v949, %v1116
  %vm1119 = vcmp.eq.f32.partialorder %v949, 0.0
  %v1120 = vand.u32 %v949, 2147483648
  %v1121 = vsel %vm1119, %v1120, %v1118
  %v1122 = vrsqrt.pop %v950
  %v1123 = vmul.f32 %v950, %v1122
  %vm1124 = vcmp.eq.f32.partialorder %v950, inf
  %v1125 = vsel %vm1124, %v950, %v1123
  %vm1126 = vcmp.eq.f32.partialorder %v950, 0.0
  %v1127 = vand.u32 %v950, 2147483648
  %v1128 = vsel %vm1126, %v1127, %v1125
  %v1129 = vrsqrt.pop %v951
  %v1130 = vmul.f32 %v951, %v1129
  %vm1131 = vcmp.eq.f32.partialorder %v951, inf
  %v1132 = vsel %vm1131, %v951, %v1130
  %vm1133 = vcmp.eq.f32.partialorder %v951, 0.0
  %v1134 = vand.u32 %v951, 2147483648
  %v1135 = vsel %vm1133, %v1134, %v1132
  %v1136 = vrsqrt.pop %v952
  %v1137 = vmul.f32 %v952, %v1136
  %vm1138 = vcmp.eq.f32.partialorder %v952, inf
  %v1139 = vsel %vm1138, %v952, %v1137
  %vm1140 = vcmp.eq.f32.partialorder %v952, 0.0
  %v1141 = vand.u32 %v952, 2147483648
  %v1142 = vsel %vm1140, %v1141, %v1139
  %v1143 = vrsqrt.pop %v953
  %v1144 = vmul.f32 %v953, %v1143
  %vm1145 = vcmp.eq.f32.partialorder %v953, inf
  %v1146 = vsel %vm1145, %v953, %v1144
  %vm1147 = vcmp.eq.f32.partialorder %v953, 0.0
  %v1148 = vand.u32 %v953, 2147483648
  %v1149 = vsel %vm1147, %v1148, %v1146
  %v1150 = vrsqrt.pop %v954
  %v1151 = vmul.f32 %v954, %v1150
  %vm1152 = vcmp.eq.f32.partialorder %v954, inf
  %v1153 = vsel %vm1152, %v954, %v1151
  %vm1154 = vcmp.eq.f32.partialorder %v954, 0.0
  %v1155 = vand.u32 %v954, 2147483648
  %v1156 = vsel %vm1154, %v1155, %v1153
  %v1157 = vrsqrt.pop %v955
  %v1158 = vmul.f32 %v955, %v1157
  %vm1159 = vcmp.eq.f32.partialorder %v955, inf
  %v1160 = vsel %vm1159, %v955, %v1158
  %vm1161 = vcmp.eq.f32.partialorder %v955, 0.0
  %v1162 = vand.u32 %v955, 2147483648
  %v1163 = vsel %vm1161, %v1162, %v1160
  %v1164 = vrsqrt.pop %v956
  %v1165 = vmul.f32 %v956, %v1164
  %vm1166 = vcmp.eq.f32.partialorder %v956, inf
  %v1167 = vsel %vm1166, %v956, %v1165
  %vm1168 = vcmp.eq.f32.partialorder %v956, 0.0
  %v1169 = vand.u32 %v956, 2147483648
  %v1170 = vsel %vm1168, %v1169, %v1167
  %v1171 = vrsqrt.pop %v957
  %v1172 = vmul.f32 %v957, %v1171
  %vm1173 = vcmp.eq.f32.partialorder %v957, inf
  %v1174 = vsel %vm1173, %v957, %v1172
  %vm1175 = vcmp.eq.f32.partialorder %v957, 0.0
  %v1176 = vand.u32 %v957, 2147483648
  %v1177 = vsel %vm1175, %v1176, %v1174
  %v1178 = vrsqrt.pop %v958
  %v1179 = vmul.f32 %v958, %v1178
  %vm1180 = vcmp.eq.f32.partialorder %v958, inf
  %v1181 = vsel %vm1180, %v958, %v1179
  %vm1182 = vcmp.eq.f32.partialorder %v958, 0.0
  %v1183 = vand.u32 %v958, 2147483648
  %v1184 = vsel %vm1182, %v1183, %v1181
  %v1185 = vrsqrt.pop %v959
  %v1186 = vmul.f32 %v959, %v1185
  %vm1187 = vcmp.eq.f32.partialorder %v959, inf
  %v1188 = vsel %vm1187, %v959, %v1186
  %vm1189 = vcmp.eq.f32.partialorder %v959, 0.0
  %v1190 = vand.u32 %v959, 2147483648
  %v1191 = vsel %vm1189, %v1190, %v1188
  %v1192 = vrsqrt.pop %v960
  %v1193 = vmul.f32 %v960, %v1192
  %vm1194 = vcmp.eq.f32.partialorder %v960, inf
  %v1195 = vsel %vm1194, %v960, %v1193
  %vm1196 = vcmp.eq.f32.partialorder %v960, 0.0
  %v1197 = vand.u32 %v960, 2147483648
  %v1198 = vsel %vm1196, %v1197, %v1195
  %v1199 = vrsqrt.pop %v961
  %v1200 = vmul.f32 %v961, %v1199
  %vm1201 = vcmp.eq.f32.partialorder %v961, inf
  %v1202 = vsel %vm1201, %v961, %v1200
  %vm1203 = vcmp.eq.f32.partialorder %v961, 0.0
  %v1204 = vand.u32 %v961, 2147483648
  %v1205 = vsel %vm1203, %v1204, %v1202
  %v1206 = vrsqrt.pop %v962
  %v1207 = vmul.f32 %v962, %v1206
  %vm1208 = vcmp.eq.f32.partialorder %v962, inf
  %v1209 = vsel %vm1208, %v962, %v1207
  %vm1210 = vcmp.eq.f32.partialorder %v962, 0.0
  %v1211 = vand.u32 %v962, 2147483648
  %v1212 = vsel %vm1210, %v1211, %v1209
  %v1213 = vrsqrt.pop %v963
  %v1214 = vmul.f32 %v963, %v1213
  %vm1215 = vcmp.eq.f32.partialorder %v963, inf
  %v1216 = vsel %vm1215, %v963, %v1214
  %vm1217 = vcmp.eq.f32.partialorder %v963, 0.0
  %v1218 = vand.u32 %v963, 2147483648
  %v1219 = vsel %vm1217, %v1218, %v1216
  %v1220 = vrsqrt.pop %v964
  %v1221 = vmul.f32 %v964, %v1220
  %vm1222 = vcmp.eq.f32.partialorder %v964, inf
  %v1223 = vsel %vm1222, %v964, %v1221
  %vm1224 = vcmp.eq.f32.partialorder %v964, 0.0
  %v1225 = vand.u32 %v964, 2147483648
  %v1226 = vsel %vm1224, %v1225, %v1223
  %v1227 = vrsqrt.pop %v965
  %v1228 = vmul.f32 %v965, %v1227
  %vm1229 = vcmp.eq.f32.partialorder %v965, inf
  %v1230 = vsel %vm1229, %v965, %v1228
  %vm1231 = vcmp.eq.f32.partialorder %v965, 0.0
  %v1232 = vand.u32 %v965, 2147483648
  %v1233 = vsel %vm1231, %v1232, %v1230
  %v1234 = vrsqrt.pop %v966
  %v1235 = vmul.f32 %v966, %v1234
  %vm1236 = vcmp.eq.f32.partialorder %v966, inf
  %v1237 = vsel %vm1236, %v966, %v1235
  %vm1238 = vcmp.eq.f32.partialorder %v966, 0.0
  %v1239 = vand.u32 %v966, 2147483648
  %v1240 = vsel %vm1238, %v1239, %v1237
  %v1241 = vrsqrt.pop %v967
  %v1242 = vmul.f32 %v967, %v1241
  %vm1243 = vcmp.eq.f32.partialorder %v967, inf
  %v1244 = vsel %vm1243, %v967, %v1242
  %vm1245 = vcmp.eq.f32.partialorder %v967, 0.0
  %v1246 = vand.u32 %v967, 2147483648
  %v1247 = vsel %vm1245, %v1246, %v1244
  %v1248 = vrsqrt.pop %v968
  %v1249 = vmul.f32 %v968, %v1248
  %vm1250 = vcmp.eq.f32.partialorder %v968, inf
  %v1251 = vsel %vm1250, %v968, %v1249
  %vm1252 = vcmp.eq.f32.partialorder %v968, 0.0
  %v1253 = vand.u32 %v968, 2147483648
  %v1254 = vsel %vm1252, %v1253, %v1251
  %v1255 = vrsqrt.pop %v969
  %v1256 = vmul.f32 %v969, %v1255
  %vm1257 = vcmp.eq.f32.partialorder %v969, inf
  %v1258 = vsel %vm1257, %v969, %v1256
  %vm1259 = vcmp.eq.f32.partialorder %v969, 0.0
  %v1260 = vand.u32 %v969, 2147483648
  %v1261 = vsel %vm1259, %v1260, %v1258
  %v1262 = vrsqrt.pop %v970
  %v1263 = vmul.f32 %v970, %v1262
  %vm1264 = vcmp.eq.f32.partialorder %v970, inf
  %v1265 = vsel %vm1264, %v970, %v1263
  %vm1266 = vcmp.eq.f32.partialorder %v970, 0.0
  %v1267 = vand.u32 %v970, 2147483648
  %v1268 = vsel %vm1266, %v1267, %v1265
  %v1269 = vrsqrt.pop %v971
  %v1270 = vmul.f32 %v971, %v1269
  %vm1271 = vcmp.eq.f32.partialorder %v971, inf
  %v1272 = vsel %vm1271, %v971, %v1270
  %vm1273 = vcmp.eq.f32.partialorder %v971, 0.0
  %v1274 = vand.u32 %v971, 2147483648
  %v1275 = vsel %vm1273, %v1274, %v1272
  %v1276 = vrsqrt.pop %v972
  %v1277 = vmul.f32 %v972, %v1276
  %vm1278 = vcmp.eq.f32.partialorder %v972, inf
  %v1279 = vsel %vm1278, %v972, %v1277
  %vm1280 = vcmp.eq.f32.partialorder %v972, 0.0
  %v1281 = vand.u32 %v972, 2147483648
  %v1282 = vsel %vm1280, %v1281, %v1279
  %v1283 = vrsqrt.pop %v973
  %v1284 = vmul.f32 %v973, %v1283
  %vm1285 = vcmp.eq.f32.partialorder %v973, inf
  %v1286 = vsel %vm1285, %v973, %v1284
  %vm1287 = vcmp.eq.f32.partialorder %v973, 0.0
  %v1288 = vand.u32 %v973, 2147483648
  %v1289 = vsel %vm1287, %v1288, %v1286
  %v1290 = vrsqrt.pop %v974
  %v1291 = vmul.f32 %v974, %v1290
  %vm1292 = vcmp.eq.f32.partialorder %v974, inf
  %v1293 = vsel %vm1292, %v974, %v1291
  %vm1294 = vcmp.eq.f32.partialorder %v974, 0.0
  %v1295 = vand.u32 %v974, 2147483648
  %v1296 = vsel %vm1294, %v1295, %v1293
  %v1297 = vrsqrt.pop %v975
  %v1298 = vmul.f32 %v975, %v1297
  %vm1299 = vcmp.eq.f32.partialorder %v975, inf
  %v1300 = vsel %vm1299, %v975, %v1298
  %vm1301 = vcmp.eq.f32.partialorder %v975, 0.0
  %v1302 = vand.u32 %v975, 2147483648
  %v1303 = vsel %vm1301, %v1302, %v1300
  %v1304 = vrsqrt.pop %v976
  %v1305 = vmul.f32 %v976, %v1304
  %vm1306 = vcmp.eq.f32.partialorder %v976, inf
  %v1307 = vsel %vm1306, %v976, %v1305
  %vm1308 = vcmp.eq.f32.partialorder %v976, 0.0
  %v1309 = vand.u32 %v976, 2147483648
  %v1310 = vsel %vm1308, %v1309, %v1307
  %v1311 = vrsqrt.pop %v977
  %v1312 = vmul.f32 %v977, %v1311
  %vm1313 = vcmp.eq.f32.partialorder %v977, inf
  %v1314 = vsel %vm1313, %v977, %v1312
  %vm1315 = vcmp.eq.f32.partialorder %v977, 0.0
  %v1316 = vand.u32 %v977, 2147483648
  %v1317 = vsel %vm1315, %v1316, %v1314
  %v1318 = vrsqrt.pop %v978
  %v1319 = vmul.f32 %v978, %v1318
  %vm1320 = vcmp.eq.f32.partialorder %v978, inf
  %v1321 = vsel %vm1320, %v978, %v1319
  %vm1322 = vcmp.eq.f32.partialorder %v978, 0.0
  %v1323 = vand.u32 %v978, 2147483648
  %v1324 = vsel %vm1322, %v1323, %v1321
  %v1325 = vrsqrt.pop %v979
  %v1326 = vmul.f32 %v979, %v1325
  %vm1327 = vcmp.eq.f32.partialorder %v979, inf
  %v1328 = vsel %vm1327, %v979, %v1326
  %vm1329 = vcmp.eq.f32.partialorder %v979, 0.0
  %v1330 = vand.u32 %v979, 2147483648
  %v1331 = vsel %vm1329, %v1330, %v1328
  %v1332 = vrsqrt.pop %v980
  %v1333 = vmul.f32 %v980, %v1332
  %vm1334 = vcmp.eq.f32.partialorder %v980, inf
  %v1335 = vsel %vm1334, %v980, %v1333
  %vm1336 = vcmp.eq.f32.partialorder %v980, 0.0
  %v1337 = vand.u32 %v980, 2147483648
  %v1338 = vsel %vm1336, %v1337, %v1335
  %v1339 = vrsqrt.pop %v981
  %v1340 = vmul.f32 %v981, %v1339
  %vm1341 = vcmp.eq.f32.partialorder %v981, inf
  %v1342 = vsel %vm1341, %v981, %v1340
  %vm1343 = vcmp.eq.f32.partialorder %v981, 0.0
  %v1344 = vand.u32 %v981, 2147483648
  %v1345 = vsel %vm1343, %v1344, %v1342
  %v1346 = vrsqrt.pop %v982
  %v1347 = vmul.f32 %v982, %v1346
  %vm1348 = vcmp.eq.f32.partialorder %v982, inf
  %v1349 = vsel %vm1348, %v982, %v1347
  %vm1350 = vcmp.eq.f32.partialorder %v982, 0.0
  %v1351 = vand.u32 %v982, 2147483648
  %v1352 = vsel %vm1350, %v1351, %v1349
  %v1353 = vrsqrt.pop %v983
  %v1354 = vmul.f32 %v983, %v1353
  %vm1355 = vcmp.eq.f32.partialorder %v983, inf
  %v1356 = vsel %vm1355, %v983, %v1354
  %vm1357 = vcmp.eq.f32.partialorder %v983, 0.0
  %v1358 = vand.u32 %v983, 2147483648
  %v1359 = vsel %vm1357, %v1358, %v1356
  %v1360 = vrsqrt.pop %v984
  %v1361 = vmul.f32 %v984, %v1360
  %vm1362 = vcmp.eq.f32.partialorder %v984, inf
  %v1363 = vsel %vm1362, %v984, %v1361
  %vm1364 = vcmp.eq.f32.partialorder %v984, 0.0
  %v1365 = vand.u32 %v984, 2147483648
  %v1366 = vsel %vm1364, %v1365, %v1363
  %v1367 = vrsqrt.pop %v985
  %v1368 = vmul.f32 %v985, %v1367
  %vm1369 = vcmp.eq.f32.partialorder %v985, inf
  %v1370 = vsel %vm1369, %v985, %v1368
  %vm1371 = vcmp.eq.f32.partialorder %v985, 0.0
  %v1372 = vand.u32 %v985, 2147483648
  %v1373 = vsel %vm1371, %v1372, %v1370
  %v1374 = vrsqrt.pop %v986
  %v1375 = vmul.f32 %v986, %v1374
  %vm1376 = vcmp.eq.f32.partialorder %v986, inf
  %v1377 = vsel %vm1376, %v986, %v1375
  %vm1378 = vcmp.eq.f32.partialorder %v986, 0.0
  %v1379 = vand.u32 %v986, 2147483648
  %v1380 = vsel %vm1378, %v1379, %v1377
  %v1381 = vrsqrt.pop %v987
  %v1382 = vmul.f32 %v987, %v1381
  %vm1383 = vcmp.eq.f32.partialorder %v987, inf
  %v1384 = vsel %vm1383, %v987, %v1382
  %vm1385 = vcmp.eq.f32.partialorder %v987, 0.0
  %v1386 = vand.u32 %v987, 2147483648
  %v1387 = vsel %vm1385, %v1386, %v1384
  %v1388 = vrsqrt.pop %v988
  %v1389 = vmul.f32 %v988, %v1388
  %vm1390 = vcmp.eq.f32.partialorder %v988, inf
  %v1391 = vsel %vm1390, %v988, %v1389
  %vm1392 = vcmp.eq.f32.partialorder %v988, 0.0
  %v1393 = vand.u32 %v988, 2147483648
  %v1394 = vsel %vm1392, %v1393, %v1391
  %v1395 = vrsqrt.pop %v989
  %v1396 = vmul.f32 %v989, %v1395
  %vm1397 = vcmp.eq.f32.partialorder %v989, inf
  %v1398 = vsel %vm1397, %v989, %v1396
  %vm1399 = vcmp.eq.f32.partialorder %v989, 0.0
  %v1400 = vand.u32 %v989, 2147483648
  %v1401 = vsel %vm1399, %v1400, %v1398
  %v1402 = vrsqrt.pop %v990
  %v1403 = vmul.f32 %v990, %v1402
  %vm1404 = vcmp.eq.f32.partialorder %v990, inf
  %v1405 = vsel %vm1404, %v990, %v1403
  %vm1406 = vcmp.eq.f32.partialorder %v990, 0.0
  %v1407 = vand.u32 %v990, 2147483648
  %v1408 = vsel %vm1406, %v1407, %v1405
  %v1409 = vrsqrt.pop %v991
  %v1410 = vmul.f32 %v991, %v1409
  %vm1411 = vcmp.eq.f32.partialorder %v991, inf
  %v1412 = vsel %vm1411, %v991, %v1410
  %vm1413 = vcmp.eq.f32.partialorder %v991, 0.0
  %v1414 = vand.u32 %v991, 2147483648
  %v1415 = vsel %vm1413, %v1414, %v1412
  %v1416 = vrsqrt.pop %v992
  %v1417 = vmul.f32 %v992, %v1416
  %vm1418 = vcmp.eq.f32.partialorder %v992, inf
  %v1419 = vsel %vm1418, %v992, %v1417
  %vm1420 = vcmp.eq.f32.partialorder %v992, 0.0
  %v1421 = vand.u32 %v992, 2147483648
  %v1422 = vsel %vm1420, %v1421, %v1419
  %v1423 = vrsqrt.pop %v993
  %v1424 = vmul.f32 %v993, %v1423
  %vm1425 = vcmp.eq.f32.partialorder %v993, inf
  %v1426 = vsel %vm1425, %v993, %v1424
  %vm1427 = vcmp.eq.f32.partialorder %v993, 0.0
  %v1428 = vand.u32 %v993, 2147483648
  %v1429 = vsel %vm1427, %v1428, %v1426
  %v1430 = vrsqrt.pop %v994
  %v1431 = vmul.f32 %v994, %v1430
  %vm1432 = vcmp.eq.f32.partialorder %v994, inf
  %v1433 = vsel %vm1432, %v994, %v1431
  %vm1434 = vcmp.eq.f32.partialorder %v994, 0.0
  %v1435 = vand.u32 %v994, 2147483648
  %v1436 = vsel %vm1434, %v1435, %v1433
  %v1437 = vrsqrt.pop %v995
  %v1438 = vmul.f32 %v995, %v1437
  %vm1439 = vcmp.eq.f32.partialorder %v995, inf
  %v1440 = vsel %vm1439, %v995, %v1438
  %vm1441 = vcmp.eq.f32.partialorder %v995, 0.0
  %v1442 = vand.u32 %v995, 2147483648
  %v1443 = vsel %vm1441, %v1442, %v1440
  %v1444 = vsub.f32 %v1226, %v1002
  %v1445 = vsub.f32 %v1233, %v1009
  %v1446 = vsub.f32 %v1240, %v1016
  %v1447 = vsub.f32 %v1247, %v1023
  %v1448 = vsub.f32 %v1254, %v1030
  %v1449 = vsub.f32 %v1261, %v1037
  %v1450 = vsub.f32 %v1268, %v1044
  %v1451 = vsub.f32 %v1275, %v1051
  %v1452 = vsub.f32 %v1282, %v1058
  %v1453 = vsub.f32 %v1289, %v1065
  %v1454 = vsub.f32 %v1296, %v1072
  %v1455 = vsub.f32 %v1303, %v1079
  %v1456 = vsub.f32 %v1310, %v1086
  %v1457 = vsub.f32 %v1317, %v1093
  %v1458 = vsub.f32 %v1324, %v1100
  %v1459 = vsub.f32 %v1331, %v1107
  %v1460 = vsub.f32 %v1338, %v1114
  %v1461 = vsub.f32 %v1345, %v1121
  %v1462 = vsub.f32 %v1352, %v1128
  %v1463 = vsub.f32 %v1359, %v1135
  %v1464 = vsub.f32 %v1366, %v1142
  %v1465 = vsub.f32 %v1373, %v1149
  %v1466 = vsub.f32 %v1380, %v1156
  %v1467 = vsub.f32 %v1387, %v1163
  %v1468 = vsub.f32 %v1394, %v1170
  %v1469 = vsub.f32 %v1401, %v1177
  %v1470 = vsub.f32 %v1408, %v1184
  %v1471 = vsub.f32 %v1415, %v1191
  %v1472 = vsub.f32 %v1422, %v1198
  %v1473 = vsub.f32 %v1429, %v1205
  %v1474 = vsub.f32 %v1436, %v1212
  %v1475 = vsub.f32 %v1443, %v1219
  %v1476 = vand.u32 2147483647, %v1444
  %v1477 = vand.u32 2147483647, %v1445
  %v1478 = vand.u32 2147483647, %v1446
  %v1479 = vand.u32 2147483647, %v1447
  %v1480 = vand.u32 2147483647, %v1448
  %v1481 = vand.u32 2147483647, %v1449
  %v1482 = vand.u32 2147483647, %v1450
  %v1483 = vand.u32 2147483647, %v1451
  %v1484 = vand.u32 2147483647, %v1452
  %v1485 = vand.u32 2147483647, %v1453
  %v1486 = vand.u32 2147483647, %v1454
  %v1487 = vand.u32 2147483647, %v1455
  %v1488 = vand.u32 2147483647, %v1456
  %v1489 = vand.u32 2147483647, %v1457
  %v1490 = vand.u32 2147483647, %v1458
  %v1491 = vand.u32 2147483647, %v1459
  %v1492 = vand.u32 2147483647, %v1460
  %v1493 = vand.u32 2147483647, %v1461
  %v1494 = vand.u32 2147483647, %v1462
  %v1495 = vand.u32 2147483647, %v1463
  %v1496 = vand.u32 2147483647, %v1464
  %v1497 = vand.u32 2147483647, %v1465
  %v1498 = vand.u32 2147483647, %v1466
  %v1499 = vand.u32 2147483647, %v1467
  %v1500 = vand.u32 2147483647, %v1468
  %v1501 = vand.u32 2147483647, %v1469
  %v1502 = vand.u32 2147483647, %v1470
  %v1503 = vand.u32 2147483647, %v1471
  %v1504 = vand.u32 2147483647, %v1472
  %v1505 = vand.u32 2147483647, %v1473
  %v1506 = vand.u32 2147483647, %v1474
  %v1507 = vand.u32 2147483647, %v1475
  %v1508 = vld [vmem:[%s2] sm:$0xff]
  %v1509 = vld [vmem:[%s2 + $0x8] sm:$0xff]
  %v1510 = vld [vmem:[%s2 + $0x10] sm:$0xff]
  %v1511 = vld [vmem:[%s2 + $0x18] sm:$0xff]
  %v1512 = vld [vmem:[%s2 + $0x20] sm:$0xff]
  %v1513 = vld [vmem:[%s2 + $0x28] sm:$0xff]
  %v1514 = vld [vmem:[%s2 + $0x30] sm:$0xff]
  %v1515 = vld [vmem:[%s2 + $0x38] sm:$0xff]
  %v1516 = vld [vmem:[%s2 + $0x40] sm:$0xff]
  %v1517 = vld [vmem:[%s2 + $0x48] sm:$0xff]
  %v1518 = vld [vmem:[%s2 + $0x50] sm:$0xff]
  %v1519 = vld [vmem:[%s2 + $0x58] sm:$0xff]
  %v1520 = vld [vmem:[%s2 + $0x60] sm:$0xff]
  %v1521 = vld [vmem:[%s2 + $0x68] sm:$0xff]
  %v1522 = vld [vmem:[%s2 + $0x70] sm:$0xff]
  %v1523 = vld [vmem:[%s2 + $0x78] sm:$0xff]
  %v1524 = vld [vmem:[%s2 + $0x80] sm:$0xff]
  %v1525 = vld [vmem:[%s2 + $0x88] sm:$0xff]
  %v1526 = vld [vmem:[%s2 + $0x90] sm:$0xff]
  %v1527 = vld [vmem:[%s2 + $0x98] sm:$0xff]
  %v1528 = vld [vmem:[%s2 + $0xa0] sm:$0xff]
  %v1529 = vld [vmem:[%s2 + $0xa8] sm:$0xff]
  %v1530 = vld [vmem:[%s2 + $0xb0] sm:$0xff]
  %v1531 = vld [vmem:[%s2 + $0xb8] sm:$0xff]
  %v1532 = vld [vmem:[%s2 + $0xc0] sm:$0xff]
  %v1533 = vld [vmem:[%s2 + $0xc8] sm:$0xff]
  %v1534 = vld [vmem:[%s2 + $0xd0] sm:$0xff]
  %v1535 = vld [vmem:[%s2 + $0xd8] sm:$0xff]
  %v1536 = vld [vmem:[%s2 + $0xe0] sm:$0xff]
  %v1537 = vld [vmem:[%s2 + $0xe8] sm:$0xff]
  %v1538 = vld [vmem:[%s2 + $0xf0] sm:$0xff]
  %v1539 = vld [vmem:[%s2 + $0xf8] sm:$0xff]
  %v1540 = vadd.f32 %v1508, %v1476
  %v1541 = vadd.f32 %v1509, %v1477
  %v1542 = vadd.f32 %v1510, %v1478
  %v1543 = vadd.f32 %v1511, %v1479
  %v1544 = vadd.f32 %v1512, %v1480
  %v1545 = vadd.f32 %v1513, %v1481
  %v1546 = vadd.f32 %v1514, %v1482
  %v1547 = vadd.f32 %v1515, %v1483
  %v1548 = vadd.f32 %v1516, %v1484
  %v1549 = vadd.f32 %v1517, %v1485
  %v1550 = vadd.f32 %v1518, %v1486
  %v1551 = vadd.f32 %v1519, %v1487
  %v1552 = vadd.f32 %v1520, %v1488
  %v1553 = vadd.f32 %v1521, %v1489
  %v1554 = vadd.f32 %v1522, %v1490
  %v1555 = vadd.f32 %v1523, %v1491
  %v1556 = vadd.f32 %v1524, %v1492
  %v1557 = vadd.f32 %v1525, %v1493
  %v1558 = vadd.f32 %v1526, %v1494
  %v1559 = vadd.f32 %v1527, %v1495
  %v1560 = vadd.f32 %v1528, %v1496
  %v1561 = vadd.f32 %v1529, %v1497
  %v1562 = vadd.f32 %v1530, %v1498
  %v1563 = vadd.f32 %v1531, %v1499
  %v1564 = vadd.f32 %v1532, %v1500
  %v1565 = vadd.f32 %v1533, %v1501
  %v1566 = vadd.f32 %v1534, %v1502
  %v1567 = vadd.f32 %v1535, %v1503
  %v1568 = vadd.f32 %v1536, %v1504
  %v1569 = vadd.f32 %v1537, %v1505
  %v1570 = vadd.f32 %v1538, %v1506
  %v1571 = vadd.f32 %v1539, %v1507
  %1572 = vst [vmem:[%s2] sm:$0xff] %v1540
  %1573 = vst [vmem:[%s2 + $0x8] sm:$0xff] %v1541
  %1574 = vst [vmem:[%s2 + $0x10] sm:$0xff] %v1542
  %1575 = vst [vmem:[%s2 + $0x18] sm:$0xff] %v1543
  %1576 = vst [vmem:[%s2 + $0x20] sm:$0xff] %v1544
  %1577 = vst [vmem:[%s2 + $0x28] sm:$0xff] %v1545
  %1578 = vst [vmem:[%s2 + $0x30] sm:$0xff] %v1546
  %1579 = vst [vmem:[%s2 + $0x38] sm:$0xff] %v1547
  %1580 = vst [vmem:[%s2 + $0x40] sm:$0xff] %v1548
  %1581 = vst [vmem:[%s2 + $0x48] sm:$0xff] %v1549
  %1582 = vst [vmem:[%s2 + $0x50] sm:$0xff] %v1550
  %1583 = vst [vmem:[%s2 + $0x58] sm:$0xff] %v1551
  %1584 = vst [vmem:[%s2 + $0x60] sm:$0xff] %v1552
  %1585 = vst [vmem:[%s2 + $0x68] sm:$0xff] %v1553
  %1586 = vst [vmem:[%s2 + $0x70] sm:$0xff] %v1554
  %1587 = vst [vmem:[%s2 + $0x78] sm:$0xff] %v1555
  %1588 = vst [vmem:[%s2 + $0x80] sm:$0xff] %v1556
  %1589 = vst [vmem:[%s2 + $0x88] sm:$0xff] %v1557
  %1590 = vst [vmem:[%s2 + $0x90] sm:$0xff] %v1558
  %1591 = vst [vmem:[%s2 + $0x98] sm:$0xff] %v1559
  %1592 = vst [vmem:[%s2 + $0xa0] sm:$0xff] %v1560
  %1593 = vst [vmem:[%s2 + $0xa8] sm:$0xff] %v1561
  %1594 = vst [vmem:[%s2 + $0xb0] sm:$0xff] %v1562
  %1595 = vst [vmem:[%s2 + $0xb8] sm:$0xff] %v1563
  %1596 = vst [vmem:[%s2 + $0xc0] sm:$0xff] %v1564
  %1597 = vst [vmem:[%s2 + $0xc8] sm:$0xff] %v1565
  %1598 = vst [vmem:[%s2 + $0xd0] sm:$0xff] %v1566
  %1599 = vst [vmem:[%s2 + $0xd8] sm:$0xff] %v1567
  %1600 = vst [vmem:[%s2 + $0xe0] sm:$0xff] %v1568
  %1601 = vst [vmem:[%s2 + $0xe8] sm:$0xff] %v1569
  %1602 = vst [vmem:[%s2 + $0xf0] sm:$0xff] %v1570
  %1603 = vst [vmem:[%s2 + $0xf8] sm:$0xff] %v1571
  %v1604 = vadd.f32 %v1226, 1e-05
  %v1605 = vadd.f32 %v1233, 1e-05
  %v1606 = vadd.f32 %v1240, 1e-05
  %v1607 = vadd.f32 %v1247, 1e-05
  %v1608 = vadd.f32 %v1254, 1e-05
  %v1609 = vadd.f32 %v1261, 1e-05
  %v1610 = vadd.f32 %v1268, 1e-05
  %v1611 = vadd.f32 %v1275, 1e-05
  %v1612 = vadd.f32 %v1282, 1e-05
  %v1613 = vadd.f32 %v1289, 1e-05
  %v1614 = vadd.f32 %v1296, 1e-05
  %v1615 = vadd.f32 %v1303, 1e-05
  %v1616 = vadd.f32 %v1310, 1e-05
  %v1617 = vadd.f32 %v1317, 1e-05
  %v1618 = vadd.f32 %v1324, 1e-05
  %v1619 = vadd.f32 %v1331, 1e-05
  %v1620 = vadd.f32 %v1338, 1e-05
  %v1621 = vadd.f32 %v1345, 1e-05
  %v1622 = vadd.f32 %v1352, 1e-05
  %v1623 = vadd.f32 %v1359, 1e-05
  %v1624 = vadd.f32 %v1366, 1e-05
  %v1625 = vadd.f32 %v1373, 1e-05
  %v1626 = vadd.f32 %v1380, 1e-05
  %v1627 = vadd.f32 %v1387, 1e-05
  %v1628 = vadd.f32 %v1394, 1e-05
  %v1629 = vadd.f32 %v1401, 1e-05
  %v1630 = vadd.f32 %v1408, 1e-05
  %v1631 = vadd.f32 %v1415, 1e-05
  %v1632 = vadd.f32 %v1422, 1e-05
  %v1633 = vadd.f32 %v1429, 1e-05
  %v1634 = vadd.f32 %v1436, 1e-05
  %v1635 = vadd.f32 %v1443, 1e-05
  %v1636 = vadd.f32 %v1002, 1e-05
  %v1637 = vadd.f32 %v1009, 1e-05
  %v1638 = vadd.f32 %v1016, 1e-05
  %v1639 = vadd.f32 %v1023, 1e-05
  %v1640 = vadd.f32 %v1030, 1e-05
  %v1641 = vadd.f32 %v1037, 1e-05
  %v1642 = vadd.f32 %v1044, 1e-05
  %v1643 = vadd.f32 %v1051, 1e-05
  %v1644 = vadd.f32 %v1058, 1e-05
  %v1645 = vadd.f32 %v1065, 1e-05
  %v1646 = vadd.f32 %v1072, 1e-05
  %v1647 = vadd.f32 %v1079, 1e-05
  %v1648 = vadd.f32 %v1086, 1e-05
  %v1649 = vadd.f32 %v1093, 1e-05
  %v1650 = vadd.f32 %v1100, 1e-05
  %v1651 = vadd.f32 %v1107, 1e-05
  %v1652 = vadd.f32 %v1114, 1e-05
  %v1653 = vadd.f32 %v1121, 1e-05
  %v1654 = vadd.f32 %v1128, 1e-05
  %v1655 = vadd.f32 %v1135, 1e-05
  %v1656 = vadd.f32 %v1142, 1e-05
  %v1657 = vadd.f32 %v1149, 1e-05
  %v1658 = vadd.f32 %v1156, 1e-05
  %v1659 = vadd.f32 %v1163, 1e-05
  %v1660 = vadd.f32 %v1170, 1e-05
  %v1661 = vadd.f32 %v1177, 1e-05
  %v1662 = vadd.f32 %v1184, 1e-05
  %v1663 = vadd.f32 %v1191, 1e-05
  %v1664 = vadd.f32 %v1198, 1e-05
  %v1665 = vadd.f32 %v1205, 1e-05
  %v1666 = vadd.f32 %v1212, 1e-05
  %v1667 = vadd.f32 %v1219, 1e-05
  %v1668 = vrcp.pop %v1636
  %v1669 = vrcp.pop %v1637
  %v1670 = vrcp.pop %v1638
  %v1671 = vrcp.pop %v1639
  %v1672 = vrcp.pop %v1640
  %v1673 = vrcp.pop %v1641
  %v1674 = vrcp.pop %v1642
  %v1675 = vrcp.pop %v1643
  %v1676 = vrcp.pop %v1644
  %v1677 = vrcp.pop %v1645
  %v1678 = vrcp.pop %v1646
  %v1679 = vrcp.pop %v1647
  %v1680 = vrcp.pop %v1648
  %v1681 = vrcp.pop %v1649
  %v1682 = vrcp.pop %v1650
  %v1683 = vrcp.pop %v1651
  %v1684 = vrcp.pop %v1652
  %v1685 = vrcp.pop %v1653
  %v1686 = vrcp.pop %v1654
  %v1687 = vrcp.pop %v1655
  %v1688 = vrcp.pop %v1656
  %v1689 = vrcp.pop %v1657
  %v1690 = vrcp.pop %v1658
  %v1691 = vrcp.pop %v1659
  %v1692 = vrcp.pop %v1660
  %v1693 = vrcp.pop %v1661
  %v1694 = vrcp.pop %v1662
  %v1695 = vrcp.pop %v1663
  %v1696 = vrcp.pop %v1664
  %v1697 = vrcp.pop %v1665
  %v1698 = vrcp.pop %v1666
  %v1699 = vrcp.pop %v1667
  %v1700 = vmul.f32 %v1604, %v1668
  %v1701 = vmul.f32 %v1605, %v1669
  %v1702 = vmul.f32 %v1606, %v1670
  %v1703 = vmul.f32 %v1607, %v1671
  %v1704 = vmul.f32 %v1608, %v1672
  %v1705 = vmul.f32 %v1609, %v1673
  %v1706 = vmul.f32 %v1610, %v1674
  %v1707 = vmul.f32 %v1611, %v1675
  %v1708 = vmul.f32 %v1612, %v1676
  %v1709 = vmul.f32 %v1613, %v1677
  %v1710 = vmul.f32 %v1614, %v1678
  %v1711 = vmul.f32 %v1615, %v1679
  %v1712 = vmul.f32 %v1616, %v1680
  %v1713 = vmul.f32 %v1617, %v1681
  %v1714 = vmul.f32 %v1618, %v1682
  %v1715 = vmul.f32 %v1619, %v1683
  %v1716 = vmul.f32 %v1620, %v1684
  %v1717 = vmul.f32 %v1621, %v1685
  %v1718 = vmul.f32 %v1622, %v1686
  %v1719 = vmul.f32 %v1623, %v1687
  %v1720 = vmul.f32 %v1624, %v1688
  %v1721 = vmul.f32 %v1625, %v1689
  %v1722 = vmul.f32 %v1626, %v1690
  %v1723 = vmul.f32 %v1627, %v1691
  %v1724 = vmul.f32 %v1628, %v1692
  %v1725 = vmul.f32 %v1629, %v1693
  %v1726 = vmul.f32 %v1630, %v1694
  %v1727 = vmul.f32 %v1631, %v1695
  %v1728 = vmul.f32 %v1632, %v1696
  %v1729 = vmul.f32 %v1633, %v1697
  %v1730 = vmul.f32 %v1634, %v1698
  %v1731 = vmul.f32 %v1635, %v1699
  %v1732 = vlog2.pop %v1700
  %v1733 = vmul.f32 %v1732, 0.6931472
  %v1734 = vlog2.pop %v1701
  %v1735 = vmul.f32 %v1734, 0.6931472
  %v1736 = vlog2.pop %v1702
  %v1737 = vmul.f32 %v1736, 0.6931472
  %v1738 = vlog2.pop %v1703
  %v1739 = vmul.f32 %v1738, 0.6931472
  %v1740 = vlog2.pop %v1704
  %v1741 = vmul.f32 %v1740, 0.6931472
  %v1742 = vlog2.pop %v1705
  %v1743 = vmul.f32 %v1742, 0.6931472
  %v1744 = vlog2.pop %v1706
  %v1745 = vmul.f32 %v1744, 0.6931472
  %v1746 = vlog2.pop %v1707
  %v1747 = vmul.f32 %v1746, 0.6931472
  %v1748 = vlog2.pop %v1708
  %v1749 = vmul.f32 %v1748, 0.6931472
  %v1750 = vlog2.pop %v1709
  %v1751 = vmul.f32 %v1750, 0.6931472
  %v1752 = vlog2.pop %v1710
  %v1753 = vmul.f32 %v1752, 0.6931472
  %v1754 = vlog2.pop %v1711
  %v1755 = vmul.f32 %v1754, 0.6931472
  %v1756 = vlog2.pop %v1712
  %v1757 = vmul.f32 %v1756, 0.6931472
  %v1758 = vlog2.pop %v1713
  %v1759 = vmul.f32 %v1758, 0.6931472
  %v1760 = vlog2.pop %v1714
  %v1761 = vmul.f32 %v1760, 0.6931472
  %v1762 = vlog2.pop %v1715
  %v1763 = vmul.f32 %v1762, 0.6931472
  %v1764 = vlog2.pop %v1716
  %v1765 = vmul.f32 %v1764, 0.6931472
  %v1766 = vlog2.pop %v1717
  %v1767 = vmul.f32 %v1766, 0.6931472
  %v1768 = vlog2.pop %v1718
  %v1769 = vmul.f32 %v1768, 0.6931472
  %v1770 = vlog2.pop %v1719
  %v1771 = vmul.f32 %v1770, 0.6931472
  %v1772 = vlog2.pop %v1720
  %v1773 = vmul.f32 %v1772, 0.6931472
  %v1774 = vlog2.pop %v1721
  %v1775 = vmul.f32 %v1774, 0.6931472
  %v1776 = vlog2.pop %v1722
  %v1777 = vmul.f32 %v1776, 0.6931472
  %v1778 = vlog2.pop %v1723
  %v1779 = vmul.f32 %v1778, 0.6931472
  %v1780 = vlog2.pop %v1724
  %v1781 = vmul.f32 %v1780, 0.6931472
  %v1782 = vlog2.pop %v1725
  %v1783 = vmul.f32 %v1782, 0.6931472
  %v1784 = vlog2.pop %v1726
  %v1785 = vmul.f32 %v1784, 0.6931472
  %v1786 = vlog2.pop %v1727
  %v1787 = vmul.f32 %v1786, 0.6931472
  %v1788 = vlog2.pop %v1728
  %v1789 = vmul.f32 %v1788, 0.6931472
  %v1790 = vlog2.pop %v1729
  %v1791 = vmul.f32 %v1790, 0.6931472
  %v1792 = vlog2.pop %v1730
  %v1793 = vmul.f32 %v1792, 0.6931472
  %v1794 = vlog2.pop %v1731
  %v1795 = vmul.f32 %v1794, 0.6931472
  %v1796 = vand.u32 2147483647, %v1733
  %v1797 = vand.u32 2147483647, %v1735
  %v1798 = vand.u32 2147483647, %v1737
  %v1799 = vand.u32 2147483647, %v1739
  %v1800 = vand.u32 2147483647, %v1741
  %v1801 = vand.u32 2147483647, %v1743
  %v1802 = vand.u32 2147483647, %v1745
  %v1803 = vand.u32 2147483647, %v1747
  %v1804 = vand.u32 2147483647, %v1749
  %v1805 = vand.u32 2147483647, %v1751
  %v1806 = vand.u32 2147483647, %v1753
  %v1807 = vand.u32 2147483647, %v1755
  %v1808 = vand.u32 2147483647, %v1757
  %v1809 = vand.u32 2147483647, %v1759
  %v1810 = vand.u32 2147483647, %v1761
  %v1811 = vand.u32 2147483647, %v1763
  %v1812 = vand.u32 2147483647, %v1765
  %v1813 = vand.u32 2147483647, %v1767
  %v1814 = vand.u32 2147483647, %v1769
  %v1815 = vand.u32 2147483647, %v1771
  %v1816 = vand.u32 2147483647, %v1773
  %v1817 = vand.u32 2147483647, %v1775
  %v1818 = vand.u32 2147483647, %v1777
  %v1819 = vand.u32 2147483647, %v1779
  %v1820 = vand.u32 2147483647, %v1781
  %v1821 = vand.u32 2147483647, %v1783
  %v1822 = vand.u32 2147483647, %v1785
  %v1823 = vand.u32 2147483647, %v1787
  %v1824 = vand.u32 2147483647, %v1789
  %v1825 = vand.u32 2147483647, %v1791
  %v1826 = vand.u32 2147483647, %v1793
  %v1827 = vand.u32 2147483647, %v1795
  %v1828 = vld [vmem:[%s3] sm:$0xff]
  %v1829 = vld [vmem:[%s3 + $0x8] sm:$0xff]
  %v1830 = vld [vmem:[%s3 + $0x10] sm:$0xff]
  %v1831 = vld [vmem:[%s3 + $0x18] sm:$0xff]
  %v1832 = vld [vmem:[%s3 + $0x20] sm:$0xff]
  %v1833 = vld [vmem:[%s3 + $0x28] sm:$0xff]
  %v1834 = vld [vmem:[%s3 + $0x30] sm:$0xff]
  %v1835 = vld [vmem:[%s3 + $0x38] sm:$0xff]
  %v1836 = vld [vmem:[%s3 + $0x40] sm:$0xff]
  %v1837 = vld [vmem:[%s3 + $0x48] sm:$0xff]
  %v1838 = vld [vmem:[%s3 + $0x50] sm:$0xff]
  %v1839 = vld [vmem:[%s3 + $0x58] sm:$0xff]
  %v1840 = vld [vmem:[%s3 + $0x60] sm:$0xff]
  %v1841 = vld [vmem:[%s3 + $0x68] sm:$0xff]
  %v1842 = vld [vmem:[%s3 + $0x70] sm:$0xff]
  %v1843 = vld [vmem:[%s3 + $0x78] sm:$0xff]
  %v1844 = vld [vmem:[%s3 + $0x80] sm:$0xff]
  %v1845 = vld [vmem:[%s3 + $0x88] sm:$0xff]
  %v1846 = vld [vmem:[%s3 + $0x90] sm:$0xff]
  %v1847 = vld [vmem:[%s3 + $0x98] sm:$0xff]
  %v1848 = vld [vmem:[%s3 + $0xa0] sm:$0xff]
  %v1849 = vld [vmem:[%s3 + $0xa8] sm:$0xff]
  %v1850 = vld [vmem:[%s3 + $0xb0] sm:$0xff]
  %v1851 = vld [vmem:[%s3 + $0xb8] sm:$0xff]
  %v1852 = vld [vmem:[%s3 + $0xc0] sm:$0xff]
  %v1853 = vld [vmem:[%s3 + $0xc8] sm:$0xff]
  %v1854 = vld [vmem:[%s3 + $0xd0] sm:$0xff]
  %v1855 = vld [vmem:[%s3 + $0xd8] sm:$0xff]
  %v1856 = vld [vmem:[%s3 + $0xe0] sm:$0xff]
  %v1857 = vld [vmem:[%s3 + $0xe8] sm:$0xff]
  %v1858 = vld [vmem:[%s3 + $0xf0] sm:$0xff]
  %v1859 = vld [vmem:[%s3 + $0xf8] sm:$0xff]
  %v1860 = vadd.f32 %v1828, %v1796
  %v1861 = vadd.f32 %v1829, %v1797
  %v1862 = vadd.f32 %v1830, %v1798
  %v1863 = vadd.f32 %v1831, %v1799
  %v1864 = vadd.f32 %v1832, %v1800
  %v1865 = vadd.f32 %v1833, %v1801
  %v1866 = vadd.f32 %v1834, %v1802
  %v1867 = vadd.f32 %v1835, %v1803
  %v1868 = vadd.f32 %v1836, %v1804
  %v1869 = vadd.f32 %v1837, %v1805
  %v1870 = vadd.f32 %v1838, %v1806
  %v1871 = vadd.f32 %v1839, %v1807
  %v1872 = vadd.f32 %v1840, %v1808
  %v1873 = vadd.f32 %v1841, %v1809
  %v1874 = vadd.f32 %v1842, %v1810
  %v1875 = vadd.f32 %v1843, %v1811
  %v1876 = vadd.f32 %v1844, %v1812
  %v1877 = vadd.f32 %v1845, %v1813
  %v1878 = vadd.f32 %v1846, %v1814
  %v1879 = vadd.f32 %v1847, %v1815
  %v1880 = vadd.f32 %v1848, %v1816
  %v1881 = vadd.f32 %v1849, %v1817
  %v1882 = vadd.f32 %v1850, %v1818
  %v1883 = vadd.f32 %v1851, %v1819
  %v1884 = vadd.f32 %v1852, %v1820
  %v1885 = vadd.f32 %v1853, %v1821
  %v1886 = vadd.f32 %v1854, %v1822
  %v1887 = vadd.f32 %v1855, %v1823
  %v1888 = vadd.f32 %v1856, %v1824
  %v1889 = vadd.f32 %v1857, %v1825
  %v1890 = vadd.f32 %v1858, %v1826
  %v1891 = vadd.f32 %v1859, %v1827
  %1892 = vst [vmem:[%s3] sm:$0xff] %v1860
  %1893 = vst [vmem:[%s3 + $0x8] sm:$0xff] %v1861
  %1894 = vst [vmem:[%s3 + $0x10] sm:$0xff] %v1862
  %1895 = vst [vmem:[%s3 + $0x18] sm:$0xff] %v1863
  %1896 = vst [vmem:[%s3 + $0x20] sm:$0xff] %v1864
  %1897 = vst [vmem:[%s3 + $0x28] sm:$0xff] %v1865
  %1898 = vst [vmem:[%s3 + $0x30] sm:$0xff] %v1866
  %1899 = vst [vmem:[%s3 + $0x38] sm:$0xff] %v1867
  %1900 = vst [vmem:[%s3 + $0x40] sm:$0xff] %v1868
  %1901 = vst [vmem:[%s3 + $0x48] sm:$0xff] %v1869
  %1902 = vst [vmem:[%s3 + $0x50] sm:$0xff] %v1870
  %1903 = vst [vmem:[%s3 + $0x58] sm:$0xff] %v1871
  %1904 = vst [vmem:[%s3 + $0x60] sm:$0xff] %v1872
  %1905 = vst [vmem:[%s3 + $0x68] sm:$0xff] %v1873
  %1906 = vst [vmem:[%s3 + $0x70] sm:$0xff] %v1874
  %1907 = vst [vmem:[%s3 + $0x78] sm:$0xff] %v1875
  %1908 = vst [vmem:[%s3 + $0x80] sm:$0xff] %v1876
  %1909 = vst [vmem:[%s3 + $0x88] sm:$0xff] %v1877
  %1910 = vst [vmem:[%s3 + $0x90] sm:$0xff] %v1878
  %1911 = vst [vmem:[%s3 + $0x98] sm:$0xff] %v1879
  %1912 = vst [vmem:[%s3 + $0xa0] sm:$0xff] %v1880
  %1913 = vst [vmem:[%s3 + $0xa8] sm:$0xff] %v1881
  %1914 = vst [vmem:[%s3 + $0xb0] sm:$0xff] %v1882
  %1915 = vst [vmem:[%s3 + $0xb8] sm:$0xff] %v1883
  %1916 = vst [vmem:[%s3 + $0xc0] sm:$0xff] %v1884
  %1917 = vst [vmem:[%s3 + $0xc8] sm:$0xff] %v1885
  %1918 = vst [vmem:[%s3 + $0xd0] sm:$0xff] %v1886
  %1919 = vst [vmem:[%s3 + $0xd8] sm:$0xff] %v1887
  %1920 = vst [vmem:[%s3 + $0xe0] sm:$0xff] %v1888
  %1921 = vst [vmem:[%s3 + $0xe8] sm:$0xff] %v1889
  %1922 = vst [vmem:[%s3 + $0xf0] sm:$0xff] %v1890
  %1923 = vst [vmem:[%s3 + $0xf8] sm:$0xff] %v1891
  // Predicated region
  $region14: #{_multi_scale_spectral_loss.7} parent=0 // pred_check
    _
  $region15: #{_multi_scale_spectral_loss.7} parent=0 // pred_check_branch
    %1925 = sbr.rel (0) target = $region17
  $region16: #{_multi_scale_spectral_loss.7} parent=0 // pred_region
    _
  $region17: #{_multi_scale_spectral_loss.7} parent=0 // pred_fallthru
    _
  // Predicated region
  $region18: #{_multi_scale_spectral_loss.7} parent=0 // pred_check
    _
  $region19: #{_multi_scale_spectral_loss.7} parent=0 // pred_check_branch
    %1927 = sbr.rel (0) target = $region21
  $region20: #{_multi_scale_spectral_loss.7} parent=0 // pred_region
    _
  $region21: #{_multi_scale_spectral_loss.7} parent=0 // pred_fallthru
    _
  // Predicated region
  $region22: #{_multi_scale_spectral_loss.7} parent=0 // pred_check
    _
  $region23: #{_multi_scale_spectral_loss.7} parent=0 // pred_check_branch
    %1929 = sbr.rel (0) target = $region25
  $region24: #{_multi_scale_spectral_loss.7} parent=0 // pred_region
    _
  $region25: #{_multi_scale_spectral_loss.7} parent=0 // pred_fallthru
    _
  // Predicated region
  $region26: #{_multi_scale_spectral_loss.7} parent=0 // pred_check
    _
  $region27: #{_multi_scale_spectral_loss.7} parent=0 // pred_check_branch
    %1931 = sbr.rel (0) target = $region29
  $region28: #{_multi_scale_spectral_loss.7} parent=0 // pred_region
    _
  $region29: #{_multi_scale_spectral_loss.7} parent=0 // pred_fallthru
    _

</llo_original>
